<compile_context>
chip_gen: v7x
topology: tpu7x:2x2x1
jax: 0.10.0
libtpu: 0.0.40
codegen_flags: <defaults>
</compile_context>

<pallas_src>
import functools

import jax
import jax.numpy as jnp
from jax.experimental import pallas as pl
from jax.experimental.pallas import tpu as pltpu


def _sepconv_kernel(scale_ref, bias_ref, x_ref, w1t_ref, wdw_ref, w2t_ref,
                    o_ref, hp_ref, *, kernel_size, padding, h_tile):
    # Per grid step (b, t):
    #   x_ref:   (1, Hp, W, C)     H-padded image (Hp = H + K - 1), resident per batch
    #   w1t_ref: (C, med)          pwconv1 weight, pre-transposed (resident)
    #   wdw_ref: (K*K, med)        depthwise weight, row = kh*K + kw (resident)
    #   w2t_ref: (med, C)          pwconv2 weight, pre-transposed (resident)
    #   o_ref:   (1, TH, W, C)     output rows [t*TH, (t+1)*TH)
    #   hp_ref:  (THP, W+K-1, med) f32 scratch: W-padded StarReLU(pwconv1) halo plane
    #   scale_ref, bias_ref: (1,)  StarReLU parameters in SMEM
    K = kernel_size
    pad = padding                     # conv padding (top/left)
    pb = K - 1 - padding              # bottom/right halo
    TH = h_tile
    THP = TH + K - 1
    Hp, W, C = x_ref.shape[1], x_ref.shape[2], x_ref.shape[3]
    H = Hp - (K - 1)                  # original (unpadded) image height
    med = w1t_ref.shape[1]

    t = pl.program_id(1)
    row0 = pl.multiple_of(t * TH, TH)   # first padded-x row of this tile's halo window

    s = scale_ref[0].astype(jnp.float32)
    b = bias_ref[0].astype(jnp.float32)

    # ---- pwconv1 + StarReLU: ONE fused MXU dot over the whole halo window ----
    xw = x_ref[0, pl.ds(row0, THP)]                       # (THP, W, C)
    h = jnp.dot(xw.reshape(THP * W, C), w1t_ref[...],
                preferred_element_type=jnp.float32)       # (THP*W, med) f32
    h = s * jnp.square(jnp.maximum(h, 0.0)) + b
    # Rows belonging to the conv's zero padding (above/below the image) must be zero
    # *after* StarReLU.  Row validity via iota + select (no 0*inf hazard).
    f = row0 * W + jax.lax.broadcasted_iota(jnp.int32, (THP * W, 1), 0)
    h = jnp.where((f >= pad * W) & (f < (pad + H) * W), h, 0.0)
    h = h.reshape(THP, W, med)

    # ---- stage once into the W-padded scratch (pads kept zero every step) ----
    if pad > 0:
        hp_ref[:, :pad, :] = jnp.zeros((THP, pad, med), jnp.float32)
    if pb > 0:
        hp_ref[:, pad + W:, :] = jnp.zeros((THP, pb, med), jnp.float32)
    hp_ref[:, pad:pad + W, :] = h

    # ---- depthwise KxK: K offset window loads; vertical taps are free row offsets ----
    wdw = wdw_ref[...].astype(jnp.float32)                # (K*K, med), loaded once
    acc = jnp.zeros((TH, W, med), jnp.float32)
    for kw in range(K):                                   # K is small (7): static unroll
        plane = hp_ref[:, kw:kw + W, :]                   # (THP, W, med)
        for kh in range(K):
            acc = acc + plane[kh:kh + TH] * wdw[kh * K + kw]

    # ---- act2 = Identity, then pwconv2 on the MXU (f32 accumulation) ----
    # (acc -> w2t.dtype is a deliberate precision tradeoff only when inputs are bf16.)
    out = jnp.dot(acc.reshape(TH * W, med).astype(w2t_ref.dtype), w2t_ref[...],
                  preferred_element_type=jnp.float32)
    o_ref[...] = out.reshape(1, TH, W, C).astype(o_ref.dtype)


def _tile_vmem_bytes(TH, W, C, med, K, esize):
    """Per-tile working-set bytes (excl. resident image/weights)."""
    THP = TH + K - 1
    WP = W + K - 1
    b = 4 * THP * W * med           # fused pwconv1/StarReLU value
    b += 4 * THP * WP * med         # W-padded halo scratch
    b += 4 * THP * W * med          # one per-kw plane load live at a time
    b += 4 * TH * W * med           # depthwise accumulator
    b += 4 * TH * W * C             # pwconv2 result
    b += esize * THP * W * C        # x window value
    b += 2 * esize * TH * W * C     # double-buffered output block
    return b


def _choose_h_tile(H, W, C, med, K, esize, budget_bytes):
    """Largest divisor of H whose per-tile working set fits the budget."""
    divs = [d for d in range(1, H + 1) if H % d == 0]
    fitting = [d for d in divs
               if _tile_vmem_bytes(d, W, C, med, K, esize) <= budget_bytes]
    return max(fitting) if fitting else min(divs)


def _vmem_capacity_bytes():
    try:
        return int(pltpu.get_tpu_info().vmem_capacity_bytes)
    except Exception:                    # best-effort hardware query
        return 64 * 1024 * 1024          # conservative (v7x-sized) fallback


def sepconv(x, w1, wdw, w2, scale, bias, *, kernel_size=7, padding=3,
            h_tile=None):
    """Pallas SepConv.  x: [B, H, W, C] (NHWC).

    w1:  (med, dim)   pwconv1.weight (torch Linear layout: out, in)
    wdw: (K, K, med)  depthwise weight (torch (med,1,K,K) -> (K,K,med))
    w2:  (dim, med)   pwconv2.weight
    scale, bias: (1,) StarReLU parameters
    """
    B, H, W, C = x.shape
    med = w1.shape[0]
    K = kernel_size
    pad, pb = padding, K - 1 - padding
    assert 0 <= padding < K
    assert w1.shape == (med, C) and wdw.shape == (K, K, med) and w2.shape == (C, med)

    # One-time host-side layout prep: pre-transposed pointwise weights feed plain
    # (M,K)@(K,N) MXU dots, depthwise taps are flattened, and x is zero-padded along H
    # by the conv halo so every tile reads one contiguous, always-in-bounds row window.
    w1t = jnp.asarray(w1).T                     # (C, med)
    w2t = jnp.asarray(w2).T                     # (med, C)
    wdw2 = jnp.asarray(wdw).reshape(K * K, med)
    xp = jnp.pad(x, ((0, 0), (pad, pb), (0, 0), (0, 0)))
    Hp = H + K - 1

    esize = jnp.dtype(x.dtype).itemsize
    wsize = jnp.dtype(w1t.dtype).itemsize
    cap = _vmem_capacity_bytes()                # 128 MiB on v5e/v6e, 64 MiB on v7x
    # TH-independent VMEM: resident padded image (pipeline double-buffers it along the
    # batch axis) + the three resident weight operands (double-buffered).
    fixed = 2 * esize * Hp * W * C + 2 * wsize * med * (2 * C + K * K)
    # Generation-aware tile budget: ~40% of physical VMEM for the per-tile working set.
    budget = max((2 * cap) // 5 - fixed, 2 * 1024 * 1024)

    if h_tile is None:
        h_tile = _choose_h_tile(H, W, C, med, K, esize, budget)
    TH = int(h_tile)
    assert H % TH == 0, "h_tile must divide H"
    NT = H // TH

    tile_b = _tile_vmem_bytes(TH, W, C, med, K, esize)
    # Cap below physical VMEM with headroom: ~112 MiB on v5e/v6e, ~56 MiB on v7x.
    ceiling = min(cap - (8 << 20), (7 * cap) // 8)
    vmem_limit = int(min(max(fixed + 2 * tile_b + (4 << 20), 16 << 20), ceiling))

    kernel = functools.partial(_sepconv_kernel, kernel_size=K,
                               padding=padding, h_tile=TH)
    # Shard only the batch axis across TensorCores when B > 1 so the resident image is
    # not fetched once per core; with B == 1 keep the tile axis parallel instead.
    tile_sem = "parallel" if B == 1 else "arbitrary"
    return pl.pallas_call(
        kernel,
        out_shape=jax.ShapeDtypeStruct((B, H, W, C), x.dtype),
        grid=(B, NT),
        in_specs=[
            pl.BlockSpec(memory_space=pltpu.MemorySpace.SMEM),          # scale
            pl.BlockSpec(memory_space=pltpu.MemorySpace.SMEM),          # bias
            # Full padded image per batch; constant block index along the tile axis
            # keeps it resident (fetched once per image, reused by all H tiles).
            pl.BlockSpec((1, Hp, W, C), lambda bi, ti: (bi, 0, 0, 0)),  # x (H-padded)
            pl.BlockSpec((C, med), lambda bi, ti: (0, 0)),              # w1^T
            pl.BlockSpec((K * K, med), lambda bi, ti: (0, 0)),          # dw weight
            pl.BlockSpec((med, C), lambda bi, ti: (0, 0)),              # w2^T
        ],
        out_specs=pl.BlockSpec((1, TH, W, C), lambda bi, ti: (bi, ti, 0, 0)),
        scratch_shapes=[pltpu.VMEM((TH + K - 1, W + K - 1, med), jnp.float32)],
        compiler_params=pltpu.CompilerParams(
            dimension_semantics=("parallel", tile_sem),
            vmem_limit_bytes=vmem_limit),
    )(scale, bias, xp, w1t, wdw2, w2t)


def sepconv_ref(x, w1, wdw, w2, scale, bias, *, padding=3):
    """Plain-JAX reference with identical semantics (for validation)."""
    B, H, W, _ = x.shape
    K = wdw.shape[0]
    h = jnp.einsum('bhwc,mc->bhwm', x, w1)
    h = scale[0] * jnp.maximum(h, 0.0) ** 2 + bias[0]
    hp = jnp.pad(h, ((0, 0), (padding, padding), (padding, padding), (0, 0)))
    acc = jnp.zeros(h.shape, jnp.float32)
    for kh in range(K):
        for kw in range(K):
            acc = acc + hp[:, kh:kh + H, kw:kw + W, :] * wdw[kh, kw]
    return jnp.einsum('bhwm,cm->bhwc', acc, w2)


if __name__ == "__main__":
    B, H, W, dim = 2, 16, 16, 4
    expansion_ratio = 2
    med = int(expansion_ratio * dim)
    K, pad = 7, 3

    key = jax.random.PRNGKey(0)
    k1, k2, k3, k4 = jax.random.split(key, 4)
    # Deterministic synthetic parameters (shapes match the PyTorch module).
    x = jax.random.normal(k1, (B, H, W, dim), jnp.float32)
    w1 = 0.1 * jax.random.normal(k2, (med, dim), jnp.float32)     # pwconv1.weight
    wdw = 0.1 * jax.random.normal(k3, (K, K, med), jnp.float32)   # dwconv.weight (med,1,K,K)->(K,K,med)
    w2 = 0.1 * jax.random.normal(k4, (dim, med), jnp.float32)     # pwconv2.weight
    scale = jnp.ones((1,), jnp.float32)                           # StarReLU scale parameter
    bias = jnp.full((1,), 0.2, jnp.float32)                       # nonzero bias exercises halo masking

    ref = sepconv_ref(x, w1, wdw, w2, scale, bias, padding=pad)

    # Tiled path: 2 H-tiles per image -> exercises the halo window / row masking.
    out = sepconv(x, w1, wdw, w2, scale, bias, kernel_size=K, padding=pad,
                  h_tile=8)
    out = jax.block_until_ready(out)
    assert out.shape == (B, H, W, dim)
    err = float(jnp.max(jnp.abs(out - ref)))
    assert jnp.allclose(out, ref, atol=1e-4, rtol=1e-4), err

    # Auto-tiled path (single tile at this small shape).
    out2 = jax.block_until_ready(
        sepconv(x, w1, wdw, w2, scale, bias, kernel_size=K, padding=pad))
    err2 = float(jnp.max(jnp.abs(out2 - ref)))
    assert jnp.allclose(out2, ref, atol=1e-4, rtol=1e-4), err2

    print("KERNEL_OK")
</pallas_src>

<mosaic_0001>
module attributes {stable_mosaic.version = 11 : i64} {
  func.func @_sepconv_kernel(%arg0: i32, %arg1: i32, %arg2: memref<1xf32, #tpu.memory_space<smem>>, %arg3: memref<1xf32, #tpu.memory_space<smem>>, %arg4: memref<1x22x16x4xf32, #tpu.memory_space<vmem>>, %arg5: memref<4x8xf32, #tpu.memory_space<vmem>>, %arg6: memref<49x8xf32, #tpu.memory_space<vmem>>, %arg7: memref<8x4xf32, #tpu.memory_space<vmem>>, %arg8: memref<1x8x16x4xf32, #tpu.memory_space<vmem>>, %arg9: memref<14x22x8xf32, #tpu.memory_space<vmem>>) attributes {dimension_semantics = [#tpu.dimension_semantics<parallel>, #tpu.dimension_semantics<arbitrary>], iteration_bounds = array<i64: 2, 2>, scalar_prefetch = 0 : i64, scratch_operands = 1 : i64, tpu.core_type = #tpu.core_type<tc>, window_params = [{transform_indices = @transform_0, window_bounds = array<i64: 1>}, {transform_indices = @transform_1, window_bounds = array<i64: 1>}, {transform_indices = @transform_2, window_bounds = array<i64: 1, 22, 16, 4>}, {pipeline_mode = #tpu.pipeline_mode<synchronous>, transform_indices = @transform_3, window_bounds = array<i64: 4, 8>}, {pipeline_mode = #tpu.pipeline_mode<synchronous>, transform_indices = @transform_4, window_bounds = array<i64: 49, 8>}, {pipeline_mode = #tpu.pipeline_mode<synchronous>, transform_indices = @transform_5, window_bounds = array<i64: 8, 4>}, {transform_indices = @transform_6, window_bounds = array<i64: 1, 8, 16, 4>}]} {
    %c8_i32 = arith.constant 8 : i32
    %0 = arith.muli %arg1, %c8_i32 : i32
    %1 = tpu.assume_multiple %0, 8 : i32
    %c0 = arith.constant 0 : index
    %2 = memref.load %arg2[%c0] : memref<1xf32, #tpu.memory_space<smem>>
    %c0_0 = arith.constant 0 : index
    %3 = memref.load %arg3[%c0_0] : memref<1xf32, #tpu.memory_space<smem>>
    %c0_1 = arith.constant 0 : index
    %4 = arith.index_cast %1 : i32 to index
    %c0_2 = arith.constant 0 : index
    %c0_3 = arith.constant 0 : index
    %5 = vector.load %arg4[%c0_1, %4, %c0_2, %c0_3] : memref<1x22x16x4xf32, #tpu.memory_space<vmem>>, vector<1x14x16x4xf32>
    %6 = vector.shape_cast %5 : vector<1x14x16x4xf32> to vector<14x16x4xf32>
    %7 = vector.shape_cast %6 : vector<14x16x4xf32> to vector<224x4xf32>
    %c0_4 = arith.constant 0 : index
    %c0_5 = arith.constant 0 : index
    %8 = vector.load %arg5[%c0_4, %c0_5] : memref<4x8xf32, #tpu.memory_space<vmem>>, vector<4x8xf32>
    %cst = arith.constant dense<0.000000e+00> : vector<224x8xf32>
    %9 = tpu.matmul %7, %8, %cst {dimension_numbers = #tpu.dot_dimension_numbers<[1], [0], [0], [1], [0, 0, 1, 1], [], []>} : vector<224x4xf32>, vector<4x8xf32>, vector<224x8xf32> -> vector<224x8xf32>
    %cst_6 = arith.constant 0.000000e+00 : f32
    %10 = vector.broadcast %cst_6 : f32 to vector<224x8xf32>
    %11 = arith.maximumf %9, %10 : vector<224x8xf32>
    %12 = arith.mulf %11, %11 : vector<224x8xf32>
    %13 = vector.broadcast %2 : f32 to vector<224x8xf32>
    %14 = arith.mulf %13, %12 : vector<224x8xf32>
    %15 = vector.broadcast %3 : f32 to vector<224x8xf32>
    %16 = arith.addf %14, %15 : vector<224x8xf32>
    %c16_i32 = arith.constant 16 : i32
    %17 = arith.muli %1, %c16_i32 : i32
    %18 = tpu.iota {dimensions = array<i32: 0>} : vector<224x1xi32>
    %19 = vector.broadcast %17 : i32 to vector<224x1xi32>
    %20 = arith.addi %19, %18 : vector<224x1xi32>
    %c48_i32 = arith.constant 48 : i32
    %21 = vector.broadcast %c48_i32 : i32 to vector<224x1xi32>
    %22 = arith.cmpi sge, %20, %21 : vector<224x1xi32>
    %c304_i32 = arith.constant 304 : i32
    %23 = vector.broadcast %c304_i32 : i32 to vector<224x1xi32>
    %24 = arith.cmpi slt, %20, %23 : vector<224x1xi32>
    %25 = arith.andi %22, %24 : vector<224x1xi1>
    %cst_7 = arith.constant 0.000000e+00 : f32
    %26 = vector.shape_cast %25 : vector<224x1xi1> to vector<224x1xi1>
    %27 = vector.broadcast %26 : vector<224x1xi1> to vector<224x8xi1>
    %28 = vector.broadcast %cst_7 : f32 to vector<224x8xf32>
    %29 = arith.select %27, %16, %28 : vector<224x8xi1>, vector<224x8xf32>
    %30 = vector.shape_cast %29 : vector<224x8xf32> to vector<14x16x8xf32>
    %cst_8 = arith.constant 0.000000e+00 : f32
    %31 = vector.broadcast %cst_8 : f32 to vector<14x3x8xf32>
    %c0_9 = arith.constant 0 : index
    %c0_10 = arith.constant 0 : index
    %c0_11 = arith.constant 0 : index
    %32 = vector.load %arg9[%c0_9, %c0_10, %c0_11] : memref<14x22x8xf32, #tpu.memory_space<vmem>>, vector<14x3x8xf32>
    tpu.vector_store %arg9[%c0_9, %c0_10, %c0_11], %31 {strides = array<i32>} : memref<14x22x8xf32, #tpu.memory_space<vmem>>, vector<14x3x8xf32>,
    %cst_12 = arith.constant 0.000000e+00 : f32
    %33 = vector.broadcast %cst_12 : f32 to vector<14x3x8xf32>
    %c0_13 = arith.constant 0 : index
    %c19 = arith.constant 19 : index
    %c0_14 = arith.constant 0 : index
    %34 = vector.load %arg9[%c0_13, %c19, %c0_14] : memref<14x22x8xf32, #tpu.memory_space<vmem>>, vector<14x3x8xf32>
    tpu.vector_store %arg9[%c0_13, %c19, %c0_14], %33 {strides = array<i32>} : memref<14x22x8xf32, #tpu.memory_space<vmem>>, vector<14x3x8xf32>,
    %c0_15 = arith.constant 0 : index
    %c3 = arith.constant 3 : index
    %c0_16 = arith.constant 0 : index
    %35 = vector.load %arg9[%c0_15, %c3, %c0_16] : memref<14x22x8xf32, #tpu.memory_space<vmem>>, vector<14x16x8xf32>
    tpu.vector_store %arg9[%c0_15, %c3, %c0_16], %30 {strides = array<i32>} : memref<14x22x8xf32, #tpu.memory_space<vmem>>, vector<14x16x8xf32>,
    %c0_17 = arith.constant 0 : index
    %c0_18 = arith.constant 0 : index
    %36 = vector.load %arg6[%c0_17, %c0_18] : memref<49x8xf32, #tpu.memory_space<vmem>>, vector<49x8xf32>
    %cst_19 = arith.constant 0.000000e+00 : f32
    %37 = vector.broadcast %cst_19 : f32 to vector<8x16x8xf32>
    %c0_20 = arith.constant 0 : index
    %c0_21 = arith.constant 0 : index
    %c0_22 = arith.constant 0 : index
    %38 = vector.load %arg9[%c0_20, %c0_21, %c0_22] : memref<14x22x8xf32, #tpu.memory_space<vmem>>, vector<14x16x8xf32>
    %39 = vector.extract_strided_slice %38 {offsets = [0, 0, 0], sizes = [8, 16, 8], strides = [1, 1, 1]} : vector<14x16x8xf32> to vector<8x16x8xf32>
    %40 = vector.extract_strided_slice %36 {offsets = [0, 0], sizes = [1, 8], strides = [1, 1]} : vector<49x8xf32> to vector<1x8xf32>
    %41 = vector.shape_cast %40 : vector<1x8xf32> to vector<8xf32>
    %42 = vector.shape_cast %41 : vector<8xf32> to vector<1x1x8xf32>
    %43 = vector.broadcast %42 : vector<1x1x8xf32> to vector<8x16x8xf32>
    %44 = arith.mulf %39, %43 : vector<8x16x8xf32>
    %45 = arith.addf %37, %44 : vector<8x16x8xf32>
    %46 = vector.extract_strided_slice %38 {offsets = [1, 0, 0], sizes = [8, 16, 8], strides = [1, 1, 1]} : vector<14x16x8xf32> to vector<8x16x8xf32>
    %47 = vector.extract_strided_slice %36 {offsets = [7, 0], sizes = [1, 8], strides = [1, 1]} : vector<49x8xf32> to vector<1x8xf32>
    %48 = vector.shape_cast %47 : vector<1x8xf32> to vector<8xf32>
    %49 = vector.shape_cast %48 : vector<8xf32> to vector<1x1x8xf32>
    %50 = vector.broadcast %49 : vector<1x1x8xf32> to vector<8x16x8xf32>
    %51 = arith.mulf %46, %50 : vector<8x16x8xf32>
    %52 = arith.addf %45, %51 : vector<8x16x8xf32>
    %53 = vector.extract_strided_slice %38 {offsets = [2, 0, 0], sizes = [8, 16, 8], strides = [1, 1, 1]} : vector<14x16x8xf32> to vector<8x16x8xf32>
    %54 = vector.extract_strided_slice %36 {offsets = [14, 0], sizes = [1, 8], strides = [1, 1]} : vector<49x8xf32> to vector<1x8xf32>
    %55 = vector.shape_cast %54 : vector<1x8xf32> to vector<8xf32>
    %56 = vector.shape_cast %55 : vector<8xf32> to vector<1x1x8xf32>
    %57 = vector.broadcast %56 : vector<1x1x8xf32> to vector<8x16x8xf32>
    %58 = arith.mulf %53, %57 : vector<8x16x8xf32>
    %59 = arith.addf %52, %58 : vector<8x16x8xf32>
    %60 = vector.extract_strided_slice %38 {offsets = [3, 0, 0], sizes = [8, 16, 8], strides = [1, 1, 1]} : vector<14x16x8xf32> to vector<8x16x8xf32>
    %61 = vector.extract_strided_slice %36 {offsets = [21, 0], sizes = [1, 8], strides = [1, 1]} : vector<49x8xf32> to vector<1x8xf32>
    %62 = vector.shape_cast %61 : vector<1x8xf32> to vector<8xf32>
    %63 = vector.shape_cast %62 : vector<8xf32> to vector<1x1x8xf32>
    %64 = vector.broadcast %63 : vector<1x1x8xf32> to vector<8x16x8xf32>
    %65 = arith.mulf %60, %64 : vector<8x16x8xf32>
    %66 = arith.addf %59, %65 : vector<8x16x8xf32>
    %67 = vector.extract_strided_slice %38 {offsets = [4, 0, 0], sizes = [8, 16, 8], strides = [1, 1, 1]} : vector<14x16x8xf32> to vector<8x16x8xf32>
    %68 = vector.extract_strided_slice %36 {offsets = [28, 0], sizes = [1, 8], strides = [1, 1]} : vector<49x8xf32> to vector<1x8xf32>
    %69 = vector.shape_cast %68 : vector<1x8xf32> to vector<8xf32>
    %70 = vector.shape_cast %69 : vector<8xf32> to vector<1x1x8xf32>
    %71 = vector.broadcast %70 : vector<1x1x8xf32> to vector<8x16x8xf32>
    %72 = arith.mulf %67, %71 : vector<8x16x8xf32>
    %73 = arith.addf %66, %72 : vector<8x16x8xf32>
    %74 = vector.extract_strided_slice %38 {offsets = [5, 0, 0], sizes = [8, 16, 8], strides = [1, 1, 1]} : vector<14x16x8xf32> to vector<8x16x8xf32>
    %75 = vector.extract_strided_slice %36 {offsets = [35, 0], sizes = [1, 8], strides = [1, 1]} : vector<49x8xf32> to vector<1x8xf32>
    %76 = vector.shape_cast %75 : vector<1x8xf32> to vector<8xf32>
    %77 = vector.shape_cast %76 : vector<8xf32> to vector<1x1x8xf32>
    %78 = vector.broadcast %77 : vector<1x1x8xf32> to vector<8x16x8xf32>
    %79 = arith.mulf %74, %78 : vector<8x16x8xf32>
    %80 = arith.addf %73, %79 : vector<8x16x8xf32>
    %81 = vector.extract_strided_slice %38 {offsets = [6, 0, 0], sizes = [8, 16, 8], strides = [1, 1, 1]} : vector<14x16x8xf32> to vector<8x16x8xf32>
    %82 = vector.extract_strided_slice %36 {offsets = [42, 0], sizes = [1, 8], strides = [1, 1]} : vector<49x8xf32> to vector<1x8xf32>
    %83 = vector.shape_cast %82 : vector<1x8xf32> to vector<8xf32>
    %84 = vector.shape_cast %83 : vector<8xf32> to vector<1x1x8xf32>
    %85 = vector.broadcast %84 : vector<1x1x8xf32> to vector<8x16x8xf32>
    %86 = arith.mulf %81, %85 : vector<8x16x8xf32>
    %87 = arith.addf %80, %86 : vector<8x16x8xf32>
    %c0_23 = arith.constant 0 : index
    %c1 = arith.constant 1 : index
    %c0_24 = arith.constant 0 : index
    %88 = vector.load %arg9[%c0_23, %c1, %c0_24] : memref<14x22x8xf32, #tpu.memory_space<vmem>>, vector<14x16x8xf32>
    %89 = vector.extract_strided_slice %88 {offsets = [0, 0, 0], sizes = [8, 16, 8], strides = [1, 1, 1]} : vector<14x16x8xf32> to vector<8x16x8xf32>
    %90 = vector.extract_strided_slice %36 {offsets = [1, 0], sizes = [1, 8], strides = [1, 1]} : vector<49x8xf32> to vector<1x8xf32>
    %91 = vector.shape_cast %90 : vector<1x8xf32> to vector<8xf32>
    %92 = vector.shape_cast %91 : vector<8xf32> to vector<1x1x8xf32>
    %93 = vector.broadcast %92 : vector<1x1x8xf32> to vector<8x16x8xf32>
    %94 = arith.mulf %89, %93 : vector<8x16x8xf32>
    %95 = arith.addf %87, %94 : vector<8x16x8xf32>
    %96 = vector.extract_strided_slice %88 {offsets = [1, 0, 0], sizes = [8, 16, 8], strides = [1, 1, 1]} : vector<14x16x8xf32> to vector<8x16x8xf32>
    %97 = vector.extract_strided_slice %36 {offsets = [8, 0], sizes = [1, 8], strides = [1, 1]} : vector<49x8xf32> to vector<1x8xf32>
    %98 = vector.shape_cast %97 : vector<1x8xf32> to vector<8xf32>
    %99 = vector.shape_cast %98 : vector<8xf32> to vector<1x1x8xf32>
    %100 = vector.broadcast %99 : vector<1x1x8xf32> to vector<8x16x8xf32>
    %101 = arith.mulf %96, %100 : vector<8x16x8xf32>
    %102 = arith.addf %95, %101 : vector<8x16x8xf32>
    %103 = vector.extract_strided_slice %88 {offsets = [2, 0, 0], sizes = [8, 16, 8], strides = [1, 1, 1]} : vector<14x16x8xf32> to vector<8x16x8xf32>
    %104 = vector.extract_strided_slice %36 {offsets = [15, 0], sizes = [1, 8], strides = [1, 1]} : vector<49x8xf32> to vector<1x8xf32>
    %105 = vector.shape_cast %104 : vector<1x8xf32> to vector<8xf32>
    %106 = vector.shape_cast %105 : vector<8xf32> to vector<1x1x8xf32>
    %107 = vector.broadcast %106 : vector<1x1x8xf32> to vector<8x16x8xf32>
    %108 = arith.mulf %103, %107 : vector<8x16x8xf32>
    %109 = arith.addf %102, %108 : vector<8x16x8xf32>
    %110 = vector.extract_strided_slice %88 {offsets = [3, 0, 0], sizes = [8, 16, 8], strides = [1, 1, 1]} : vector<14x16x8xf32> to vector<8x16x8xf32>
    %111 = vector.extract_strided_slice %36 {offsets = [22, 0], sizes = [1, 8], strides = [1, 1]} : vector<49x8xf32> to vector<1x8xf32>
    %112 = vector.shape_cast %111 : vector<1x8xf32> to vector<8xf32>
    %113 = vector.shape_cast %112 : vector<8xf32> to vector<1x1x8xf32>
    %114 = vector.broadcast %113 : vector<1x1x8xf32> to vector<8x16x8xf32>
    %115 = arith.mulf %110, %114 : vector<8x16x8xf32>
    %116 = arith.addf %109, %115 : vector<8x16x8xf32>
    %117 = vector.extract_strided_slice %88 {offsets = [4, 0, 0], sizes = [8, 16, 8], strides = [1, 1, 1]} : vector<14x16x8xf32> to vector<8x16x8xf32>
    %118 = vector.extract_strided_slice %36 {offsets = [29, 0], sizes = [1, 8], strides = [1, 1]} : vector<49x8xf32> to vector<1x8xf32>
    %119 = vector.shape_cast %118 : vector<1x8xf32> to vector<8xf32>
    %120 = vector.shape_cast %119 : vector<8xf32> to vector<1x1x8xf32>
    %121 = vector.broadcast %120 : vector<1x1x8xf32> to vector<8x16x8xf32>
    %122 = arith.mulf %117, %121 : vector<8x16x8xf32>
    %123 = arith.addf %116, %122 : vector<8x16x8xf32>
    %124 = vector.extract_strided_slice %88 {offsets = [5, 0, 0], sizes = [8, 16, 8], strides = [1, 1, 1]} : vector<14x16x8xf32> to vector<8x16x8xf32>
    %125 = vector.extract_strided_slice %36 {offsets = [36, 0], sizes = [1, 8], strides = [1, 1]} : vector<49x8xf32> to vector<1x8xf32>
    %126 = vector.shape_cast %125 : vector<1x8xf32> to vector<8xf32>
    %127 = vector.shape_cast %126 : vector<8xf32> to vector<1x1x8xf32>
    %128 = vector.broadcast %127 : vector<1x1x8xf32> to vector<8x16x8xf32>
    %129 = arith.mulf %124, %128 : vector<8x16x8xf32>
    %130 = arith.addf %123, %129 : vector<8x16x8xf32>
    %131 = vector.extract_strided_slice %88 {offsets = [6, 0, 0], sizes = [8, 16, 8], strides = [1, 1, 1]} : vector<14x16x8xf32> to vector<8x16x8xf32>
    %132 = vector.extract_strided_slice %36 {offsets = [43, 0], sizes = [1, 8], strides = [1, 1]} : vector<49x8xf32> to vector<1x8xf32>
    %133 = vector.shape_cast %132 : vector<1x8xf32> to vector<8xf32>
    %134 = vector.shape_cast %133 : vector<8xf32> to vector<1x1x8xf32>
    %135 = vector.broadcast %134 : vector<1x1x8xf32> to vector<8x16x8xf32>
    %136 = arith.mulf %131, %135 : vector<8x16x8xf32>
    %137 = arith.addf %130, %136 : vector<8x16x8xf32>
    %c0_25 = arith.constant 0 : index
    %c2 = arith.constant 2 : index
    %c0_26 = arith.constant 0 : index
    %138 = vector.load %arg9[%c0_25, %c2, %c0_26] : memref<14x22x8xf32, #tpu.memory_space<vmem>>, vector<14x16x8xf32>
    %139 = vector.extract_strided_slice %138 {offsets = [0, 0, 0], sizes = [8, 16, 8], strides = [1, 1, 1]} : vector<14x16x8xf32> to vector<8x16x8xf32>
    %140 = vector.extract_strided_slice %36 {offsets = [2, 0], sizes = [1, 8], strides = [1, 1]} : vector<49x8xf32> to vector<1x8xf32>
    %141 = vector.shape_cast %140 : vector<1x8xf32> to vector<8xf32>
    %142 = vector.shape_cast %141 : vector<8xf32> to vector<1x1x8xf32>
    %143 = vector.broadcast %142 : vector<1x1x8xf32> to vector<8x16x8xf32>
    %144 = arith.mulf %139, %143 : vector<8x16x8xf32>
    %145 = arith.addf %137, %144 : vector<8x16x8xf32>
    %146 = vector.extract_strided_slice %138 {offsets = [1, 0, 0], sizes = [8, 16, 8], strides = [1, 1, 1]} : vector<14x16x8xf32> to vector<8x16x8xf32>
    %147 = vector.extract_strided_slice %36 {offsets = [9, 0], sizes = [1, 8], strides = [1, 1]} : vector<49x8xf32> to vector<1x8xf32>
    %148 = vector.shape_cast %147 : vector<1x8xf32> to vector<8xf32>
    %149 = vector.shape_cast %148 : vector<8xf32> to vector<1x1x8xf32>
    %150 = vector.broadcast %149 : vector<1x1x8xf32> to vector<8x16x8xf32>
    %151 = arith.mulf %146, %150 : vector<8x16x8xf32>
    %152 = arith.addf %145, %151 : vector<8x16x8xf32>
    %153 = vector.extract_strided_slice %138 {offsets = [2, 0, 0], sizes = [8, 16, 8], strides = [1, 1, 1]} : vector<14x16x8xf32> to vector<8x16x8xf32>
    %154 = vector.extract_strided_slice %36 {offsets = [16, 0], sizes = [1, 8], strides = [1, 1]} : vector<49x8xf32> to vector<1x8xf32>
    %155 = vector.shape_cast %154 : vector<1x8xf32> to vector<8xf32>
    %156 = vector.shape_cast %155 : vector<8xf32> to vector<1x1x8xf32>
    %157 = vector.broadcast %156 : vector<1x1x8xf32> to vector<8x16x8xf32>
    %158 = arith.mulf %153, %157 : vector<8x16x8xf32>
    %159 = arith.addf %152, %158 : vector<8x16x8xf32>
    %160 = vector.extract_strided_slice %138 {offsets = [3, 0, 0], sizes = [8, 16, 8], strides = [1, 1, 1]} : vector<14x16x8xf32> to vector<8x16x8xf32>
    %161 = vector.extract_strided_slice %36 {offsets = [23, 0], sizes = [1, 8], strides = [1, 1]} : vector<49x8xf32> to vector<1x8xf32>
    %162 = vector.shape_cast %161 : vector<1x8xf32> to vector<8xf32>
    %163 = vector.shape_cast %162 : vector<8xf32> to vector<1x1x8xf32>
    %164 = vector.broadcast %163 : vector<1x1x8xf32> to vector<8x16x8xf32>
    %165 = arith.mulf %160, %164 : vector<8x16x8xf32>
    %166 = arith.addf %159, %165 : vector<8x16x8xf32>
    %167 = vector.extract_strided_slice %138 {offsets = [4, 0, 0], sizes = [8, 16, 8], strides = [1, 1, 1]} : vector<14x16x8xf32> to vector<8x16x8xf32>
    %168 = vector.extract_strided_slice %36 {offsets = [30, 0], sizes = [1, 8], strides = [1, 1]} : vector<49x8xf32> to vector<1x8xf32>
    %169 = vector.shape_cast %168 : vector<1x8xf32> to vector<8xf32>
    %170 = vector.shape_cast %169 : vector<8xf32> to vector<1x1x8xf32>
    %171 = vector.broadcast %170 : vector<1x1x8xf32> to vector<8x16x8xf32>
    %172 = arith.mulf %167, %171 : vector<8x16x8xf32>
    %173 = arith.addf %166, %172 : vector<8x16x8xf32>
    %174 = vector.extract_strided_slice %138 {offsets = [5, 0, 0], sizes = [8, 16, 8], strides = [1, 1, 1]} : vector<14x16x8xf32> to vector<8x16x8xf32>
    %175 = vector.extract_strided_slice %36 {offsets = [37, 0], sizes = [1, 8], strides = [1, 1]} : vector<49x8xf32> to vector<1x8xf32>
    %176 = vector.shape_cast %175 : vector<1x8xf32> to vector<8xf32>
    %177 = vector.shape_cast %176 : vector<8xf32> to vector<1x1x8xf32>
    %178 = vector.broadcast %177 : vector<1x1x8xf32> to vector<8x16x8xf32>
    %179 = arith.mulf %174, %178 : vector<8x16x8xf32>
    %180 = arith.addf %173, %179 : vector<8x16x8xf32>
    %181 = vector.extract_strided_slice %138 {offsets = [6, 0, 0], sizes = [8, 16, 8], strides = [1, 1, 1]} : vector<14x16x8xf32> to vector<8x16x8xf32>
    %182 = vector.extract_strided_slice %36 {offsets = [44, 0], sizes = [1, 8], strides = [1, 1]} : vector<49x8xf32> to vector<1x8xf32>
    %183 = vector.shape_cast %182 : vector<1x8xf32> to vector<8xf32>
    %184 = vector.shape_cast %183 : vector<8xf32> to vector<1x1x8xf32>
    %185 = vector.broadcast %184 : vector<1x1x8xf32> to vector<8x16x8xf32>
    %186 = arith.mulf %181, %185 : vector<8x16x8xf32>
    %187 = arith.addf %180, %186 : vector<8x16x8xf32>
    %c0_27 = arith.constant 0 : index
    %c3_28 = arith.constant 3 : index
    %c0_29 = arith.constant 0 : index
    %188 = vector.load %arg9[%c0_27, %c3_28, %c0_29] : memref<14x22x8xf32, #tpu.memory_space<vmem>>, vector<14x16x8xf32>
    %189 = vector.extract_strided_slice %188 {offsets = [0, 0, 0], sizes = [8, 16, 8], strides = [1, 1, 1]} : vector<14x16x8xf32> to vector<8x16x8xf32>
    %190 = vector.extract_strided_slice %36 {offsets = [3, 0], sizes = [1, 8], strides = [1, 1]} : vector<49x8xf32> to vector<1x8xf32>
    %191 = vector.shape_cast %190 : vector<1x8xf32> to vector<8xf32>
    %192 = vector.shape_cast %191 : vector<8xf32> to vector<1x1x8xf32>
    %193 = vector.broadcast %192 : vector<1x1x8xf32> to vector<8x16x8xf32>
    %194 = arith.mulf %189, %193 : vector<8x16x8xf32>
    %195 = arith.addf %187, %194 : vector<8x16x8xf32>
    %196 = vector.extract_strided_slice %188 {offsets = [1, 0, 0], sizes = [8, 16, 8], strides = [1, 1, 1]} : vector<14x16x8xf32> to vector<8x16x8xf32>
    %197 = vector.extract_strided_slice %36 {offsets = [10, 0], sizes = [1, 8], strides = [1, 1]} : vector<49x8xf32> to vector<1x8xf32>
    %198 = vector.shape_cast %197 : vector<1x8xf32> to vector<8xf32>
    %199 = vector.shape_cast %198 : vector<8xf32> to vector<1x1x8xf32>
    %200 = vector.broadcast %199 : vector<1x1x8xf32> to vector<8x16x8xf32>
    %201 = arith.mulf %196, %200 : vector<8x16x8xf32>
    %202 = arith.addf %195, %201 : vector<8x16x8xf32>
    %203 = vector.extract_strided_slice %188 {offsets = [2, 0, 0], sizes = [8, 16, 8], strides = [1, 1, 1]} : vector<14x16x8xf32> to vector<8x16x8xf32>
    %204 = vector.extract_strided_slice %36 {offsets = [17, 0], sizes = [1, 8], strides = [1, 1]} : vector<49x8xf32> to vector<1x8xf32>
    %205 = vector.shape_cast %204 : vector<1x8xf32> to vector<8xf32>
    %206 = vector.shape_cast %205 : vector<8xf32> to vector<1x1x8xf32>
    %207 = vector.broadcast %206 : vector<1x1x8xf32> to vector<8x16x8xf32>
    %208 = arith.mulf %203, %207 : vector<8x16x8xf32>
    %209 = arith.addf %202, %208 : vector<8x16x8xf32>
    %210 = vector.extract_strided_slice %188 {offsets = [3, 0, 0], sizes = [8, 16, 8], strides = [1, 1, 1]} : vector<14x16x8xf32> to vector<8x16x8xf32>
    %211 = vector.extract_strided_slice %36 {offsets = [24, 0], sizes = [1, 8], strides = [1, 1]} : vector<49x8xf32> to vector<1x8xf32>
    %212 = vector.shape_cast %211 : vector<1x8xf32> to vector<8xf32>
    %213 = vector.shape_cast %212 : vector<8xf32> to vector<1x1x8xf32>
    %214 = vector.broadcast %213 : vector<1x1x8xf32> to vector<8x16x8xf32>
    %215 = arith.mulf %210, %214 : vector<8x16x8xf32>
    %216 = arith.addf %209, %215 : vector<8x16x8xf32>
    %217 = vector.extract_strided_slice %188 {offsets = [4, 0, 0], sizes = [8, 16, 8], strides = [1, 1, 1]} : vector<14x16x8xf32> to vector<8x16x8xf32>
    %218 = vector.extract_strided_slice %36 {offsets = [31, 0], sizes = [1, 8], strides = [1, 1]} : vector<49x8xf32> to vector<1x8xf32>
    %219 = vector.shape_cast %218 : vector<1x8xf32> to vector<8xf32>
    %220 = vector.shape_cast %219 : vector<8xf32> to vector<1x1x8xf32>
    %221 = vector.broadcast %220 : vector<1x1x8xf32> to vector<8x16x8xf32>
    %222 = arith.mulf %217, %221 : vector<8x16x8xf32>
    %223 = arith.addf %216, %222 : vector<8x16x8xf32>
    %224 = vector.extract_strided_slice %188 {offsets = [5, 0, 0], sizes = [8, 16, 8], strides = [1, 1, 1]} : vector<14x16x8xf32> to vector<8x16x8xf32>
    %225 = vector.extract_strided_slice %36 {offsets = [38, 0], sizes = [1, 8], strides = [1, 1]} : vector<49x8xf32> to vector<1x8xf32>
    %226 = vector.shape_cast %225 : vector<1x8xf32> to vector<8xf32>
    %227 = vector.shape_cast %226 : vector<8xf32> to vector<1x1x8xf32>
    %228 = vector.broadcast %227 : vector<1x1x8xf32> to vector<8x16x8xf32>
    %229 = arith.mulf %224, %228 : vector<8x16x8xf32>
    %230 = arith.addf %223, %229 : vector<8x16x8xf32>
    %231 = vector.extract_strided_slice %188 {offsets = [6, 0, 0], sizes = [8, 16, 8], strides = [1, 1, 1]} : vector<14x16x8xf32> to vector<8x16x8xf32>
    %232 = vector.extract_strided_slice %36 {offsets = [45, 0], sizes = [1, 8], strides = [1, 1]} : vector<49x8xf32> to vector<1x8xf32>
    %233 = vector.shape_cast %232 : vector<1x8xf32> to vector<8xf32>
    %234 = vector.shape_cast %233 : vector<8xf32> to vector<1x1x8xf32>
    %235 = vector.broadcast %234 : vector<1x1x8xf32> to vector<8x16x8xf32>
    %236 = arith.mulf %231, %235 : vector<8x16x8xf32>
    %237 = arith.addf %230, %236 : vector<8x16x8xf32>
    %c0_30 = arith.constant 0 : index
    %c4 = arith.constant 4 : index
    %c0_31 = arith.constant 0 : index
    %238 = vector.load %arg9[%c0_30, %c4, %c0_31] : memref<14x22x8xf32, #tpu.memory_space<vmem>>, vector<14x16x8xf32>
    %239 = vector.extract_strided_slice %238 {offsets = [0, 0, 0], sizes = [8, 16, 8], strides = [1, 1, 1]} : vector<14x16x8xf32> to vector<8x16x8xf32>
    %240 = vector.extract_strided_slice %36 {offsets = [4, 0], sizes = [1, 8], strides = [1, 1]} : vector<49x8xf32> to vector<1x8xf32>
    %241 = vector.shape_cast %240 : vector<1x8xf32> to vector<8xf32>
    %242 = vector.shape_cast %241 : vector<8xf32> to vector<1x1x8xf32>
    %243 = vector.broadcast %242 : vector<1x1x8xf32> to vector<8x16x8xf32>
    %244 = arith.mulf %239, %243 : vector<8x16x8xf32>
    %245 = arith.addf %237, %244 : vector<8x16x8xf32>
    %246 = vector.extract_strided_slice %238 {offsets = [1, 0, 0], sizes = [8, 16, 8], strides = [1, 1, 1]} : vector<14x16x8xf32> to vector<8x16x8xf32>
    %247 = vector.extract_strided_slice %36 {offsets = [11, 0], sizes = [1, 8], strides = [1, 1]} : vector<49x8xf32> to vector<1x8xf32>
    %248 = vector.shape_cast %247 : vector<1x8xf32> to vector<8xf32>
    %249 = vector.shape_cast %248 : vector<8xf32> to vector<1x1x8xf32>
    %250 = vector.broadcast %249 : vector<1x1x8xf32> to vector<8x16x8xf32>
    %251 = arith.mulf %246, %250 : vector<8x16x8xf32>
    %252 = arith.addf %245, %251 : vector<8x16x8xf32>
    %253 = vector.extract_strided_slice %238 {offsets = [2, 0, 0], sizes = [8, 16, 8], strides = [1, 1, 1]} : vector<14x16x8xf32> to vector<8x16x8xf32>
    %254 = vector.extract_strided_slice %36 {offsets = [18, 0], sizes = [1, 8], strides = [1, 1]} : vector<49x8xf32> to vector<1x8xf32>
    %255 = vector.shape_cast %254 : vector<1x8xf32> to vector<8xf32>
    %256 = vector.shape_cast %255 : vector<8xf32> to vector<1x1x8xf32>
    %257 = vector.broadcast %256 : vector<1x1x8xf32> to vector<8x16x8xf32>
    %258 = arith.mulf %253, %257 : vector<8x16x8xf32>
    %259 = arith.addf %252, %258 : vector<8x16x8xf32>
    %260 = vector.extract_strided_slice %238 {offsets = [3, 0, 0], sizes = [8, 16, 8], strides = [1, 1, 1]} : vector<14x16x8xf32> to vector<8x16x8xf32>
    %261 = vector.extract_strided_slice %36 {offsets = [25, 0], sizes = [1, 8], strides = [1, 1]} : vector<49x8xf32> to vector<1x8xf32>
    %262 = vector.shape_cast %261 : vector<1x8xf32> to vector<8xf32>
    %263 = vector.shape_cast %262 : vector<8xf32> to vector<1x1x8xf32>
    %264 = vector.broadcast %263 : vector<1x1x8xf32> to vector<8x16x8xf32>
    %265 = arith.mulf %260, %264 : vector<8x16x8xf32>
    %266 = arith.addf %259, %265 : vector<8x16x8xf32>
    %267 = vector.extract_strided_slice %238 {offsets = [4, 0, 0], sizes = [8, 16, 8], strides = [1, 1, 1]} : vector<14x16x8xf32> to vector<8x16x8xf32>
    %268 = vector.extract_strided_slice %36 {offsets = [32, 0], sizes = [1, 8], strides = [1, 1]} : vector<49x8xf32> to vector<1x8xf32>
    %269 = vector.shape_cast %268 : vector<1x8xf32> to vector<8xf32>
    %270 = vector.shape_cast %269 : vector<8xf32> to vector<1x1x8xf32>
    %271 = vector.broadcast %270 : vector<1x1x8xf32> to vector<8x16x8xf32>
    %272 = arith.mulf %267, %271 : vector<8x16x8xf32>
    %273 = arith.addf %266, %272 : vector<8x16x8xf32>
    %274 = vector.extract_strided_slice %238 {offsets = [5, 0, 0], sizes = [8, 16, 8], strides = [1, 1, 1]} : vector<14x16x8xf32> to vector<8x16x8xf32>
    %275 = vector.extract_strided_slice %36 {offsets = [39, 0], sizes = [1, 8], strides = [1, 1]} : vector<49x8xf32> to vector<1x8xf32>
    %276 = vector.shape_cast %275 : vector<1x8xf32> to vector<8xf32>
    %277 = vector.shape_cast %276 : vector<8xf32> to vector<1x1x8xf32>
    %278 = vector.broadcast %277 : vector<1x1x8xf32> to vector<8x16x8xf32>
    %279 = arith.mulf %274, %278 : vector<8x16x8xf32>
    %280 = arith.addf %273, %279 : vector<8x16x8xf32>
    %281 = vector.extract_strided_slice %238 {offsets = [6, 0, 0], sizes = [8, 16, 8], strides = [1, 1, 1]} : vector<14x16x8xf32> to vector<8x16x8xf32>
    %282 = vector.extract_strided_slice %36 {offsets = [46, 0], sizes = [1, 8], strides = [1, 1]} : vector<49x8xf32> to vector<1x8xf32>
    %283 = vector.shape_cast %282 : vector<1x8xf32> to vector<8xf32>
    %284 = vector.shape_cast %283 : vector<8xf32> to vector<1x1x8xf32>
    %285 = vector.broadcast %284 : vector<1x1x8xf32> to vector<8x16x8xf32>
    %286 = arith.mulf %281, %285 : vector<8x16x8xf32>
    %287 = arith.addf %280, %286 : vector<8x16x8xf32>
    %c0_32 = arith.constant 0 : index
    %c5 = arith.constant 5 : index
    %c0_33 = arith.constant 0 : index
    %288 = vector.load %arg9[%c0_32, %c5, %c0_33] : memref<14x22x8xf32, #tpu.memory_space<vmem>>, vector<14x16x8xf32>
    %289 = vector.extract_strided_slice %288 {offsets = [0, 0, 0], sizes = [8, 16, 8], strides = [1, 1, 1]} : vector<14x16x8xf32> to vector<8x16x8xf32>
    %290 = vector.extract_strided_slice %36 {offsets = [5, 0], sizes = [1, 8], strides = [1, 1]} : vector<49x8xf32> to vector<1x8xf32>
    %291 = vector.shape_cast %290 : vector<1x8xf32> to vector<8xf32>
    %292 = vector.shape_cast %291 : vector<8xf32> to vector<1x1x8xf32>
    %293 = vector.broadcast %292 : vector<1x1x8xf32> to vector<8x16x8xf32>
    %294 = arith.mulf %289, %293 : vector<8x16x8xf32>
    %295 = arith.addf %287, %294 : vector<8x16x8xf32>
    %296 = vector.extract_strided_slice %288 {offsets = [1, 0, 0], sizes = [8, 16, 8], strides = [1, 1, 1]} : vector<14x16x8xf32> to vector<8x16x8xf32>
    %297 = vector.extract_strided_slice %36 {offsets = [12, 0], sizes = [1, 8], strides = [1, 1]} : vector<49x8xf32> to vector<1x8xf32>
    %298 = vector.shape_cast %297 : vector<1x8xf32> to vector<8xf32>
    %299 = vector.shape_cast %298 : vector<8xf32> to vector<1x1x8xf32>
    %300 = vector.broadcast %299 : vector<1x1x8xf32> to vector<8x16x8xf32>
    %301 = arith.mulf %296, %300 : vector<8x16x8xf32>
    %302 = arith.addf %295, %301 : vector<8x16x8xf32>
    %303 = vector.extract_strided_slice %288 {offsets = [2, 0, 0], sizes = [8, 16, 8], strides = [1, 1, 1]} : vector<14x16x8xf32> to vector<8x16x8xf32>
    %304 = vector.extract_strided_slice %36 {offsets = [19, 0], sizes = [1, 8], strides = [1, 1]} : vector<49x8xf32> to vector<1x8xf32>
    %305 = vector.shape_cast %304 : vector<1x8xf32> to vector<8xf32>
    %306 = vector.shape_cast %305 : vector<8xf32> to vector<1x1x8xf32>
    %307 = vector.broadcast %306 : vector<1x1x8xf32> to vector<8x16x8xf32>
    %308 = arith.mulf %303, %307 : vector<8x16x8xf32>
    %309 = arith.addf %302, %308 : vector<8x16x8xf32>
    %310 = vector.extract_strided_slice %288 {offsets = [3, 0, 0], sizes = [8, 16, 8], strides = [1, 1, 1]} : vector<14x16x8xf32> to vector<8x16x8xf32>
    %311 = vector.extract_strided_slice %36 {offsets = [26, 0], sizes = [1, 8], strides = [1, 1]} : vector<49x8xf32> to vector<1x8xf32>
    %312 = vector.shape_cast %311 : vector<1x8xf32> to vector<8xf32>
    %313 = vector.shape_cast %312 : vector<8xf32> to vector<1x1x8xf32>
    %314 = vector.broadcast %313 : vector<1x1x8xf32> to vector<8x16x8xf32>
    %315 = arith.mulf %310, %314 : vector<8x16x8xf32>
    %316 = arith.addf %309, %315 : vector<8x16x8xf32>
    %317 = vector.extract_strided_slice %288 {offsets = [4, 0, 0], sizes = [8, 16, 8], strides = [1, 1, 1]} : vector<14x16x8xf32> to vector<8x16x8xf32>
    %318 = vector.extract_strided_slice %36 {offsets = [33, 0], sizes = [1, 8], strides = [1, 1]} : vector<49x8xf32> to vector<1x8xf32>
    %319 = vector.shape_cast %318 : vector<1x8xf32> to vector<8xf32>
    %320 = vector.shape_cast %319 : vector<8xf32> to vector<1x1x8xf32>
    %321 = vector.broadcast %320 : vector<1x1x8xf32> to vector<8x16x8xf32>
    %322 = arith.mulf %317, %321 : vector<8x16x8xf32>
    %323 = arith.addf %316, %322 : vector<8x16x8xf32>
    %324 = vector.extract_strided_slice %288 {offsets = [5, 0, 0], sizes = [8, 16, 8], strides = [1, 1, 1]} : vector<14x16x8xf32> to vector<8x16x8xf32>
    %325 = vector.extract_strided_slice %36 {offsets = [40, 0], sizes = [1, 8], strides = [1, 1]} : vector<49x8xf32> to vector<1x8xf32>
    %326 = vector.shape_cast %325 : vector<1x8xf32> to vector<8xf32>
    %327 = vector.shape_cast %326 : vector<8xf32> to vector<1x1x8xf32>
    %328 = vector.broadcast %327 : vector<1x1x8xf32> to vector<8x16x8xf32>
    %329 = arith.mulf %324, %328 : vector<8x16x8xf32>
    %330 = arith.addf %323, %329 : vector<8x16x8xf32>
    %331 = vector.extract_strided_slice %288 {offsets = [6, 0, 0], sizes = [8, 16, 8], strides = [1, 1, 1]} : vector<14x16x8xf32> to vector<8x16x8xf32>
    %332 = vector.extract_strided_slice %36 {offsets = [47, 0], sizes = [1, 8], strides = [1, 1]} : vector<49x8xf32> to vector<1x8xf32>
    %333 = vector.shape_cast %332 : vector<1x8xf32> to vector<8xf32>
    %334 = vector.shape_cast %333 : vector<8xf32> to vector<1x1x8xf32>
    %335 = vector.broadcast %334 : vector<1x1x8xf32> to vector<8x16x8xf32>
    %336 = arith.mulf %331, %335 : vector<8x16x8xf32>
    %337 = arith.addf %330, %336 : vector<8x16x8xf32>
    %c0_34 = arith.constant 0 : index
    %c6 = arith.constant 6 : index
    %c0_35 = arith.constant 0 : index
    %338 = vector.load %arg9[%c0_34, %c6, %c0_35] : memref<14x22x8xf32, #tpu.memory_space<vmem>>, vector<14x16x8xf32>
    %339 = vector.extract_strided_slice %338 {offsets = [0, 0, 0], sizes = [8, 16, 8], strides = [1, 1, 1]} : vector<14x16x8xf32> to vector<8x16x8xf32>
    %340 = vector.extract_strided_slice %36 {offsets = [6, 0], sizes = [1, 8], strides = [1, 1]} : vector<49x8xf32> to vector<1x8xf32>
    %341 = vector.shape_cast %340 : vector<1x8xf32> to vector<8xf32>
    %342 = vector.shape_cast %341 : vector<8xf32> to vector<1x1x8xf32>
    %343 = vector.broadcast %342 : vector<1x1x8xf32> to vector<8x16x8xf32>
    %344 = arith.mulf %339, %343 : vector<8x16x8xf32>
    %345 = arith.addf %337, %344 : vector<8x16x8xf32>
    %346 = vector.extract_strided_slice %338 {offsets = [1, 0, 0], sizes = [8, 16, 8], strides = [1, 1, 1]} : vector<14x16x8xf32> to vector<8x16x8xf32>
    %347 = vector.extract_strided_slice %36 {offsets = [13, 0], sizes = [1, 8], strides = [1, 1]} : vector<49x8xf32> to vector<1x8xf32>
    %348 = vector.shape_cast %347 : vector<1x8xf32> to vector<8xf32>
    %349 = vector.shape_cast %348 : vector<8xf32> to vector<1x1x8xf32>
    %350 = vector.broadcast %349 : vector<1x1x8xf32> to vector<8x16x8xf32>
    %351 = arith.mulf %346, %350 : vector<8x16x8xf32>
    %352 = arith.addf %345, %351 : vector<8x16x8xf32>
    %353 = vector.extract_strided_slice %338 {offsets = [2, 0, 0], sizes = [8, 16, 8], strides = [1, 1, 1]} : vector<14x16x8xf32> to vector<8x16x8xf32>
    %354 = vector.extract_strided_slice %36 {offsets = [20, 0], sizes = [1, 8], strides = [1, 1]} : vector<49x8xf32> to vector<1x8xf32>
    %355 = vector.shape_cast %354 : vector<1x8xf32> to vector<8xf32>
    %356 = vector.shape_cast %355 : vector<8xf32> to vector<1x1x8xf32>
    %357 = vector.broadcast %356 : vector<1x1x8xf32> to vector<8x16x8xf32>
    %358 = arith.mulf %353, %357 : vector<8x16x8xf32>
    %359 = arith.addf %352, %358 : vector<8x16x8xf32>
    %360 = vector.extract_strided_slice %338 {offsets = [3, 0, 0], sizes = [8, 16, 8], strides = [1, 1, 1]} : vector<14x16x8xf32> to vector<8x16x8xf32>
    %361 = vector.extract_strided_slice %36 {offsets = [27, 0], sizes = [1, 8], strides = [1, 1]} : vector<49x8xf32> to vector<1x8xf32>
    %362 = vector.shape_cast %361 : vector<1x8xf32> to vector<8xf32>
    %363 = vector.shape_cast %362 : vector<8xf32> to vector<1x1x8xf32>
    %364 = vector.broadcast %363 : vector<1x1x8xf32> to vector<8x16x8xf32>
    %365 = arith.mulf %360, %364 : vector<8x16x8xf32>
    %366 = arith.addf %359, %365 : vector<8x16x8xf32>
    %367 = vector.extract_strided_slice %338 {offsets = [4, 0, 0], sizes = [8, 16, 8], strides = [1, 1, 1]} : vector<14x16x8xf32> to vector<8x16x8xf32>
    %368 = vector.extract_strided_slice %36 {offsets = [34, 0], sizes = [1, 8], strides = [1, 1]} : vector<49x8xf32> to vector<1x8xf32>
    %369 = vector.shape_cast %368 : vector<1x8xf32> to vector<8xf32>
    %370 = vector.shape_cast %369 : vector<8xf32> to vector<1x1x8xf32>
    %371 = vector.broadcast %370 : vector<1x1x8xf32> to vector<8x16x8xf32>
    %372 = arith.mulf %367, %371 : vector<8x16x8xf32>
    %373 = arith.addf %366, %372 : vector<8x16x8xf32>
    %374 = vector.extract_strided_slice %338 {offsets = [5, 0, 0], sizes = [8, 16, 8], strides = [1, 1, 1]} : vector<14x16x8xf32> to vector<8x16x8xf32>
    %375 = vector.extract_strided_slice %36 {offsets = [41, 0], sizes = [1, 8], strides = [1, 1]} : vector<49x8xf32> to vector<1x8xf32>
    %376 = vector.shape_cast %375 : vector<1x8xf32> to vector<8xf32>
    %377 = vector.shape_cast %376 : vector<8xf32> to vector<1x1x8xf32>
    %378 = vector.broadcast %377 : vector<1x1x8xf32> to vector<8x16x8xf32>
    %379 = arith.mulf %374, %378 : vector<8x16x8xf32>
    %380 = arith.addf %373, %379 : vector<8x16x8xf32>
    %381 = vector.extract_strided_slice %338 {offsets = [6, 0, 0], sizes = [8, 16, 8], strides = [1, 1, 1]} : vector<14x16x8xf32> to vector<8x16x8xf32>
    %382 = vector.extract_strided_slice %36 {offsets = [48, 0], sizes = [1, 8], strides = [1, 1]} : vector<49x8xf32> to vector<1x8xf32>
    %383 = vector.shape_cast %382 : vector<1x8xf32> to vector<8xf32>
    %384 = vector.shape_cast %383 : vector<8xf32> to vector<1x1x8xf32>
    %385 = vector.broadcast %384 : vector<1x1x8xf32> to vector<8x16x8xf32>
    %386 = arith.mulf %381, %385 : vector<8x16x8xf32>
    %387 = arith.addf %380, %386 : vector<8x16x8xf32>
    %388 = vector.shape_cast %387 : vector<8x16x8xf32> to vector<128x8xf32>
    %c0_36 = arith.constant 0 : index
    %c0_37 = arith.constant 0 : index
    %389 = vector.load %arg7[%c0_36, %c0_37] : memref<8x4xf32, #tpu.memory_space<vmem>>, vector<8x4xf32>
    %cst_38 = arith.constant dense<0.000000e+00> : vector<128x4xf32>
    %390 = tpu.matmul %388, %389, %cst_38 {dimension_numbers = #tpu.dot_dimension_numbers<[1], [0], [0], [1], [0, 0, 1, 1], [], []>} : vector<128x8xf32>, vector<8x4xf32>, vector<128x4xf32> -> vector<128x4xf32>
    %391 = vector.shape_cast %390 : vector<128x4xf32> to vector<1x8x16x4xf32>
    %c0_39 = arith.constant 0 : index
    %c0_40 = arith.constant 0 : index
    %c0_41 = arith.constant 0 : index
    %c0_42 = arith.constant 0 : index
    %392 = vector.load %arg8[%c0_39, %c0_40, %c0_41, %c0_42] : memref<1x8x16x4xf32, #tpu.memory_space<vmem>>, vector<1x8x16x4xf32>
    tpu.vector_store %arg8[%c0_39, %c0_40, %c0_41, %c0_42], %391 {strides = array<i32>} : memref<1x8x16x4xf32, #tpu.memory_space<vmem>>, vector<1x8x16x4xf32>,
    return
  }
  func.func @transform_0(%arg0: i32, %arg1: i32) -> i32 {
    %c0_i32 = arith.constant 0 : i32
    %c0_i32_0 = arith.constant 0 : i32
    return %c0_i32 : i32
  }
  func.func @transform_1(%arg0: i32, %arg1: i32) -> i32 {
    %c0_i32 = arith.constant 0 : i32
    %c0_i32_0 = arith.constant 0 : i32
    return %c0_i32 : i32
  }
  func.func @transform_2(%arg0: i32, %arg1: i32) -> (i32, i32, i32, i32) {
    %c0_i32 = arith.constant 0 : i32
    %c0_i32_0 = arith.constant 0 : i32
    %c0_i32_1 = arith.constant 0 : i32
    %c0_i32_2 = arith.constant 0 : i32
    return %arg0, %c0_i32, %c0_i32_0, %c0_i32_1 : i32, i32, i32, i32
  }
  func.func @transform_3(%arg0: i32, %arg1: i32) -> (i32, i32) {
    %c0_i32 = arith.constant 0 : i32
    %c0_i32_0 = arith.constant 0 : i32
    %c0_i32_1 = arith.constant 0 : i32
    return %c0_i32, %c0_i32_0 : i32, i32
  }
  func.func @transform_4(%arg0: i32, %arg1: i32) -> (i32, i32) {
    %c0_i32 = arith.constant 0 : i32
    %c0_i32_0 = arith.constant 0 : i32
    %c0_i32_1 = arith.constant 0 : i32
    return %c0_i32, %c0_i32_0 : i32, i32
  }
  func.func @transform_5(%arg0: i32, %arg1: i32) -> (i32, i32) {
    %c0_i32 = arith.constant 0 : i32
    %c0_i32_0 = arith.constant 0 : i32
    %c0_i32_1 = arith.constant 0 : i32
    return %c0_i32, %c0_i32_0 : i32, i32
  }
  func.func @transform_6(%arg0: i32, %arg1: i32) -> (i32, i32, i32, i32) {
    %c0_i32 = arith.constant 0 : i32
    %c0_i32_0 = arith.constant 0 : i32
    %c0_i32_1 = arith.constant 0 : i32
    return %arg0, %arg1, %c0_i32, %c0_i32_0 : i32, i32, i32, i32
  }
}

</mosaic_0001>

<llo_original>
// kernel: tpu_custom_call.1
$region0: #{tpu_custom_call.1}
  #allocation0 [shape = 'u32[]', space=smem, size = 0x4, offset = 0x4, fixed_abs, tag = 'smem constant byte address 0x4 - core index']
  #allocation1 [shape = 'u32[144,128]{1,0:T(1,128)}', space=vmem, size = 0x12000, scoped, tag = 'internal scratch']
  #allocation2 [shape = 'f32[14,22,8]{2,1,0:T(8,128)}', space=vmem, size = 0x2a000, scoped, tag = 'scratch operand']
  #allocation3 [shape = 'f32[1]{0:T(128)S(6)}', space=smem, size = 0x200, scoped, tag = 'scoped memory for tpu_custom_call.1']
  #allocation4 [shape = 'f32[1]{0:T(128)S(6)}', space=smem, size = 0x200, scoped, tag = 'scoped memory for tpu_custom_call.1']
  %s0 = inlined_call_operand.<no memory space> [shape: f32[1], index: 0, kind: input, shape index: {}]
  %s1 = inlined_call_operand.<no memory space> [shape: f32[1], index: 1, kind: input, shape index: {}]
  %s2 = inlined_call_operand.vmem [shape: f32[2,22,16,4], index: 2, kind: input, shape index: {}]
  %s3 = inlined_call_operand.vmem [shape: f32[4,8], index: 3, kind: input, shape index: {}]
  %s4 = inlined_call_operand.vmem [shape: f32[49,8], index: 4, kind: input, shape index: {}]
  %s5 = inlined_call_operand.vmem [shape: f32[8,4], index: 5, kind: input, shape index: {}]
  %s6 = inlined_call_operand.vmem [shape: f32[2,16,16,4], index: 6, kind: output, shape index: {}]
  %s7 = sld [smem:[#allocation0]]
  $region57: #{tpu_custom_call.1} parent=0
    _
  %s9 = ssub.s32 1, %s7
  %s10 = scalar_select 0, %s9, %s7
  %11 = sst [smem:[#allocation3]] %s0
  %12 = sst [smem:[#allocation4]] %s1
  loop: start=0, step=1, limit=6
  $region2: #{tpu_custom_call.1} parent=0 // loop_pre_header
    _
  $region3: #{tpu_custom_call.1} parent=0 // loop_header
    %s14 = sphi 0, %s18
    %p15 = scmp.ge.s32.totalorder %s14, 6
    %s21 = sphi 0, %s33
    %s22 = sphi 0, %s29
    %s23 = sphi 0, %s21
    %s24 = sphi 0, %s22
    %s25 = sphi 0, %s23
    %s26 = sphi 0, %s24
    %s34 = sphi 0, %s34
    %s36 = sphi 0, %s34
    %s37 = sphi 0, %s36
    %s51 = sphi 0, %s37
    %s55 = sphi 0, %s55
    %s57 = sphi 0, %s55
    %s58 = sphi 0, %s57
    %s72 = sphi 0, %s58
    %s78 = sphi 0, %s80
    %s81 = sphi 0, %s78
    %s82 = sphi 0, %s81
    %s98 = sphi 0, %s82
    %s102 = sphi 0, %s102
    %s104 = sphi 0, %s102
    %s105 = sphi 0, %s104
    %s119 = sphi 0, %s105
    %s123 = sphi 0, %s123
    %s125 = sphi 0, %s123
    %s126 = sphi 0, %s125
    %s140 = sphi 0, %s126
    %s144 = sphi 0, %s144
    %s146 = sphi 0, %s144
    %s147 = sphi 0, %s146
    %s161 = sphi 0, %s147
    %s169 = sphi 0, %s171
    %s172 = sphi 0, %s169
    %s173 = sphi 0, %s172
    %s189 = sphi 0, %s173
  $region4: #{tpu_custom_call.1} parent=0 // loop_header_branch
    %17 = sbr.rel (%p15) target = $region8
  $region5: #{tpu_custom_call.1} parent=0 // loop_body
    %s19 = ssub.s32 %s14, 1
    %s20 = ssub.s32 %s14, 2
    %s27 = sadd.s32 1, %s22
    %p28 = scmp.ge.s32.totalorder %s27, 2
    %s29 = scalar_select %p28, 0, %s27
    %s30 = sadd.s32 1, %s21
    %s31 = scalar_select %p28, %s30, %s21
    %p32 = scmp.ge.s32.totalorder %s31, 2
    %s33 = scalar_select %p32, 0, %s31
    %s35 = sadd.s32 %s34, 1
    %p38 = scmp.eq.s32.totalorder %s14, 3
    %p39 = scmp.ne.s32.totalorder %s34, %s36
    %p40 = scmp.eq.s32.totalorder %s14, 0
    %p41 = por %p39, %p40
    %p42 = scmp.ne.s32.totalorder %s34, %s36
    %p43 = scmp.eq.s32.totalorder %s19, 3
    %p44 = por %p42, %p43
    %p45 = scmp.ne.s32.totalorder %s36, %s37
    %p46 = scmp.eq.s32.totalorder %s19, 0
    %p47 = por %p45, %p46
    %p48 = scmp.ne.s32.totalorder %s36, %s37
    %p49 = scmp.eq.s32.totalorder %s20, 3
    %p50 = por %p48, %p49
    %p52 = scmp.ne.s32.totalorder %s37, %s51
    %p53 = scmp.eq.s32.totalorder %s20, 0
    %p54 = por %p52, %p53
    %s56 = sadd.s32 %s55, 1
    %p59 = scmp.eq.s32.totalorder %s14, 3
    %p60 = scmp.ne.s32.totalorder %s55, %s57
    %p61 = scmp.eq.s32.totalorder %s14, 0
    %p62 = por %p60, %p61
    %p63 = scmp.ne.s32.totalorder %s55, %s57
    %p64 = scmp.eq.s32.totalorder %s19, 3
    %p65 = por %p63, %p64
    %p66 = scmp.ne.s32.totalorder %s57, %s58
    %p67 = scmp.eq.s32.totalorder %s19, 0
    %p68 = por %p66, %p67
    %p69 = scmp.ne.s32.totalorder %s57, %s58
    %p70 = scmp.eq.s32.totalorder %s20, 3
    %p71 = por %p69, %p70
    %p73 = scmp.ne.s32.totalorder %s58, %s72
    %p74 = scmp.eq.s32.totalorder %s20, 0
    %p75 = por %p73, %p74
    %s76 = ssub.s32 %s21, %s33
    %p77 = scmp.eq.s32.totalorder %s76, 0
    %s79 = sadd.s32 %s78, 1
    %s80 = scalar_select %p77, %s78, %s79
    %p83 = pneg %p77
    %p84 = scmp.eq.s32.totalorder %s14, 3
    %p85 = por %p83, %p84
    %p86 = scmp.ne.s32.totalorder %s78, %s81
    %p87 = scmp.eq.s32.totalorder %s14, 0
    %p88 = por %p86, %p87
    %p89 = scmp.ne.s32.totalorder %s78, %s81
    %p90 = scmp.eq.s32.totalorder %s19, 3
    %p91 = por %p89, %p90
    %p92 = scmp.ne.s32.totalorder %s81, %s82
    %p93 = scmp.eq.s32.totalorder %s19, 0
    %p94 = por %p92, %p93
    %p95 = scmp.ne.s32.totalorder %s81, %s82
    %p96 = scmp.eq.s32.totalorder %s20, 3
    %p97 = por %p95, %p96
    %p99 = scmp.ne.s32.totalorder %s82, %s98
    %p100 = scmp.eq.s32.totalorder %s20, 0
    %p101 = por %p99, %p100
    %s103 = sadd.s32 %s102, 1
    %p106 = scmp.eq.s32.totalorder %s14, 3
    %p107 = scmp.ne.s32.totalorder %s102, %s104
    %p108 = scmp.eq.s32.totalorder %s14, 0
    %p109 = por %p107, %p108
    %p110 = scmp.ne.s32.totalorder %s102, %s104
    %p111 = scmp.eq.s32.totalorder %s19, 3
    %p112 = por %p110, %p111
    %p113 = scmp.ne.s32.totalorder %s104, %s105
    %p114 = scmp.eq.s32.totalorder %s19, 0
    %p115 = por %p113, %p114
    %p116 = scmp.ne.s32.totalorder %s104, %s105
    %p117 = scmp.eq.s32.totalorder %s20, 3
    %p118 = por %p116, %p117
    %p120 = scmp.ne.s32.totalorder %s105, %s119
    %p121 = scmp.eq.s32.totalorder %s20, 0
    %p122 = por %p120, %p121
    %s124 = sadd.s32 %s123, 1
    %p127 = scmp.eq.s32.totalorder %s14, 3
    %p128 = scmp.ne.s32.totalorder %s123, %s125
    %p129 = scmp.eq.s32.totalorder %s14, 0
    %p130 = por %p128, %p129
    %p131 = scmp.ne.s32.totalorder %s123, %s125
    %p132 = scmp.eq.s32.totalorder %s19, 3
    %p133 = por %p131, %p132
    %p134 = scmp.ne.s32.totalorder %s125, %s126
    %p135 = scmp.eq.s32.totalorder %s19, 0
    %p136 = por %p134, %p135
    %p137 = scmp.ne.s32.totalorder %s125, %s126
    %p138 = scmp.eq.s32.totalorder %s20, 3
    %p139 = por %p137, %p138
    %p141 = scmp.ne.s32.totalorder %s126, %s140
    %p142 = scmp.eq.s32.totalorder %s20, 0
    %p143 = por %p141, %p142
    %s145 = sadd.s32 %s144, 1
    %p148 = scmp.eq.s32.totalorder %s14, 3
    %p149 = scmp.ne.s32.totalorder %s144, %s146
    %p150 = scmp.eq.s32.totalorder %s14, 0
    %p151 = por %p149, %p150
    %p152 = scmp.ne.s32.totalorder %s144, %s146
    %p153 = scmp.eq.s32.totalorder %s19, 3
    %p154 = por %p152, %p153
    %p155 = scmp.ne.s32.totalorder %s146, %s147
    %p156 = scmp.eq.s32.totalorder %s19, 0
    %p157 = por %p155, %p156
    %p158 = scmp.ne.s32.totalorder %s146, %s147
    %p159 = scmp.eq.s32.totalorder %s20, 3
    %p160 = por %p158, %p159
    %p162 = scmp.ne.s32.totalorder %s147, %s161
    %p163 = scmp.eq.s32.totalorder %s20, 0
    %p164 = por %p162, %p163
    %s165 = ssub.s32 %s21, %s33
    %s166 = ssub.s32 %s22, %s29
    %s167 = sor.u32 %s165, %s166
    %p168 = scmp.eq.s32.totalorder %s167, 0
    %s170 = sadd.s32 %s169, 1
    %s171 = scalar_select %p168, %s169, %s170
    %p174 = pneg %p168
    %p175 = scmp.eq.s32.totalorder %s14, 3
    %p176 = por %p174, %p175
    %p177 = scmp.ne.s32.totalorder %s169, %s172
    %p178 = scmp.eq.s32.totalorder %s14, 0
    %p179 = por %p177, %p178
    %p180 = scmp.ne.s32.totalorder %s169, %s172
    %p181 = scmp.eq.s32.totalorder %s19, 3
    %p182 = por %p180, %p181
    %p183 = scmp.ne.s32.totalorder %s172, %s173
    %p184 = scmp.eq.s32.totalorder %s19, 0
    %p185 = por %p183, %p184
    %p186 = scmp.ne.s32.totalorder %s172, %s173
    %p187 = scmp.eq.s32.totalorder %s20, 3
    %p188 = por %p186, %p187
    %p190 = scmp.ne.s32.totalorder %s173, %s189
    %p191 = scmp.eq.s32.totalorder %s20, 0
    %p192 = por %p190, %p191
    %p193 = scmp.le.s32.totalorder 1, %s14
    %p194 = scmp.lt.s32.totalorder %s14, 5
    %p195 = pnand %p193, %p194
    %p196 = pneg %p195
    // Predicated region
    $region9: #{tpu_custom_call.1} parent=5 // pred_check
      _
    $region10: #{tpu_custom_call.1} parent=5 // pred_check_branch
      %198 = sbr.rel (%p195) target = $region12
    $region11: #{tpu_custom_call.1} parent=5 // pred_region
      %s199 = ssub.s32 %s14, 1
      // Predicated region
      $region13: #{tpu_custom_call.1} parent=11 // pred_check
        %p200 = pneg %p47
      $region14: #{tpu_custom_call.1} parent=11 // pred_check_branch
        %202 = sbr.rel (%p200) target = $region16
      $region15: #{tpu_custom_call.1} parent=11 // pred_region
        _
      $region16: #{tpu_custom_call.1} parent=11 // pred_fallthru
        _
      // Predicated region
      $region17: #{tpu_custom_call.1} parent=11 // pred_check
        %p203 = pneg %p68
      $region18: #{tpu_custom_call.1} parent=11 // pred_check_branch
        %205 = sbr.rel (%p203) target = $region20
      $region19: #{tpu_custom_call.1} parent=11 // pred_region
        _
      $region20: #{tpu_custom_call.1} parent=11 // pred_fallthru
        _
      // Predicated region
      $region21: #{tpu_custom_call.1} parent=11 // pred_check
        %p206 = pneg %p115
      $region22: #{tpu_custom_call.1} parent=11 // pred_check_branch
        %208 = sbr.rel (%p206) target = $region24
      $region23: #{tpu_custom_call.1} parent=11 // pred_region
        _
      $region24: #{tpu_custom_call.1} parent=11 // pred_fallthru
        _
      // Predicated region
      $region25: #{tpu_custom_call.1} parent=11 // pred_check
        %p209 = pneg %p136
      $region26: #{tpu_custom_call.1} parent=11 // pred_check_branch
        %211 = sbr.rel (%p209) target = $region28
      $region27: #{tpu_custom_call.1} parent=11 // pred_region
        _
      $region28: #{tpu_custom_call.1} parent=11 // pred_fallthru
        _
      // Predicated region
      $region29: #{tpu_custom_call.1} parent=11 // pred_check
        %p212 = pneg %p157
      $region30: #{tpu_custom_call.1} parent=11 // pred_check_branch
        %214 = sbr.rel (%p212) target = $region32
      $region31: #{tpu_custom_call.1} parent=11 // pred_region
        _
      $region32: #{tpu_custom_call.1} parent=11 // pred_fallthru
        _
    $region12: #{tpu_custom_call.1} parent=5 // pred_fallthru
      _
    %p215 = scmp.lt.s32.totalorder %s14, 4
    // Predicated region
    $region33: #{tpu_custom_call.1} parent=5 // pred_check
      %p216 = pneg %p215
    $region34: #{tpu_custom_call.1} parent=5 // pred_check_branch
      %218 = sbr.rel (%p216) target = $region36
    $region35: #{tpu_custom_call.1} parent=5 // pred_region
      // Predicated region
      $region37: #{tpu_custom_call.1} parent=35 // pred_check
        %p219 = pneg %p88
      $region38: #{tpu_custom_call.1} parent=35 // pred_check_branch
        %221 = sbr.rel (%p219) target = $region40
      $region39: #{tpu_custom_call.1} parent=35 // pred_region
        %p222 = scmp.lt.s32.totalorder %s21, 1
        %s223 = scalar_select %p222, %s21, 1
        %s224 = smul.addr %s223, 44
        %s225 = smul.addr %s224, 8
        %s226 = scalar_lea.vmem %s2, %s225
      $region40: #{tpu_custom_call.1} parent=35 // pred_fallthru
        _
    $region36: #{tpu_custom_call.1} parent=5 // pred_fallthru
      _
    %p227 = scmp.le.s32.totalorder 1, %s14
    %p228 = scmp.lt.s32.totalorder %s14, 5
    %p229 = pnand %p227, %p228
    %p230 = pneg %p229
    // Predicated region
    $region41: #{tpu_custom_call.1} parent=5 // pred_check
      _
    $region42: #{tpu_custom_call.1} parent=5 // pred_check_branch
      %232 = sbr.rel (%p229) target = $region44
    $region43: #{tpu_custom_call.1} parent=5 // pred_region
      %s233 = ssub.s32 %s14, 1
      %p234 = pneg %p47
      %p235 = pneg %p44
      %p236 = pneg %p68
      %p237 = pneg %p65
      %p238 = scmp.lt.s32.totalorder %s23, 1
      %s239 = scalar_select %p238, %s23, 1
      %s240 = smul.addr %s239, 44
      %s241 = smul.addr %s240, 8
      %s242 = scalar_lea.vmem %s2, %s241
      %p243 = pneg %p94
      %p244 = pneg %p91
      %p245 = pneg %p115
      %p246 = pneg %p112
      %p247 = pneg %p136
      %p248 = pneg %p133
      %p249 = pneg %p157
      %p250 = pneg %p154
      %p251 = pneg %p185
      %p252 = pneg %p182
      %s253 = smul.u32 8, %s24
      %p254 = scmp.lt.s32.totalorder %s23, 1
      %s255 = scalar_select %p254, %s23, 1
      %p256 = scmp.lt.s32.totalorder %s253, 15
      %s257 = scalar_select %p256, %s253, 15
      %s258 = smul.addr %s257, 2
      %s259 = smul.addr %s255, 32
      %s260 = sadd.s32 %s258, %s259
      %s261 = smul.addr %s260, 8
      %s262 = scalar_lea.vmem %s6, %s261
      %p263 = scmp.lt.s32.totalorder %s23, 1
      %s264 = scalar_select %p263, %s23, 1
      %s265 = smul.addr %s264, 44
      %s266 = smul.addr %s265, 8
      %s267 = scalar_lea.vmem %s2, %s266
      %s268 = smul.u32 8, %s24
      %p269 = scmp.lt.s32.totalorder %s23, 1
      %s270 = scalar_select %p269, %s23, 1
      %p271 = scmp.lt.s32.totalorder %s268, 15
      %s272 = scalar_select %p271, %s268, 15
      %s273 = smul.addr %s272, 2
      %s274 = smul.addr %s270, 32
      %s275 = sadd.s32 %s273, %s274
      %s276 = smul.addr %s275, 8
      %s277 = scalar_lea.vmem %s6, %s276
      %s278 = smul.u32 8, %s24
      %s279 = smul.u32 %s24, 8
      %s280 = sld [smem:[#allocation3]]
      %s281 = sld [smem:[#allocation4]]
      %s282 = smul.u32 %s279, 16
      %s283 = scalar_lea.vmem %s267, %s282
      %v284 = vld [vmem:[%s283] sm:$0xff]
      %v285 = vld [vmem:[%s283 + $0x8] sm:$0xff]
      %v286 = vld [vmem:[%s283 + $0x10] sm:$0xff]
      %v287 = vld [vmem:[%s283 + $0x18] sm:$0xff]
      %v288 = vld [vmem:[%s283 + $0x20] sm:$0xff]
      %v289 = vld [vmem:[%s283 + $0x28] sm:$0xff]
      %v290 = vld [vmem:[%s283 + $0x30] sm:$0xff]
      %v291 = vld [vmem:[%s283 + $0x38] sm:$0xff]
      %v292 = vld [vmem:[%s283 + $0x40] sm:$0xff]
      %v293 = vld [vmem:[%s283 + $0x48] sm:$0xff]
      %v294 = vld [vmem:[%s283 + $0x50] sm:$0xff]
      %v295 = vld [vmem:[%s283 + $0x58] sm:$0xff]
      %v296 = vld [vmem:[%s283 + $0x60] sm:$0xff]
      %v297 = vld [vmem:[%s283 + $0x68] sm:$0xff]
      %v298 = vld [vmem:[%s283 + $0x70] sm:$0xff]
      %v299 = vld [vmem:[%s283 + $0x78] sm:$0xff]
      %v300 = vld [vmem:[%s283 + $0x80] sm:$0xff]
      %v301 = vld [vmem:[%s283 + $0x88] sm:$0xff]
      %v302 = vld [vmem:[%s283 + $0x90] sm:$0xff]
      %v303 = vld [vmem:[%s283 + $0x98] sm:$0xff]
      %v304 = vld [vmem:[%s283 + $0xa0] sm:$0xff]
      %v305 = vld [vmem:[%s283 + $0xa8] sm:$0xff]
      %v306 = vld [vmem:[%s283 + $0xb0] sm:$0xff]
      %v307 = vld [vmem:[%s283 + $0xb8] sm:$0xff]
      %v308 = vld [vmem:[%s283 + $0xc0] sm:$0xff]
      %v309 = vld [vmem:[%s283 + $0xc8] sm:$0xff]
      %v310 = vld [vmem:[%s283 + $0xd0] sm:$0xff]
      %v311 = vld [vmem:[%s283 + $0xd8] sm:$0xff]
      %v312 = vld [vmem:[%s3] sm:$0xf]
      %vm313 = vcmask 31744
      %v315 = vsel %vm313, %v284, 0
      %v318 = vsel %vm313, %v285, 0
      %v321 = vsel %vm313, %v286, 0
      %v324 = vsel %vm313, %v287, 0
      %v327 = vsel %vm313, %v288, 0
      %v330 = vsel %vm313, %v289, 0
      %v333 = vsel %vm313, %v290, 0
      %v336 = vsel %vm313, %v291, 0
      %v339 = vsel %vm313, %v292, 0
      %v342 = vsel %vm313, %v293, 0
      %v345 = vsel %vm313, %v294, 0
      %v348 = vsel %vm313, %v295, 0
      %v351 = vsel %vm313, %v296, 0
      %v354 = vsel %vm313, %v297, 0
      %v357 = vsel %vm313, %v298, 0
      %v360 = vsel %vm313, %v299, 0
      %v363 = vsel %vm313, %v300, 0
      %v366 = vsel %vm313, %v301, 0
      %v369 = vsel %vm313, %v302, 0
      %v372 = vsel %vm313, %v303, 0
      %v375 = vsel %vm313, %v304, 0
      %v378 = vsel %vm313, %v305, 0
      %v381 = vsel %vm313, %v306, 0
      %v384 = vsel %vm313, %v307, 0
      %v387 = vsel %vm313, %v308, 0
      %v390 = vsel %vm313, %v309, 0
      %v393 = vsel %vm313, %v310, 0
      %v396 = vsel %vm313, %v311, 0
      %vm398 = vcmask 1043456
      %v400 = vsel %vm398, %v312, 0
      %402 = vmatprep.subr.mxu0 0.0
      %403 = vmatpush1.msra.mxu0 %v400
      %404 = vmatprep.subr.mxu0 0.0
      %405 = vmatpush1.msra.mxu0 0.0
      %406 = vmatprep.subr.mxu0 0.0
      %407 = vmatpush1.msra.mxu0 0.0
      %408 = vmatprep.subr.mxu0 0.0
      %409 = vmatpush1.msra.mxu0 0.0
      %410 = vmatprep.subr.mxu0 0.0
      %411 = vmatpush1.msra.mxu0 0.0
      %412 = vmatprep.subr.mxu0 0.0
      %413 = vmatpush1.msra.mxu0 0.0
      %414 = vmatprep.subr.mxu0 0.0
      %415 = vmatpush1.msra.mxu0 0.0
      %416 = vmatprep.subr.mxu0 0.0
      %417 = vmatpush1.msra.mxu0 0.0
      %418 = vmatprep.subr.mxu0 0.0
      %419 = vmatpush1.msra.mxu0 0.0
      %420 = vmatprep.subr.mxu0 0.0
      %421 = vmatpush1.msra.mxu0 0.0
      %422 = vmatprep.subr.mxu0 0.0
      %423 = vmatpush1.msra.mxu0 0.0
      %424 = vmatprep.subr.mxu0 0.0
      %425 = vmatpush1.msra.mxu0 0.0
      %426 = vmatprep.subr.mxu0 0.0
      %427 = vmatpush1.msra.mxu0 0.0
      %428 = vmatprep.subr.mxu0 0.0
      %429 = vmatpush1.msra.mxu0 0.0
      %430 = vmatprep.subr.mxu0 0.0
      %431 = vmatpush1.msra.mxu0 0.0
      %432 = vmatprep.subr.mxu0 0.0
      %433 = vmatpush1.msra.mxu0 0.0
      %434 = vmatprep.subr.mxu0 0.0
      %435 = vmatpush1.msra.mxu0 0.0
      %436 = vmatprep.subr.mxu0 0.0
      %437 = vmatpush1.msra.mxu0 0.0
      %438 = vmatprep.subr.mxu0 0.0
      %439 = vmatpush1.msra.mxu0 0.0
      %440 = vmatprep.subr.mxu0 0.0
      %441 = vmatpush1.msra.mxu0 0.0
      %442 = vmatprep.subr.mxu0 0.0
      %443 = vmatpush1.msra.mxu0 0.0
      %444 = vmatprep.subr.mxu0 0.0
      %445 = vmatpush1.msra.mxu0 0.0
      %446 = vmatprep.subr.mxu0 0.0
      %447 = vmatpush1.msra.mxu0 0.0
      %448 = vmatprep.subr.mxu0 0.0
      %449 = vmatpush1.msra.mxu0 0.0
      %450 = vmatprep.subr.mxu0 0.0
      %451 = vmatpush1.msra.mxu0 0.0
      %452 = vmatprep.subr.mxu0 0.0
      %453 = vmatpush1.msra.mxu0 0.0
      %454 = vmatprep.subr.mxu0 0.0
      %455 = vmatpush1.msra.mxu0 0.0
      %456 = vmatprep.subr.mxu0 0.0
      %457 = vmatpush1.msra.mxu0 0.0
      %458 = vmatprep.subr.mxu0 0.0
      %459 = vmatpush1.msra.mxu0 0.0
      %460 = vmatprep.subr.mxu0 0.0
      %461 = vmatpush1.msra.mxu0 0.0
      %462 = vmatprep.subr.mxu0 0.0
      %463 = vmatpush1.msra.mxu0 0.0
      %464 = vmatprep.subr.mxu0 0.0
      %465 = vmatpush1.msra.mxu0 0.0
      %466 = vmatprep.mubr.f32.mxu0 0.0
      %467 = vmatmul.mubr.f32.gmra.mrb[0].mxu0 %v315
      %v468 = vpop.f32.mrb[0].mxu0
      %v469 = vadd.f32 0.0, %v468
      %v470 = vpop.f32.mrb[0].mxu0
      %471 = vmatprep.mubr.f32.mxu0 0.0
      %472 = vmatmul.mubr.f32.gmra.mrb[0].mxu0 %v318
      %v473 = vpop.f32.mrb[0].mxu0
      %v474 = vadd.f32 0.0, %v473
      %v475 = vpop.f32.mrb[0].mxu0
      %476 = vmatprep.mubr.f32.mxu0 0.0
      %477 = vmatmul.mubr.f32.gmra.mrb[0].mxu0 %v321
      %v478 = vpop.f32.mrb[0].mxu0
      %v479 = vadd.f32 0.0, %v478
      %v480 = vpop.f32.mrb[0].mxu0
      %481 = vmatprep.mubr.f32.mxu0 0.0
      %482 = vmatmul.mubr.f32.gmra.mrb[0].mxu0 %v324
      %v483 = vpop.f32.mrb[0].mxu0
      %v484 = vadd.f32 0.0, %v483
      %v485 = vpop.f32.mrb[0].mxu0
      %486 = vmatprep.mubr.f32.mxu0 0.0
      %487 = vmatmul.mubr.f32.gmra.mrb[0].mxu0 %v327
      %v488 = vpop.f32.mrb[0].mxu0
      %v489 = vadd.f32 0.0, %v488
      %v490 = vpop.f32.mrb[0].mxu0
      %491 = vmatprep.mubr.f32.mxu0 0.0
      %492 = vmatmul.mubr.f32.gmra.mrb[0].mxu0 %v330
      %v493 = vpop.f32.mrb[0].mxu0
      %v494 = vadd.f32 0.0, %v493
      %v495 = vpop.f32.mrb[0].mxu0
      %496 = vmatprep.mubr.f32.mxu0 0.0
      %497 = vmatmul.mubr.f32.gmra.mrb[0].mxu0 %v333
      %v498 = vpop.f32.mrb[0].mxu0
      %v499 = vadd.f32 0.0, %v498
      %v500 = vpop.f32.mrb[0].mxu0
      %501 = vmatprep.mubr.f32.mxu0 0.0
      %502 = vmatmul.mubr.f32.gmra.mrb[0].mxu0 %v336
      %v503 = vpop.f32.mrb[0].mxu0
      %v504 = vadd.f32 0.0, %v503
      %v505 = vpop.f32.mrb[0].mxu0
      %506 = vmatprep.mubr.f32.mxu0 0.0
      %507 = vmatmul.mubr.f32.gmra.mrb[0].mxu0 %v339
      %v508 = vpop.f32.mrb[0].mxu0
      %v509 = vadd.f32 0.0, %v508
      %v510 = vpop.f32.mrb[0].mxu0
      %511 = vmatprep.mubr.f32.mxu0 0.0
      %512 = vmatmul.mubr.f32.gmra.mrb[0].mxu0 %v342
      %v513 = vpop.f32.mrb[0].mxu0
      %v514 = vadd.f32 0.0, %v513
      %v515 = vpop.f32.mrb[0].mxu0
      %516 = vmatprep.mubr.f32.mxu0 0.0
      %517 = vmatmul.mubr.f32.gmra.mrb[0].mxu0 %v345
      %v518 = vpop.f32.mrb[0].mxu0
      %v519 = vadd.f32 0.0, %v518
      %v520 = vpop.f32.mrb[0].mxu0
      %521 = vmatprep.mubr.f32.mxu0 0.0
      %522 = vmatmul.mubr.f32.gmra.mrb[0].mxu0 %v348
      %v523 = vpop.f32.mrb[0].mxu0
      %v524 = vadd.f32 0.0, %v523
      %v525 = vpop.f32.mrb[0].mxu0
      %526 = vmatprep.mubr.f32.mxu0 0.0
      %527 = vmatmul.mubr.f32.gmra.mrb[0].mxu0 %v351
      %v528 = vpop.f32.mrb[0].mxu0
      %v529 = vadd.f32 0.0, %v528
      %v530 = vpop.f32.mrb[0].mxu0
      %531 = vmatprep.mubr.f32.mxu0 0.0
      %532 = vmatmul.mubr.f32.gmra.mrb[0].mxu0 %v354
      %v533 = vpop.f32.mrb[0].mxu0
      %v534 = vadd.f32 0.0, %v533
      %v535 = vpop.f32.mrb[0].mxu0
      %536 = vmatprep.mubr.f32.mxu0 0.0
      %537 = vmatmul.mubr.f32.gmra.mrb[0].mxu0 %v357
      %v538 = vpop.f32.mrb[0].mxu0
      %v539 = vadd.f32 0.0, %v538
      %v540 = vpop.f32.mrb[0].mxu0
      %541 = vmatprep.mubr.f32.mxu0 0.0
      %542 = vmatmul.mubr.f32.gmra.mrb[0].mxu0 %v360
      %v543 = vpop.f32.mrb[0].mxu0
      %v544 = vadd.f32 0.0, %v543
      %v545 = vpop.f32.mrb[0].mxu0
      %546 = vmatprep.mubr.f32.mxu0 0.0
      %547 = vmatmul.mubr.f32.gmra.mrb[0].mxu0 %v363
      %v548 = vpop.f32.mrb[0].mxu0
      %v549 = vadd.f32 0.0, %v548
      %v550 = vpop.f32.mrb[0].mxu0
      %551 = vmatprep.mubr.f32.mxu0 0.0
      %552 = vmatmul.mubr.f32.gmra.mrb[0].mxu0 %v366
      %v553 = vpop.f32.mrb[0].mxu0
      %v554 = vadd.f32 0.0, %v553
      %v555 = vpop.f32.mrb[0].mxu0
      %556 = vmatprep.mubr.f32.mxu0 0.0
      %557 = vmatmul.mubr.f32.gmra.mrb[0].mxu0 %v369
      %v558 = vpop.f32.mrb[0].mxu0
      %v559 = vadd.f32 0.0, %v558
      %v560 = vpop.f32.mrb[0].mxu0
      %561 = vmatprep.mubr.f32.mxu0 0.0
      %562 = vmatmul.mubr.f32.gmra.mrb[0].mxu0 %v372
      %v563 = vpop.f32.mrb[0].mxu0
      %v564 = vadd.f32 0.0, %v563
      %v565 = vpop.f32.mrb[0].mxu0
      %566 = vmatprep.mubr.f32.mxu0 0.0
      %567 = vmatmul.mubr.f32.gmra.mrb[0].mxu0 %v375
      %v568 = vpop.f32.mrb[0].mxu0
      %v569 = vadd.f32 0.0, %v568
      %v570 = vpop.f32.mrb[0].mxu0
      %571 = vmatprep.mubr.f32.mxu0 0.0
      %572 = vmatmul.mubr.f32.gmra.mrb[0].mxu0 %v378
      %v573 = vpop.f32.mrb[0].mxu0
      %v574 = vadd.f32 0.0, %v573
      %v575 = vpop.f32.mrb[0].mxu0
      %576 = vmatprep.mubr.f32.mxu0 0.0
      %577 = vmatmul.mubr.f32.gmra.mrb[0].mxu0 %v381
      %v578 = vpop.f32.mrb[0].mxu0
      %v579 = vadd.f32 0.0, %v578
      %v580 = vpop.f32.mrb[0].mxu0
      %581 = vmatprep.mubr.f32.mxu0 0.0
      %582 = vmatmul.mubr.f32.gmra.mrb[0].mxu0 %v384
      %v583 = vpop.f32.mrb[0].mxu0
      %v584 = vadd.f32 0.0, %v583
      %v585 = vpop.f32.mrb[0].mxu0
      %586 = vmatprep.mubr.f32.mxu0 0.0
      %587 = vmatmul.mubr.f32.gmra.mrb[0].mxu0 %v387
      %v588 = vpop.f32.mrb[0].mxu0
      %v589 = vadd.f32 0.0, %v588
      %v590 = vpop.f32.mrb[0].mxu0
      %591 = vmatprep.mubr.f32.mxu0 0.0
      %592 = vmatmul.mubr.f32.gmra.mrb[0].mxu0 %v390
      %v593 = vpop.f32.mrb[0].mxu0
      %v594 = vadd.f32 0.0, %v593
      %v595 = vpop.f32.mrb[0].mxu0
      %596 = vmatprep.mubr.f32.mxu0 0.0
      %597 = vmatmul.mubr.f32.gmra.mrb[0].mxu0 %v393
      %v598 = vpop.f32.mrb[0].mxu0
      %v599 = vadd.f32 0.0, %v598
      %v600 = vpop.f32.mrb[0].mxu0
      %601 = vmatprep.mubr.f32.mxu0 0.0
      %602 = vmatmul.mubr.f32.gmra.mrb[0].mxu0 %v396
      %v603 = vpop.f32.mrb[0].mxu0
      %v604 = vadd.f32 0.0, %v603
      %v605 = vpop.f32.mrb[0].mxu0
      %606 = vdwg.mxu0
      %v607 = vmax.f32 %v469, 0.0
      %v608 = vmax.f32 %v474, 0.0
      %v609 = vmax.f32 %v479, 0.0
      %v610 = vmax.f32 %v484, 0.0
      %v611 = vmax.f32 %v489, 0.0
      %v612 = vmax.f32 %v494, 0.0
      %v613 = vmax.f32 %v499, 0.0
      %v614 = vmax.f32 %v504, 0.0
      %v615 = vmax.f32 %v509, 0.0
      %v616 = vmax.f32 %v514, 0.0
      %v617 = vmax.f32 %v519, 0.0
      %v618 = vmax.f32 %v524, 0.0
      %v619 = vmax.f32 %v529, 0.0
      %v620 = vmax.f32 %v534, 0.0
      %v621 = vmax.f32 %v539, 0.0
      %v622 = vmax.f32 %v544, 0.0
      %v623 = vmax.f32 %v549, 0.0
      %v624 = vmax.f32 %v554, 0.0
      %v625 = vmax.f32 %v559, 0.0
      %v626 = vmax.f32 %v564, 0.0
      %v627 = vmax.f32 %v569, 0.0
      %v628 = vmax.f32 %v574, 0.0
      %v629 = vmax.f32 %v579, 0.0
      %v630 = vmax.f32 %v584, 0.0
      %v631 = vmax.f32 %v589, 0.0
      %v632 = vmax.f32 %v594, 0.0
      %v633 = vmax.f32 %v599, 0.0
      %v634 = vmax.f32 %v604, 0.0
      %v635 = vmul.f32 %v607, %v607
      %v636 = vmul.f32 %v608, %v608
      %v637 = vmul.f32 %v609, %v609
      %v638 = vmul.f32 %v610, %v610
      %v639 = vmul.f32 %v611, %v611
      %v640 = vmul.f32 %v612, %v612
      %v641 = vmul.f32 %v613, %v613
      %v642 = vmul.f32 %v614, %v614
      %v643 = vmul.f32 %v615, %v615
      %v644 = vmul.f32 %v616, %v616
      %v645 = vmul.f32 %v617, %v617
      %v646 = vmul.f32 %v618, %v618
      %v647 = vmul.f32 %v619, %v619
      %v648 = vmul.f32 %v620, %v620
      %v649 = vmul.f32 %v621, %v621
      %v650 = vmul.f32 %v622, %v622
      %v651 = vmul.f32 %v623, %v623
      %v652 = vmul.f32 %v624, %v624
      %v653 = vmul.f32 %v625, %v625
      %v654 = vmul.f32 %v626, %v626
      %v655 = vmul.f32 %v627, %v627
      %v656 = vmul.f32 %v628, %v628
      %v657 = vmul.f32 %v629, %v629
      %v658 = vmul.f32 %v630, %v630
      %v659 = vmul.f32 %v631, %v631
      %v660 = vmul.f32 %v632, %v632
      %v661 = vmul.f32 %v633, %v633
      %v662 = vmul.f32 %v634, %v634
      %v663 = vstv %s280
      %v664 = vmul.f32 %v663, %v635
      %v665 = vmul.f32 %v663, %v636
      %v666 = vmul.f32 %v663, %v637
      %v667 = vmul.f32 %v663, %v638
      %v668 = vmul.f32 %v663, %v639
      %v669 = vmul.f32 %v663, %v640
      %v670 = vmul.f32 %v663, %v641
      %v671 = vmul.f32 %v663, %v642
      %v672 = vmul.f32 %v663, %v643
      %v673 = vmul.f32 %v663, %v644
      %v674 = vmul.f32 %v663, %v645
      %v675 = vmul.f32 %v663, %v646
      %v676 = vmul.f32 %v663, %v647
      %v677 = vmul.f32 %v663, %v648
      %v678 = vmul.f32 %v663, %v649
      %v679 = vmul.f32 %v663, %v650
      %v680 = vmul.f32 %v663, %v651
      %v681 = vmul.f32 %v663, %v652
      %v682 = vmul.f32 %v663, %v653
      %v683 = vmul.f32 %v663, %v654
      %v684 = vmul.f32 %v663, %v655
      %v685 = vmul.f32 %v663, %v656
      %v686 = vmul.f32 %v663, %v657
      %v687 = vmul.f32 %v663, %v658
      %v688 = vmul.f32 %v663, %v659
      %v689 = vmul.f32 %v663, %v660
      %v690 = vmul.f32 %v663, %v661
      %v691 = vmul.f32 %v663, %v662
      %v692 = vstv %s281
      %v693 = vadd.f32 %v664, %v692
      %v694 = vadd.f32 %v665, %v692
      %v695 = vadd.f32 %v666, %v692
      %v696 = vadd.f32 %v667, %v692
      %v697 = vadd.f32 %v668, %v692
      %v698 = vadd.f32 %v669, %v692
      %v699 = vadd.f32 %v670, %v692
      %v700 = vadd.f32 %v671, %v692
      %v701 = vadd.f32 %v672, %v692
      %v702 = vadd.f32 %v673, %v692
      %v703 = vadd.f32 %v674, %v692
      %v704 = vadd.f32 %v675, %v692
      %v705 = vadd.f32 %v676, %v692
      %v706 = vadd.f32 %v677, %v692
      %v707 = vadd.f32 %v678, %v692
      %v708 = vadd.f32 %v679, %v692
      %v709 = vadd.f32 %v680, %v692
      %v710 = vadd.f32 %v681, %v692
      %v711 = vadd.f32 %v682, %v692
      %v712 = vadd.f32 %v683, %v692
      %v713 = vadd.f32 %v684, %v692
      %v714 = vadd.f32 %v685, %v692
      %v715 = vadd.f32 %v686, %v692
      %v716 = vadd.f32 %v687, %v692
      %v717 = vadd.f32 %v688, %v692
      %v718 = vadd.f32 %v689, %v692
      %v719 = vadd.f32 %v690, %v692
      %v720 = vadd.f32 %v691, %v692
      %v721 = vlaneseq
      %v722 = vshrl.u32 %v721, 7
      %v723 = vadd.s32 %v722, 8
      %v724 = vadd.s32 %v722, 16
      %v725 = vadd.s32 %v722, 24
      %v726 = vadd.s32 %v722, 32
      %v727 = vadd.s32 %v722, 40
      %v728 = vadd.s32 %v722, 48
      %v729 = vadd.s32 %v722, 56
      %v730 = vadd.s32 %v722, 64
      %v731 = vadd.s32 %v722, 72
      %v732 = vadd.s32 %v722, 80
      %v733 = vadd.s32 %v722, 88
      %v734 = vadd.s32 %v722, 96
      %v735 = vadd.s32 %v722, 104
      %v736 = vadd.s32 %v722, 112
      %v737 = vadd.s32 %v722, 120
      %v738 = vadd.s32 %v722, 128
      %v739 = vadd.s32 %v722, 136
      %v740 = vadd.s32 %v722, 144
      %v741 = vadd.s32 %v722, 152
      %v742 = vadd.s32 %v722, 160
      %v743 = vadd.s32 %v722, 168
      %v744 = vadd.s32 %v722, 176
      %v745 = vadd.s32 %v722, 184
      %v746 = vadd.s32 %v722, 192
      %v747 = vadd.s32 %v722, 200
      %v748 = vadd.s32 %v722, 208
      %v749 = vadd.s32 %v722, 216
      %v750 = vstv %s282
      %v751 = vadd.s32 %v750, %v722
      %v752 = vadd.s32 %v750, %v723
      %v753 = vadd.s32 %v750, %v724
      %v754 = vadd.s32 %v750, %v725
      %v755 = vadd.s32 %v750, %v726
      %v756 = vadd.s32 %v750, %v727
      %v757 = vadd.s32 %v750, %v728
      %v758 = vadd.s32 %v750, %v729
      %v759 = vadd.s32 %v750, %v730
      %v760 = vadd.s32 %v750, %v731
      %v761 = vadd.s32 %v750, %v732
      %v762 = vadd.s32 %v750, %v733
      %v763 = vadd.s32 %v750, %v734
      %v764 = vadd.s32 %v750, %v735
      %v765 = vadd.s32 %v750, %v736
      %v766 = vadd.s32 %v750, %v737
      %v767 = vadd.s32 %v750, %v738
      %v768 = vadd.s32 %v750, %v739
      %v769 = vadd.s32 %v750, %v740
      %v770 = vadd.s32 %v750, %v741
      %v771 = vadd.s32 %v750, %v742
      %v772 = vadd.s32 %v750, %v743
      %v773 = vadd.s32 %v750, %v744
      %v774 = vadd.s32 %v750, %v745
      %v775 = vadd.s32 %v750, %v746
      %v776 = vadd.s32 %v750, %v747
      %v777 = vadd.s32 %v750, %v748
      %v778 = vadd.s32 %v750, %v749
      %vm779 = vcmp.ge.s32.totalorder %v751, 48
      %vm780 = vcmp.ge.s32.totalorder %v752, 48
      %vm781 = vcmp.ge.s32.totalorder %v753, 48
      %vm782 = vcmp.ge.s32.totalorder %v754, 48
      %vm783 = vcmp.ge.s32.totalorder %v755, 48
      %vm784 = vcmp.ge.s32.totalorder %v756, 48
      %vm785 = vcmp.ge.s32.totalorder %v757, 48
      %vm786 = vcmp.ge.s32.totalorder %v758, 48
      %vm787 = vcmp.ge.s32.totalorder %v759, 48
      %vm788 = vcmp.ge.s32.totalorder %v760, 48
      %vm789 = vcmp.ge.s32.totalorder %v761, 48
      %vm790 = vcmp.ge.s32.totalorder %v762, 48
      %vm791 = vcmp.ge.s32.totalorder %v763, 48
      %vm792 = vcmp.ge.s32.totalorder %v764, 48
      %vm793 = vcmp.ge.s32.totalorder %v765, 48
      %vm794 = vcmp.ge.s32.totalorder %v766, 48
      %vm795 = vcmp.ge.s32.totalorder %v767, 48
      %vm796 = vcmp.ge.s32.totalorder %v768, 48
      %vm797 = vcmp.ge.s32.totalorder %v769, 48
      %vm798 = vcmp.ge.s32.totalorder %v770, 48
      %vm799 = vcmp.ge.s32.totalorder %v771, 48
      %vm800 = vcmp.ge.s32.totalorder %v772, 48
      %vm801 = vcmp.ge.s32.totalorder %v773, 48
      %vm802 = vcmp.ge.s32.totalorder %v774, 48
      %vm803 = vcmp.ge.s32.totalorder %v775, 48
      %vm804 = vcmp.ge.s32.totalorder %v776, 48
      %vm805 = vcmp.ge.s32.totalorder %v777, 48
      %vm806 = vcmp.ge.s32.totalorder %v778, 48
      %vm807 = vcmp.lt.s32.totalorder %v751, 304
      %vm808 = vcmp.lt.s32.totalorder %v752, 304
      %vm809 = vcmp.lt.s32.totalorder %v753, 304
      %vm810 = vcmp.lt.s32.totalorder %v754, 304
      %vm811 = vcmp.lt.s32.totalorder %v755, 304
      %vm812 = vcmp.lt.s32.totalorder %v756, 304
      %vm813 = vcmp.lt.s32.totalorder %v757, 304
      %vm814 = vcmp.lt.s32.totalorder %v758, 304
      %vm815 = vcmp.lt.s32.totalorder %v759, 304
      %vm816 = vcmp.lt.s32.totalorder %v760, 304
      %vm817 = vcmp.lt.s32.totalorder %v761, 304
      %vm818 = vcmp.lt.s32.totalorder %v762, 304
      %vm819 = vcmp.lt.s32.totalorder %v763, 304
      %vm820 = vcmp.lt.s32.totalorder %v764, 304
      %vm821 = vcmp.lt.s32.totalorder %v765, 304
      %vm822 = vcmp.lt.s32.totalorder %v766, 304
      %vm823 = vcmp.lt.s32.totalorder %v767, 304
      %vm824 = vcmp.lt.s32.totalorder %v768, 304
      %vm825 = vcmp.lt.s32.totalorder %v769, 304
      %vm826 = vcmp.lt.s32.totalorder %v770, 304
      %vm827 = vcmp.lt.s32.totalorder %v771, 304
      %vm828 = vcmp.lt.s32.totalorder %v772, 304
      %vm829 = vcmp.lt.s32.totalorder %v773, 304
      %vm830 = vcmp.lt.s32.totalorder %v774, 304
      %vm831 = vcmp.lt.s32.totalorder %v775, 304
      %vm832 = vcmp.lt.s32.totalorder %v776, 304
      %vm833 = vcmp.lt.s32.totalorder %v777, 304
      %vm834 = vcmp.lt.s32.totalorder %v778, 304
      %vm835 = vmand %vm779, %vm807
      %vm836 = vmand %vm780, %vm808
      %vm837 = vmand %vm781, %vm809
      %vm838 = vmand %vm782, %vm810
      %vm839 = vmand %vm783, %vm811
      %vm840 = vmand %vm784, %vm812
      %vm841 = vmand %vm785, %vm813
      %vm842 = vmand %vm786, %vm814
      %vm843 = vmand %vm787, %vm815
      %vm844 = vmand %vm788, %vm816
      %vm845 = vmand %vm789, %vm817
      %vm846 = vmand %vm790, %vm818
      %vm847 = vmand %vm791, %vm819
      %vm848 = vmand %vm792, %vm820
      %vm849 = vmand %vm793, %vm821
      %vm850 = vmand %vm794, %vm822
      %vm851 = vmand %vm795, %vm823
      %vm852 = vmand %vm796, %vm824
      %vm853 = vmand %vm797, %vm825
      %vm854 = vmand %vm798, %vm826
      %vm855 = vmand %vm799, %vm827
      %vm856 = vmand %vm800, %vm828
      %vm857 = vmand %vm801, %vm829
      %vm858 = vmand %vm802, %vm830
      %vm859 = vmand %vm803, %vm831
      %vm860 = vmand %vm804, %vm832
      %vm861 = vmand %vm805, %vm833
      %vm862 = vmand %vm806, %vm834
      %v863 = vsel %vm835, 1, 0
      %v864 = vsel %vm836, 1, 0
      %v865 = vsel %vm837, 1, 0
      %v866 = vsel %vm838, 1, 0
      %v867 = vsel %vm839, 1, 0
      %v868 = vsel %vm840, 1, 0
      %v869 = vsel %vm841, 1, 0
      %v870 = vsel %vm842, 1, 0
      %v871 = vsel %vm843, 1, 0
      %v872 = vsel %vm844, 1, 0
      %v873 = vsel %vm845, 1, 0
      %v874 = vsel %vm846, 1, 0
      %v875 = vsel %vm847, 1, 0
      %v876 = vsel %vm848, 1, 0
      %v877 = vsel %vm849, 1, 0
      %v878 = vsel %vm850, 1, 0
      %v879 = vsel %vm851, 1, 0
      %v880 = vsel %vm852, 1, 0
      %v881 = vsel %vm853, 1, 0
      %v882 = vsel %vm854, 1, 0
      %v883 = vsel %vm855, 1, 0
      %v884 = vsel %vm856, 1, 0
      %v885 = vsel %vm857, 1, 0
      %v886 = vsel %vm858, 1, 0
      %v887 = vsel %vm859, 1, 0
      %v888 = vsel %vm860, 1, 0
      %v889 = vsel %vm861, 1, 0
      %v890 = vsel %vm862, 1, 0
      %vm891 = vcmp.eq.s32.totalorder %v863, 1
      %vm892 = vcmp.eq.s32.totalorder %v864, 1
      %vm893 = vcmp.eq.s32.totalorder %v865, 1
      %vm894 = vcmp.eq.s32.totalorder %v866, 1
      %vm895 = vcmp.eq.s32.totalorder %v867, 1
      %vm896 = vcmp.eq.s32.totalorder %v868, 1
      %vm897 = vcmp.eq.s32.totalorder %v869, 1
      %vm898 = vcmp.eq.s32.totalorder %v870, 1
      %vm899 = vcmp.eq.s32.totalorder %v871, 1
      %vm900 = vcmp.eq.s32.totalorder %v872, 1
      %vm901 = vcmp.eq.s32.totalorder %v873, 1
      %vm902 = vcmp.eq.s32.totalorder %v874, 1
      %vm903 = vcmp.eq.s32.totalorder %v875, 1
      %vm904 = vcmp.eq.s32.totalorder %v876, 1
      %vm905 = vcmp.eq.s32.totalorder %v877, 1
      %vm906 = vcmp.eq.s32.totalorder %v878, 1
      %vm907 = vcmp.eq.s32.totalorder %v879, 1
      %vm908 = vcmp.eq.s32.totalorder %v880, 1
      %vm909 = vcmp.eq.s32.totalorder %v881, 1
      %vm910 = vcmp.eq.s32.totalorder %v882, 1
      %vm911 = vcmp.eq.s32.totalorder %v883, 1
      %vm912 = vcmp.eq.s32.totalorder %v884, 1
      %vm913 = vcmp.eq.s32.totalorder %v885, 1
      %vm914 = vcmp.eq.s32.totalorder %v886, 1
      %vm915 = vcmp.eq.s32.totalorder %v887, 1
      %vm916 = vcmp.eq.s32.totalorder %v888, 1
      %vm917 = vcmp.eq.s32.totalorder %v889, 1
      %vm918 = vcmp.eq.s32.totalorder %v890, 1
      %v919 = vsel %vm891, %v693, 0.0
      %v920 = vsel %vm892, %v694, 0.0
      %v921 = vsel %vm893, %v695, 0.0
      %v922 = vsel %vm894, %v696, 0.0
      %v923 = vsel %vm895, %v697, 0.0
      %v924 = vsel %vm896, %v698, 0.0
      %v925 = vsel %vm897, %v699, 0.0
      %v926 = vsel %vm898, %v700, 0.0
      %v927 = vsel %vm899, %v701, 0.0
      %v928 = vsel %vm900, %v702, 0.0
      %v929 = vsel %vm901, %v703, 0.0
      %v930 = vsel %vm902, %v704, 0.0
      %v931 = vsel %vm903, %v705, 0.0
      %v932 = vsel %vm904, %v706, 0.0
      %v933 = vsel %vm905, %v707, 0.0
      %v934 = vsel %vm906, %v708, 0.0
      %v935 = vsel %vm907, %v709, 0.0
      %v936 = vsel %vm908, %v710, 0.0
      %v937 = vsel %vm909, %v711, 0.0
      %v938 = vsel %vm910, %v712, 0.0
      %v939 = vsel %vm911, %v713, 0.0
      %v940 = vsel %vm912, %v714, 0.0
      %v941 = vsel %vm913, %v715, 0.0
      %v942 = vsel %vm914, %v716, 0.0
      %v943 = vsel %vm915, %v717, 0.0
      %v944 = vsel %vm916, %v718, 0.0
      %v945 = vsel %vm917, %v719, 0.0
      %v946 = vsel %vm918, %v720, 0.0
      %vm947 = vcmask 59392
      %948 = vst.msk [vmem:[#allocation2] sm:$0x7] %vm947, 0.0
      %949 = vst.msk [vmem:[#allocation2 + $0x18] sm:$0x7] %vm947, 0.0
      %950 = vst.msk [vmem:[#allocation2 + $0x30] sm:$0x7] %vm947, 0.0
      %951 = vst.msk [vmem:[#allocation2 + $0x48] sm:$0x7] %vm947, 0.0
      %952 = vst.msk [vmem:[#allocation2 + $0x60] sm:$0x7] %vm947, 0.0
      %953 = vst.msk [vmem:[#allocation2 + $0x78] sm:$0x7] %vm947, 0.0
      %954 = vst.msk [vmem:[#allocation2 + $0x90] sm:$0x7] %vm947, 0.0
      %955 = vst.msk [vmem:[#allocation2 + $0xa8] sm:$0x7] %vm947, 0.0
      %956 = vst.msk [vmem:[#allocation2 + $0xc0] sm:$0x7] %vm947, 0.0
      %957 = vst.msk [vmem:[#allocation2 + $0xd8] sm:$0x7] %vm947, 0.0
      %958 = vst.msk [vmem:[#allocation2 + $0xf0] sm:$0x7] %vm947, 0.0
      %959 = vst.msk [vmem:[#allocation2 + $0x108] sm:$0x7] %vm947, 0.0
      %960 = vst.msk [vmem:[#allocation2 + $0x120] sm:$0x7] %vm947, 0.0
      %961 = vst.msk [vmem:[#allocation2 + $0x138] sm:$0x7] %vm947, 0.0
      %962 = vst.msk [vmem:[#allocation2 + $0x13] sm:$0x7] %vm947, 0.0
      %963 = vst.msk [vmem:[#allocation2 + $0x2b] sm:$0x7] %vm947, 0.0
      %964 = vst.msk [vmem:[#allocation2 + $0x43] sm:$0x7] %vm947, 0.0
      %965 = vst.msk [vmem:[#allocation2 + $0x5b] sm:$0x7] %vm947, 0.0
      %966 = vst.msk [vmem:[#allocation2 + $0x73] sm:$0x7] %vm947, 0.0
      %967 = vst.msk [vmem:[#allocation2 + $0x8b] sm:$0x7] %vm947, 0.0
      %968 = vst.msk [vmem:[#allocation2 + $0xa3] sm:$0x7] %vm947, 0.0
      %969 = vst.msk [vmem:[#allocation2 + $0xbb] sm:$0x7] %vm947, 0.0
      %970 = vst.msk [vmem:[#allocation2 + $0xd3] sm:$0x7] %vm947, 0.0
      %971 = vst.msk [vmem:[#allocation2 + $0xeb] sm:$0x7] %vm947, 0.0
      %972 = vst.msk [vmem:[#allocation2 + $0x103] sm:$0x7] %vm947, 0.0
      %973 = vst.msk [vmem:[#allocation2 + $0x11b] sm:$0x7] %vm947, 0.0
      %974 = vst.msk [vmem:[#allocation2 + $0x133] sm:$0x7] %vm947, 0.0
      %975 = vst.msk [vmem:[#allocation2 + $0x14b] sm:$0x7] %vm947, 0.0
      %vm976 = vcmask 64512
      %977 = vst.msk [vmem:[#allocation2 + $0x3] sm:$0xff] %vm976, %v919
      %978 = vst.msk [vmem:[#allocation2 + $0xb] sm:$0xff] %vm976, %v920
      %979 = vst.msk [vmem:[#allocation2 + $0x1b] sm:$0xff] %vm976, %v921
      %980 = vst.msk [vmem:[#allocation2 + $0x23] sm:$0xff] %vm976, %v922
      %981 = vst.msk [vmem:[#allocation2 + $0x33] sm:$0xff] %vm976, %v923
      %982 = vst.msk [vmem:[#allocation2 + $0x3b] sm:$0xff] %vm976, %v924
      %983 = vst.msk [vmem:[#allocation2 + $0x4b] sm:$0xff] %vm976, %v925
      %984 = vst.msk [vmem:[#allocation2 + $0x53] sm:$0xff] %vm976, %v926
      %985 = vst.msk [vmem:[#allocation2 + $0x63] sm:$0xff] %vm976, %v927
      %986 = vst.msk [vmem:[#allocation2 + $0x6b] sm:$0xff] %vm976, %v928
      %987 = vst.msk [vmem:[#allocation2 + $0x7b] sm:$0xff] %vm976, %v929
      %988 = vst.msk [vmem:[#allocation2 + $0x83] sm:$0xff] %vm976, %v930
      %989 = vst.msk [vmem:[#allocation2 + $0x93] sm:$0xff] %vm976, %v931
      %990 = vst.msk [vmem:[#allocation2 + $0x9b] sm:$0xff] %vm976, %v932
      %991 = vst.msk [vmem:[#allocation2 + $0xab] sm:$0xff] %vm976, %v933
      %992 = vst.msk [vmem:[#allocation2 + $0xb3] sm:$0xff] %vm976, %v934
      %993 = vst.msk [vmem:[#allocation2 + $0xc3] sm:$0xff] %vm976, %v935
      %994 = vst.msk [vmem:[#allocation2 + $0xcb] sm:$0xff] %vm976, %v936
      %995 = vst.msk [vmem:[#allocation2 + $0xdb] sm:$0xff] %vm976, %v937
      %996 = vst.msk [vmem:[#allocation2 + $0xe3] sm:$0xff] %vm976, %v938
      %997 = vst.msk [vmem:[#allocation2 + $0xf3] sm:$0xff] %vm976, %v939
      %998 = vst.msk [vmem:[#allocation2 + $0xfb] sm:$0xff] %vm976, %v940
      %999 = vst.msk [vmem:[#allocation2 + $0x10b] sm:$0xff] %vm976, %v941
      %1000 = vst.msk [vmem:[#allocation2 + $0x113] sm:$0xff] %vm976, %v942
      %1001 = vst.msk [vmem:[#allocation2 + $0x123] sm:$0xff] %vm976, %v943
      %1002 = vst.msk [vmem:[#allocation2 + $0x12b] sm:$0xff] %vm976, %v944
      %1003 = vst.msk [vmem:[#allocation2 + $0x13b] sm:$0xff] %vm976, %v945
      %1004 = vst.msk [vmem:[#allocation2 + $0x143] sm:$0xff] %vm976, %v946
      %v1005 = vld [vmem:[%s4] sm:$0xff]
      %v1006 = vld [vmem:[%s4 + $0x8] sm:$0xff]
      %v1007 = vld [vmem:[%s4 + $0x10] sm:$0xff]
      %v1008 = vld [vmem:[%s4 + $0x18] sm:$0xff]
      %v1009 = vld [vmem:[%s4 + $0x20] sm:$0xff]
      %v1010 = vld [vmem:[%s4 + $0x28] sm:$0xff]
      %v1011 = vld [vmem:[%s4 + $0x30] sm:$0x1]
      %v1012 = vld [vmem:[#allocation2] sm:$0xff]
      %v1013 = vld [vmem:[#allocation2 + $0x8] sm:$0xff]
      %v1014 = vld [vmem:[#allocation2 + $0x18] sm:$0xff]
      %v1015 = vld [vmem:[#allocation2 + $0x20] sm:$0xff]
      %v1016 = vld [vmem:[#allocation2 + $0x30] sm:$0xff]
      %v1017 = vld [vmem:[#allocation2 + $0x38] sm:$0xff]
      %v1018 = vld [vmem:[#allocation2 + $0x48] sm:$0xff]
      %v1019 = vld [vmem:[#allocation2 + $0x50] sm:$0xff]
      %v1020 = vld [vmem:[#allocation2 + $0x60] sm:$0xff]
      %v1021 = vld [vmem:[#allocation2 + $0x68] sm:$0xff]
      %v1022 = vld [vmem:[#allocation2 + $0x78] sm:$0xff]
      %v1023 = vld [vmem:[#allocation2 + $0x80] sm:$0xff]
      %v1024 = vld [vmem:[#allocation2 + $0x90] sm:$0xff]
      %v1025 = vld [vmem:[#allocation2 + $0x98] sm:$0xff]
      %v1026 = vld [vmem:[#allocation2 + $0xa8] sm:$0xff]
      %v1027 = vld [vmem:[#allocation2 + $0xb0] sm:$0xff]
      %v1028 = vld [vmem:[#allocation2 + $0xc0] sm:$0xff]
      %v1029 = vld [vmem:[#allocation2 + $0xc8] sm:$0xff]
      %v1030 = vld [vmem:[#allocation2 + $0xd8] sm:$0xff]
      %v1031 = vld [vmem:[#allocation2 + $0xe0] sm:$0xff]
      %v1032 = vld [vmem:[#allocation2 + $0xf0] sm:$0xff]
      %v1033 = vld [vmem:[#allocation2 + $0xf8] sm:$0xff]
      %v1034 = vld [vmem:[#allocation2 + $0x108] sm:$0xff]
      %v1035 = vld [vmem:[#allocation2 + $0x110] sm:$0xff]
      %v1036 = vld [vmem:[#allocation2 + $0x120] sm:$0xff]
      %v1037 = vld [vmem:[#allocation2 + $0x128] sm:$0xff]
      %v1038 = vld [vmem:[#allocation2 + $0x138] sm:$0xff]
      %v1039 = vld [vmem:[#allocation2 + $0x140] sm:$0xff]
      %v1040 = vlaneseq
      %v1041 = vshrl.u32 %v1040, 7
      %v1042 = vsub.s32 0, %v1041
      %v1043 = vrot.slane %v1005, %v1042
      %v1044 = vmul.f32 %v1012, %v1043
      %v1045 = vmul.f32 %v1013, %v1043
      %v1046 = vmul.f32 %v1014, %v1043
      %v1047 = vmul.f32 %v1015, %v1043
      %v1048 = vmul.f32 %v1016, %v1043
      %v1049 = vmul.f32 %v1017, %v1043
      %v1050 = vmul.f32 %v1018, %v1043
      %v1051 = vmul.f32 %v1019, %v1043
      %v1052 = vmul.f32 %v1020, %v1043
      %v1053 = vmul.f32 %v1021, %v1043
      %v1054 = vmul.f32 %v1022, %v1043
      %v1055 = vmul.f32 %v1023, %v1043
      %v1056 = vmul.f32 %v1024, %v1043
      %v1057 = vmul.f32 %v1025, %v1043
      %v1058 = vmul.f32 %v1026, %v1043
      %v1059 = vmul.f32 %v1027, %v1043
      %v1060 = vadd.f32 %v1044, 0.0
      %v1061 = vadd.f32 %v1045, 0.0
      %v1062 = vadd.f32 %v1046, 0.0
      %v1063 = vadd.f32 %v1047, 0.0
      %v1064 = vadd.f32 %v1048, 0.0
      %v1065 = vadd.f32 %v1049, 0.0
      %v1066 = vadd.f32 %v1050, 0.0
      %v1067 = vadd.f32 %v1051, 0.0
      %v1068 = vadd.f32 %v1052, 0.0
      %v1069 = vadd.f32 %v1053, 0.0
      %v1070 = vadd.f32 %v1054, 0.0
      %v1071 = vadd.f32 %v1055, 0.0
      %v1072 = vadd.f32 %v1056, 0.0
      %v1073 = vadd.f32 %v1057, 0.0
      %v1074 = vadd.f32 %v1058, 0.0
      %v1075 = vadd.f32 %v1059, 0.0
      %v1076 = vlaneseq
      %v1077 = vshrl.u32 %v1076, 7
      %v1078 = vsub.s32 7, %v1077
      %v1079 = vrot.slane %v1005, %v1078
      %v1080 = vmul.f32 %v1014, %v1079
      %v1081 = vmul.f32 %v1015, %v1079
      %v1082 = vmul.f32 %v1016, %v1079
      %v1083 = vmul.f32 %v1017, %v1079
      %v1084 = vmul.f32 %v1018, %v1079
      %v1085 = vmul.f32 %v1019, %v1079
      %v1086 = vmul.f32 %v1020, %v1079
      %v1087 = vmul.f32 %v1021, %v1079
      %v1088 = vmul.f32 %v1022, %v1079
      %v1089 = vmul.f32 %v1023, %v1079
      %v1090 = vmul.f32 %v1024, %v1079
      %v1091 = vmul.f32 %v1025, %v1079
      %v1092 = vmul.f32 %v1026, %v1079
      %v1093 = vmul.f32 %v1027, %v1079
      %v1094 = vmul.f32 %v1028, %v1079
      %v1095 = vmul.f32 %v1029, %v1079
      %v1096 = vadd.f32 %v1060, %v1080
      %v1097 = vadd.f32 %v1061, %v1081
      %v1098 = vadd.f32 %v1062, %v1082
      %v1099 = vadd.f32 %v1063, %v1083
      %v1100 = vadd.f32 %v1064, %v1084
      %v1101 = vadd.f32 %v1065, %v1085
      %v1102 = vadd.f32 %v1066, %v1086
      %v1103 = vadd.f32 %v1067, %v1087
      %v1104 = vadd.f32 %v1068, %v1088
      %v1105 = vadd.f32 %v1069, %v1089
      %v1106 = vadd.f32 %v1070, %v1090
      %v1107 = vadd.f32 %v1071, %v1091
      %v1108 = vadd.f32 %v1072, %v1092
      %v1109 = vadd.f32 %v1073, %v1093
      %v1110 = vadd.f32 %v1074, %v1094
      %v1111 = vadd.f32 %v1075, %v1095
      %v1112 = vlaneseq
      %v1113 = vshrl.u32 %v1112, 7
      %v1114 = vsub.s32 6, %v1113
      %v1115 = vrot.slane %v1006, %v1114
      %v1116 = vmul.f32 %v1016, %v1115
      %v1117 = vmul.f32 %v1017, %v1115
      %v1118 = vmul.f32 %v1018, %v1115
      %v1119 = vmul.f32 %v1019, %v1115
      %v1120 = vmul.f32 %v1020, %v1115
      %v1121 = vmul.f32 %v1021, %v1115
      %v1122 = vmul.f32 %v1022, %v1115
      %v1123 = vmul.f32 %v1023, %v1115
      %v1124 = vmul.f32 %v1024, %v1115
      %v1125 = vmul.f32 %v1025, %v1115
      %v1126 = vmul.f32 %v1026, %v1115
      %v1127 = vmul.f32 %v1027, %v1115
      %v1128 = vmul.f32 %v1028, %v1115
      %v1129 = vmul.f32 %v1029, %v1115
      %v1130 = vmul.f32 %v1030, %v1115
      %v1131 = vmul.f32 %v1031, %v1115
      %v1132 = vadd.f32 %v1096, %v1116
      %v1133 = vadd.f32 %v1097, %v1117
      %v1134 = vadd.f32 %v1098, %v1118
      %v1135 = vadd.f32 %v1099, %v1119
      %v1136 = vadd.f32 %v1100, %v1120
      %v1137 = vadd.f32 %v1101, %v1121
      %v1138 = vadd.f32 %v1102, %v1122
      %v1139 = vadd.f32 %v1103, %v1123
      %v1140 = vadd.f32 %v1104, %v1124
      %v1141 = vadd.f32 %v1105, %v1125
      %v1142 = vadd.f32 %v1106, %v1126
      %v1143 = vadd.f32 %v1107, %v1127
      %v1144 = vadd.f32 %v1108, %v1128
      %v1145 = vadd.f32 %v1109, %v1129
      %v1146 = vadd.f32 %v1110, %v1130
      %v1147 = vadd.f32 %v1111, %v1131
      %v1148 = vlaneseq
      %v1149 = vshrl.u32 %v1148, 7
      %v1150 = vsub.s32 5, %v1149
      %v1151 = vrot.slane %v1007, %v1150
      %v1152 = vmul.f32 %v1018, %v1151
      %v1153 = vmul.f32 %v1019, %v1151
      %v1154 = vmul.f32 %v1020, %v1151
      %v1155 = vmul.f32 %v1021, %v1151
      %v1156 = vmul.f32 %v1022, %v1151
      %v1157 = vmul.f32 %v1023, %v1151
      %v1158 = vmul.f32 %v1024, %v1151
      %v1159 = vmul.f32 %v1025, %v1151
      %v1160 = vmul.f32 %v1026, %v1151
      %v1161 = vmul.f32 %v1027, %v1151
      %v1162 = vmul.f32 %v1028, %v1151
      %v1163 = vmul.f32 %v1029, %v1151
      %v1164 = vmul.f32 %v1030, %v1151
      %v1165 = vmul.f32 %v1031, %v1151
      %v1166 = vmul.f32 %v1032, %v1151
      %v1167 = vmul.f32 %v1033, %v1151
      %v1168 = vadd.f32 %v1132, %v1152
      %v1169 = vadd.f32 %v1133, %v1153
      %v1170 = vadd.f32 %v1134, %v1154
      %v1171 = vadd.f32 %v1135, %v1155
      %v1172 = vadd.f32 %v1136, %v1156
      %v1173 = vadd.f32 %v1137, %v1157
      %v1174 = vadd.f32 %v1138, %v1158
      %v1175 = vadd.f32 %v1139, %v1159
      %v1176 = vadd.f32 %v1140, %v1160
      %v1177 = vadd.f32 %v1141, %v1161
      %v1178 = vadd.f32 %v1142, %v1162
      %v1179 = vadd.f32 %v1143, %v1163
      %v1180 = vadd.f32 %v1144, %v1164
      %v1181 = vadd.f32 %v1145, %v1165
      %v1182 = vadd.f32 %v1146, %v1166
      %v1183 = vadd.f32 %v1147, %v1167
      %v1184 = vlaneseq
      %v1185 = vshrl.u32 %v1184, 7
      %v1186 = vsub.s32 4, %v1185
      %v1187 = vrot.slane %v1008, %v1186
      %v1188 = vmul.f32 %v1020, %v1187
      %v1189 = vmul.f32 %v1021, %v1187
      %v1190 = vmul.f32 %v1022, %v1187
      %v1191 = vmul.f32 %v1023, %v1187
      %v1192 = vmul.f32 %v1024, %v1187
      %v1193 = vmul.f32 %v1025, %v1187
      %v1194 = vmul.f32 %v1026, %v1187
      %v1195 = vmul.f32 %v1027, %v1187
      %v1196 = vmul.f32 %v1028, %v1187
      %v1197 = vmul.f32 %v1029, %v1187
      %v1198 = vmul.f32 %v1030, %v1187
      %v1199 = vmul.f32 %v1031, %v1187
      %v1200 = vmul.f32 %v1032, %v1187
      %v1201 = vmul.f32 %v1033, %v1187
      %v1202 = vmul.f32 %v1034, %v1187
      %v1203 = vmul.f32 %v1035, %v1187
      %v1204 = vadd.f32 %v1168, %v1188
      %v1205 = vadd.f32 %v1169, %v1189
      %v1206 = vadd.f32 %v1170, %v1190
      %v1207 = vadd.f32 %v1171, %v1191
      %v1208 = vadd.f32 %v1172, %v1192
      %v1209 = vadd.f32 %v1173, %v1193
      %v1210 = vadd.f32 %v1174, %v1194
      %v1211 = vadd.f32 %v1175, %v1195
      %v1212 = vadd.f32 %v1176, %v1196
      %v1213 = vadd.f32 %v1177, %v1197
      %v1214 = vadd.f32 %v1178, %v1198
      %v1215 = vadd.f32 %v1179, %v1199
      %v1216 = vadd.f32 %v1180, %v1200
      %v1217 = vadd.f32 %v1181, %v1201
      %v1218 = vadd.f32 %v1182, %v1202
      %v1219 = vadd.f32 %v1183, %v1203
      %v1220 = vlaneseq
      %v1221 = vshrl.u32 %v1220, 7
      %v1222 = vsub.s32 3, %v1221
      %v1223 = vrot.slane %v1009, %v1222
      %v1224 = vmul.f32 %v1022, %v1223
      %v1225 = vmul.f32 %v1023, %v1223
      %v1226 = vmul.f32 %v1024, %v1223
      %v1227 = vmul.f32 %v1025, %v1223
      %v1228 = vmul.f32 %v1026, %v1223
      %v1229 = vmul.f32 %v1027, %v1223
      %v1230 = vmul.f32 %v1028, %v1223
      %v1231 = vmul.f32 %v1029, %v1223
      %v1232 = vmul.f32 %v1030, %v1223
      %v1233 = vmul.f32 %v1031, %v1223
      %v1234 = vmul.f32 %v1032, %v1223
      %v1235 = vmul.f32 %v1033, %v1223
      %v1236 = vmul.f32 %v1034, %v1223
      %v1237 = vmul.f32 %v1035, %v1223
      %v1238 = vmul.f32 %v1036, %v1223
      %v1239 = vmul.f32 %v1037, %v1223
      %v1240 = vadd.f32 %v1204, %v1224
      %v1241 = vadd.f32 %v1205, %v1225
      %v1242 = vadd.f32 %v1206, %v1226
      %v1243 = vadd.f32 %v1207, %v1227
      %v1244 = vadd.f32 %v1208, %v1228
      %v1245 = vadd.f32 %v1209, %v1229
      %v1246 = vadd.f32 %v1210, %v1230
      %v1247 = vadd.f32 %v1211, %v1231
      %v1248 = vadd.f32 %v1212, %v1232
      %v1249 = vadd.f32 %v1213, %v1233
      %v1250 = vadd.f32 %v1214, %v1234
      %v1251 = vadd.f32 %v1215, %v1235
      %v1252 = vadd.f32 %v1216, %v1236
      %v1253 = vadd.f32 %v1217, %v1237
      %v1254 = vadd.f32 %v1218, %v1238
      %v1255 = vadd.f32 %v1219, %v1239
      %v1256 = vlaneseq
      %v1257 = vshrl.u32 %v1256, 7
      %v1258 = vsub.s32 2, %v1257
      %v1259 = vrot.slane %v1010, %v1258
      %v1260 = vmul.f32 %v1024, %v1259
      %v1261 = vmul.f32 %v1025, %v1259
      %v1262 = vmul.f32 %v1026, %v1259
      %v1263 = vmul.f32 %v1027, %v1259
      %v1264 = vmul.f32 %v1028, %v1259
      %v1265 = vmul.f32 %v1029, %v1259
      %v1266 = vmul.f32 %v1030, %v1259
      %v1267 = vmul.f32 %v1031, %v1259
      %v1268 = vmul.f32 %v1032, %v1259
      %v1269 = vmul.f32 %v1033, %v1259
      %v1270 = vmul.f32 %v1034, %v1259
      %v1271 = vmul.f32 %v1035, %v1259
      %v1272 = vmul.f32 %v1036, %v1259
      %v1273 = vmul.f32 %v1037, %v1259
      %v1274 = vmul.f32 %v1038, %v1259
      %v1275 = vmul.f32 %v1039, %v1259
      %v1276 = vadd.f32 %v1240, %v1260
      %v1277 = vadd.f32 %v1241, %v1261
      %v1278 = vadd.f32 %v1242, %v1262
      %v1279 = vadd.f32 %v1243, %v1263
      %v1280 = vadd.f32 %v1244, %v1264
      %v1281 = vadd.f32 %v1245, %v1265
      %v1282 = vadd.f32 %v1246, %v1266
      %v1283 = vadd.f32 %v1247, %v1267
      %v1284 = vadd.f32 %v1248, %v1268
      %v1285 = vadd.f32 %v1249, %v1269
      %v1286 = vadd.f32 %v1250, %v1270
      %v1287 = vadd.f32 %v1251, %v1271
      %v1288 = vadd.f32 %v1252, %v1272
      %v1289 = vadd.f32 %v1253, %v1273
      %v1290 = vadd.f32 %v1254, %v1274
      %v1291 = vadd.f32 %v1255, %v1275
      %v1292 = vld [vmem:[#allocation2 + $0x1] sm:$0xff]
      %v1293 = vld [vmem:[#allocation2 + $0x9] sm:$0xff]
      %v1294 = vld [vmem:[#allocation2 + $0x19] sm:$0xff]
      %v1295 = vld [vmem:[#allocation2 + $0x21] sm:$0xff]
      %v1296 = vld [vmem:[#allocation2 + $0x31] sm:$0xff]
      %v1297 = vld [vmem:[#allocation2 + $0x39] sm:$0xff]
      %v1298 = vld [vmem:[#allocation2 + $0x49] sm:$0xff]
      %v1299 = vld [vmem:[#allocation2 + $0x51] sm:$0xff]
      %v1300 = vld [vmem:[#allocation2 + $0x61] sm:$0xff]
      %v1301 = vld [vmem:[#allocation2 + $0x69] sm:$0xff]
      %v1302 = vld [vmem:[#allocation2 + $0x79] sm:$0xff]
      %v1303 = vld [vmem:[#allocation2 + $0x81] sm:$0xff]
      %v1304 = vld [vmem:[#allocation2 + $0x91] sm:$0xff]
      %v1305 = vld [vmem:[#allocation2 + $0x99] sm:$0xff]
      %v1306 = vld [vmem:[#allocation2 + $0xa9] sm:$0xff]
      %v1307 = vld [vmem:[#allocation2 + $0xb1] sm:$0xff]
      %v1308 = vld [vmem:[#allocation2 + $0xc1] sm:$0xff]
      %v1309 = vld [vmem:[#allocation2 + $0xc9] sm:$0xff]
      %v1310 = vld [vmem:[#allocation2 + $0xd9] sm:$0xff]
      %v1311 = vld [vmem:[#allocation2 + $0xe1] sm:$0xff]
      %v1312 = vld [vmem:[#allocation2 + $0xf1] sm:$0xff]
      %v1313 = vld [vmem:[#allocation2 + $0xf9] sm:$0xff]
      %v1314 = vld [vmem:[#allocation2 + $0x109] sm:$0xff]
      %v1315 = vld [vmem:[#allocation2 + $0x111] sm:$0xff]
      %v1316 = vld [vmem:[#allocation2 + $0x121] sm:$0xff]
      %v1317 = vld [vmem:[#allocation2 + $0x129] sm:$0xff]
      %v1318 = vld [vmem:[#allocation2 + $0x139] sm:$0xff]
      %v1319 = vld [vmem:[#allocation2 + $0x141] sm:$0xff]
      %v1320 = vlaneseq
      %v1321 = vshrl.u32 %v1320, 7
      %v1322 = vsub.s32 1, %v1321
      %v1323 = vrot.slane %v1005, %v1322
      %v1324 = vmul.f32 %v1292, %v1323
      %v1325 = vmul.f32 %v1293, %v1323
      %v1326 = vmul.f32 %v1294, %v1323
      %v1327 = vmul.f32 %v1295, %v1323
      %v1328 = vmul.f32 %v1296, %v1323
      %v1329 = vmul.f32 %v1297, %v1323
      %v1330 = vmul.f32 %v1298, %v1323
      %v1331 = vmul.f32 %v1299, %v1323
      %v1332 = vmul.f32 %v1300, %v1323
      %v1333 = vmul.f32 %v1301, %v1323
      %v1334 = vmul.f32 %v1302, %v1323
      %v1335 = vmul.f32 %v1303, %v1323
      %v1336 = vmul.f32 %v1304, %v1323
      %v1337 = vmul.f32 %v1305, %v1323
      %v1338 = vmul.f32 %v1306, %v1323
      %v1339 = vmul.f32 %v1307, %v1323
      %v1340 = vadd.f32 %v1276, %v1324
      %v1341 = vadd.f32 %v1277, %v1325
      %v1342 = vadd.f32 %v1278, %v1326
      %v1343 = vadd.f32 %v1279, %v1327
      %v1344 = vadd.f32 %v1280, %v1328
      %v1345 = vadd.f32 %v1281, %v1329
      %v1346 = vadd.f32 %v1282, %v1330
      %v1347 = vadd.f32 %v1283, %v1331
      %v1348 = vadd.f32 %v1284, %v1332
      %v1349 = vadd.f32 %v1285, %v1333
      %v1350 = vadd.f32 %v1286, %v1334
      %v1351 = vadd.f32 %v1287, %v1335
      %v1352 = vadd.f32 %v1288, %v1336
      %v1353 = vadd.f32 %v1289, %v1337
      %v1354 = vadd.f32 %v1290, %v1338
      %v1355 = vadd.f32 %v1291, %v1339
      %v1356 = vlaneseq
      %v1357 = vshrl.u32 %v1356, 7
      %v1358 = vsub.s32 0, %v1357
      %v1359 = vrot.slane %v1006, %v1358
      %v1360 = vmul.f32 %v1294, %v1359
      %v1361 = vmul.f32 %v1295, %v1359
      %v1362 = vmul.f32 %v1296, %v1359
      %v1363 = vmul.f32 %v1297, %v1359
      %v1364 = vmul.f32 %v1298, %v1359
      %v1365 = vmul.f32 %v1299, %v1359
      %v1366 = vmul.f32 %v1300, %v1359
      %v1367 = vmul.f32 %v1301, %v1359
      %v1368 = vmul.f32 %v1302, %v1359
      %v1369 = vmul.f32 %v1303, %v1359
      %v1370 = vmul.f32 %v1304, %v1359
      %v1371 = vmul.f32 %v1305, %v1359
      %v1372 = vmul.f32 %v1306, %v1359
      %v1373 = vmul.f32 %v1307, %v1359
      %v1374 = vmul.f32 %v1308, %v1359
      %v1375 = vmul.f32 %v1309, %v1359
      %v1376 = vadd.f32 %v1340, %v1360
      %v1377 = vadd.f32 %v1341, %v1361
      %v1378 = vadd.f32 %v1342, %v1362
      %v1379 = vadd.f32 %v1343, %v1363
      %v1380 = vadd.f32 %v1344, %v1364
      %v1381 = vadd.f32 %v1345, %v1365
      %v1382 = vadd.f32 %v1346, %v1366
      %v1383 = vadd.f32 %v1347, %v1367
      %v1384 = vadd.f32 %v1348, %v1368
      %v1385 = vadd.f32 %v1349, %v1369
      %v1386 = vadd.f32 %v1350, %v1370
      %v1387 = vadd.f32 %v1351, %v1371
      %v1388 = vadd.f32 %v1352, %v1372
      %v1389 = vadd.f32 %v1353, %v1373
      %v1390 = vadd.f32 %v1354, %v1374
      %v1391 = vadd.f32 %v1355, %v1375
      %v1392 = vlaneseq
      %v1393 = vshrl.u32 %v1392, 7
      %v1394 = vsub.s32 7, %v1393
      %v1395 = vrot.slane %v1006, %v1394
      %v1396 = vmul.f32 %v1296, %v1395
      %v1397 = vmul.f32 %v1297, %v1395
      %v1398 = vmul.f32 %v1298, %v1395
      %v1399 = vmul.f32 %v1299, %v1395
      %v1400 = vmul.f32 %v1300, %v1395
      %v1401 = vmul.f32 %v1301, %v1395
      %v1402 = vmul.f32 %v1302, %v1395
      %v1403 = vmul.f32 %v1303, %v1395
      %v1404 = vmul.f32 %v1304, %v1395
      %v1405 = vmul.f32 %v1305, %v1395
      %v1406 = vmul.f32 %v1306, %v1395
      %v1407 = vmul.f32 %v1307, %v1395
      %v1408 = vmul.f32 %v1308, %v1395
      %v1409 = vmul.f32 %v1309, %v1395
      %v1410 = vmul.f32 %v1310, %v1395
      %v1411 = vmul.f32 %v1311, %v1395
      %v1412 = vadd.f32 %v1376, %v1396
      %v1413 = vadd.f32 %v1377, %v1397
      %v1414 = vadd.f32 %v1378, %v1398
      %v1415 = vadd.f32 %v1379, %v1399
      %v1416 = vadd.f32 %v1380, %v1400
      %v1417 = vadd.f32 %v1381, %v1401
      %v1418 = vadd.f32 %v1382, %v1402
      %v1419 = vadd.f32 %v1383, %v1403
      %v1420 = vadd.f32 %v1384, %v1404
      %v1421 = vadd.f32 %v1385, %v1405
      %v1422 = vadd.f32 %v1386, %v1406
      %v1423 = vadd.f32 %v1387, %v1407
      %v1424 = vadd.f32 %v1388, %v1408
      %v1425 = vadd.f32 %v1389, %v1409
      %v1426 = vadd.f32 %v1390, %v1410
      %v1427 = vadd.f32 %v1391, %v1411
      %v1428 = vlaneseq
      %v1429 = vshrl.u32 %v1428, 7
      %v1430 = vsub.s32 6, %v1429
      %v1431 = vrot.slane %v1007, %v1430
      %v1432 = vmul.f32 %v1298, %v1431
      %v1433 = vmul.f32 %v1299, %v1431
      %v1434 = vmul.f32 %v1300, %v1431
      %v1435 = vmul.f32 %v1301, %v1431
      %v1436 = vmul.f32 %v1302, %v1431
      %v1437 = vmul.f32 %v1303, %v1431
      %v1438 = vmul.f32 %v1304, %v1431
      %v1439 = vmul.f32 %v1305, %v1431
      %v1440 = vmul.f32 %v1306, %v1431
      %v1441 = vmul.f32 %v1307, %v1431
      %v1442 = vmul.f32 %v1308, %v1431
      %v1443 = vmul.f32 %v1309, %v1431
      %v1444 = vmul.f32 %v1310, %v1431
      %v1445 = vmul.f32 %v1311, %v1431
      %v1446 = vmul.f32 %v1312, %v1431
      %v1447 = vmul.f32 %v1313, %v1431
      %v1448 = vadd.f32 %v1412, %v1432
      %v1449 = vadd.f32 %v1413, %v1433
      %v1450 = vadd.f32 %v1414, %v1434
      %v1451 = vadd.f32 %v1415, %v1435
      %v1452 = vadd.f32 %v1416, %v1436
      %v1453 = vadd.f32 %v1417, %v1437
      %v1454 = vadd.f32 %v1418, %v1438
      %v1455 = vadd.f32 %v1419, %v1439
      %v1456 = vadd.f32 %v1420, %v1440
      %v1457 = vadd.f32 %v1421, %v1441
      %v1458 = vadd.f32 %v1422, %v1442
      %v1459 = vadd.f32 %v1423, %v1443
      %v1460 = vadd.f32 %v1424, %v1444
      %v1461 = vadd.f32 %v1425, %v1445
      %v1462 = vadd.f32 %v1426, %v1446
      %v1463 = vadd.f32 %v1427, %v1447
      %v1464 = vlaneseq
      %v1465 = vshrl.u32 %v1464, 7
      %v1466 = vsub.s32 5, %v1465
      %v1467 = vrot.slane %v1008, %v1466
      %v1468 = vmul.f32 %v1300, %v1467
      %v1469 = vmul.f32 %v1301, %v1467
      %v1470 = vmul.f32 %v1302, %v1467
      %v1471 = vmul.f32 %v1303, %v1467
      %v1472 = vmul.f32 %v1304, %v1467
      %v1473 = vmul.f32 %v1305, %v1467
      %v1474 = vmul.f32 %v1306, %v1467
      %v1475 = vmul.f32 %v1307, %v1467
      %v1476 = vmul.f32 %v1308, %v1467
      %v1477 = vmul.f32 %v1309, %v1467
      %v1478 = vmul.f32 %v1310, %v1467
      %v1479 = vmul.f32 %v1311, %v1467
      %v1480 = vmul.f32 %v1312, %v1467
      %v1481 = vmul.f32 %v1313, %v1467
      %v1482 = vmul.f32 %v1314, %v1467
      %v1483 = vmul.f32 %v1315, %v1467
      %v1484 = vadd.f32 %v1448, %v1468
      %v1485 = vadd.f32 %v1449, %v1469
      %v1486 = vadd.f32 %v1450, %v1470
      %v1487 = vadd.f32 %v1451, %v1471
      %v1488 = vadd.f32 %v1452, %v1472
      %v1489 = vadd.f32 %v1453, %v1473
      %v1490 = vadd.f32 %v1454, %v1474
      %v1491 = vadd.f32 %v1455, %v1475
      %v1492 = vadd.f32 %v1456, %v1476
      %v1493 = vadd.f32 %v1457, %v1477
      %v1494 = vadd.f32 %v1458, %v1478
      %v1495 = vadd.f32 %v1459, %v1479
      %v1496 = vadd.f32 %v1460, %v1480
      %v1497 = vadd.f32 %v1461, %v1481
      %v1498 = vadd.f32 %v1462, %v1482
      %v1499 = vadd.f32 %v1463, %v1483
      %v1500 = vlaneseq
      %v1501 = vshrl.u32 %v1500, 7
      %v1502 = vsub.s32 4, %v1501
      %v1503 = vrot.slane %v1009, %v1502
      %v1504 = vmul.f32 %v1302, %v1503
      %v1505 = vmul.f32 %v1303, %v1503
      %v1506 = vmul.f32 %v1304, %v1503
      %v1507 = vmul.f32 %v1305, %v1503
      %v1508 = vmul.f32 %v1306, %v1503
      %v1509 = vmul.f32 %v1307, %v1503
      %v1510 = vmul.f32 %v1308, %v1503
      %v1511 = vmul.f32 %v1309, %v1503
      %v1512 = vmul.f32 %v1310, %v1503
      %v1513 = vmul.f32 %v1311, %v1503
      %v1514 = vmul.f32 %v1312, %v1503
      %v1515 = vmul.f32 %v1313, %v1503
      %v1516 = vmul.f32 %v1314, %v1503
      %v1517 = vmul.f32 %v1315, %v1503
      %v1518 = vmul.f32 %v1316, %v1503
      %v1519 = vmul.f32 %v1317, %v1503
      %v1520 = vadd.f32 %v1484, %v1504
      %v1521 = vadd.f32 %v1485, %v1505
      %v1522 = vadd.f32 %v1486, %v1506
      %v1523 = vadd.f32 %v1487, %v1507
      %v1524 = vadd.f32 %v1488, %v1508
      %v1525 = vadd.f32 %v1489, %v1509
      %v1526 = vadd.f32 %v1490, %v1510
      %v1527 = vadd.f32 %v1491, %v1511
      %v1528 = vadd.f32 %v1492, %v1512
      %v1529 = vadd.f32 %v1493, %v1513
      %v1530 = vadd.f32 %v1494, %v1514
      %v1531 = vadd.f32 %v1495, %v1515
      %v1532 = vadd.f32 %v1496, %v1516
      %v1533 = vadd.f32 %v1497, %v1517
      %v1534 = vadd.f32 %v1498, %v1518
      %v1535 = vadd.f32 %v1499, %v1519
      %v1536 = vlaneseq
      %v1537 = vshrl.u32 %v1536, 7
      %v1538 = vsub.s32 3, %v1537
      %v1539 = vrot.slane %v1010, %v1538
      %v1540 = vmul.f32 %v1304, %v1539
      %v1541 = vmul.f32 %v1305, %v1539
      %v1542 = vmul.f32 %v1306, %v1539
      %v1543 = vmul.f32 %v1307, %v1539
      %v1544 = vmul.f32 %v1308, %v1539
      %v1545 = vmul.f32 %v1309, %v1539
      %v1546 = vmul.f32 %v1310, %v1539
      %v1547 = vmul.f32 %v1311, %v1539
      %v1548 = vmul.f32 %v1312, %v1539
      %v1549 = vmul.f32 %v1313, %v1539
      %v1550 = vmul.f32 %v1314, %v1539
      %v1551 = vmul.f32 %v1315, %v1539
      %v1552 = vmul.f32 %v1316, %v1539
      %v1553 = vmul.f32 %v1317, %v1539
      %v1554 = vmul.f32 %v1318, %v1539
      %v1555 = vmul.f32 %v1319, %v1539
      %v1556 = vadd.f32 %v1520, %v1540
      %v1557 = vadd.f32 %v1521, %v1541
      %v1558 = vadd.f32 %v1522, %v1542
      %v1559 = vadd.f32 %v1523, %v1543
      %v1560 = vadd.f32 %v1524, %v1544
      %v1561 = vadd.f32 %v1525, %v1545
      %v1562 = vadd.f32 %v1526, %v1546
      %v1563 = vadd.f32 %v1527, %v1547
      %v1564 = vadd.f32 %v1528, %v1548
      %v1565 = vadd.f32 %v1529, %v1549
      %v1566 = vadd.f32 %v1530, %v1550
      %v1567 = vadd.f32 %v1531, %v1551
      %v1568 = vadd.f32 %v1532, %v1552
      %v1569 = vadd.f32 %v1533, %v1553
      %v1570 = vadd.f32 %v1534, %v1554
      %v1571 = vadd.f32 %v1535, %v1555
      %v1572 = vld [vmem:[#allocation2 + $0x2] sm:$0xff]
      %v1573 = vld [vmem:[#allocation2 + $0xa] sm:$0xff]
      %v1574 = vld [vmem:[#allocation2 + $0x1a] sm:$0xff]
      %v1575 = vld [vmem:[#allocation2 + $0x22] sm:$0xff]
      %v1576 = vld [vmem:[#allocation2 + $0x32] sm:$0xff]
      %v1577 = vld [vmem:[#allocation2 + $0x3a] sm:$0xff]
      %v1578 = vld [vmem:[#allocation2 + $0x4a] sm:$0xff]
      %v1579 = vld [vmem:[#allocation2 + $0x52] sm:$0xff]
      %v1580 = vld [vmem:[#allocation2 + $0x62] sm:$0xff]
      %v1581 = vld [vmem:[#allocation2 + $0x6a] sm:$0xff]
      %v1582 = vld [vmem:[#allocation2 + $0x7a] sm:$0xff]
      %v1583 = vld [vmem:[#allocation2 + $0x82] sm:$0xff]
      %v1584 = vld [vmem:[#allocation2 + $0x92] sm:$0xff]
      %v1585 = vld [vmem:[#allocation2 + $0x9a] sm:$0xff]
      %v1586 = vld [vmem:[#allocation2 + $0xaa] sm:$0xff]
      %v1587 = vld [vmem:[#allocation2 + $0xb2] sm:$0xff]
      %v1588 = vld [vmem:[#allocation2 + $0xc2] sm:$0xff]
      %v1589 = vld [vmem:[#allocation2 + $0xca] sm:$0xff]
      %v1590 = vld [vmem:[#allocation2 + $0xda] sm:$0xff]
      %v1591 = vld [vmem:[#allocation2 + $0xe2] sm:$0xff]
      %v1592 = vld [vmem:[#allocation2 + $0xf2] sm:$0xff]
      %v1593 = vld [vmem:[#allocation2 + $0xfa] sm:$0xff]
      %v1594 = vld [vmem:[#allocation2 + $0x10a] sm:$0xff]
      %v1595 = vld [vmem:[#allocation2 + $0x112] sm:$0xff]
      %v1596 = vld [vmem:[#allocation2 + $0x122] sm:$0xff]
      %v1597 = vld [vmem:[#allocation2 + $0x12a] sm:$0xff]
      %v1598 = vld [vmem:[#allocation2 + $0x13a] sm:$0xff]
      %v1599 = vld [vmem:[#allocation2 + $0x142] sm:$0xff]
      %v1600 = vlaneseq
      %v1601 = vshrl.u32 %v1600, 7
      %v1602 = vsub.s32 2, %v1601
      %v1603 = vrot.slane %v1005, %v1602
      %v1604 = vmul.f32 %v1572, %v1603
      %v1605 = vmul.f32 %v1573, %v1603
      %v1606 = vmul.f32 %v1574, %v1603
      %v1607 = vmul.f32 %v1575, %v1603
      %v1608 = vmul.f32 %v1576, %v1603
      %v1609 = vmul.f32 %v1577, %v1603
      %v1610 = vmul.f32 %v1578, %v1603
      %v1611 = vmul.f32 %v1579, %v1603
      %v1612 = vmul.f32 %v1580, %v1603
      %v1613 = vmul.f32 %v1581, %v1603
      %v1614 = vmul.f32 %v1582, %v1603
      %v1615 = vmul.f32 %v1583, %v1603
      %v1616 = vmul.f32 %v1584, %v1603
      %v1617 = vmul.f32 %v1585, %v1603
      %v1618 = vmul.f32 %v1586, %v1603
      %v1619 = vmul.f32 %v1587, %v1603
      %v1620 = vadd.f32 %v1556, %v1604
      %v1621 = vadd.f32 %v1557, %v1605
      %v1622 = vadd.f32 %v1558, %v1606
      %v1623 = vadd.f32 %v1559, %v1607
      %v1624 = vadd.f32 %v1560, %v1608
      %v1625 = vadd.f32 %v1561, %v1609
      %v1626 = vadd.f32 %v1562, %v1610
      %v1627 = vadd.f32 %v1563, %v1611
      %v1628 = vadd.f32 %v1564, %v1612
      %v1629 = vadd.f32 %v1565, %v1613
      %v1630 = vadd.f32 %v1566, %v1614
      %v1631 = vadd.f32 %v1567, %v1615
      %v1632 = vadd.f32 %v1568, %v1616
      %v1633 = vadd.f32 %v1569, %v1617
      %v1634 = vadd.f32 %v1570, %v1618
      %v1635 = vadd.f32 %v1571, %v1619
      %v1636 = vlaneseq
      %v1637 = vshrl.u32 %v1636, 7
      %v1638 = vsub.s32 1, %v1637
      %v1639 = vrot.slane %v1006, %v1638
      %v1640 = vmul.f32 %v1574, %v1639
      %v1641 = vmul.f32 %v1575, %v1639
      %v1642 = vmul.f32 %v1576, %v1639
      %v1643 = vmul.f32 %v1577, %v1639
      %v1644 = vmul.f32 %v1578, %v1639
      %v1645 = vmul.f32 %v1579, %v1639
      %v1646 = vmul.f32 %v1580, %v1639
      %v1647 = vmul.f32 %v1581, %v1639
      %v1648 = vmul.f32 %v1582, %v1639
      %v1649 = vmul.f32 %v1583, %v1639
      %v1650 = vmul.f32 %v1584, %v1639
      %v1651 = vmul.f32 %v1585, %v1639
      %v1652 = vmul.f32 %v1586, %v1639
      %v1653 = vmul.f32 %v1587, %v1639
      %v1654 = vmul.f32 %v1588, %v1639
      %v1655 = vmul.f32 %v1589, %v1639
      %v1656 = vadd.f32 %v1620, %v1640
      %v1657 = vadd.f32 %v1621, %v1641
      %v1658 = vadd.f32 %v1622, %v1642
      %v1659 = vadd.f32 %v1623, %v1643
      %v1660 = vadd.f32 %v1624, %v1644
      %v1661 = vadd.f32 %v1625, %v1645
      %v1662 = vadd.f32 %v1626, %v1646
      %v1663 = vadd.f32 %v1627, %v1647
      %v1664 = vadd.f32 %v1628, %v1648
      %v1665 = vadd.f32 %v1629, %v1649
      %v1666 = vadd.f32 %v1630, %v1650
      %v1667 = vadd.f32 %v1631, %v1651
      %v1668 = vadd.f32 %v1632, %v1652
      %v1669 = vadd.f32 %v1633, %v1653
      %v1670 = vadd.f32 %v1634, %v1654
      %v1671 = vadd.f32 %v1635, %v1655
      %v1672 = vlaneseq
      %v1673 = vshrl.u32 %v1672, 7
      %v1674 = vsub.s32 0, %v1673
      %v1675 = vrot.slane %v1007, %v1674
      %v1676 = vmul.f32 %v1576, %v1675
      %v1677 = vmul.f32 %v1577, %v1675
      %v1678 = vmul.f32 %v1578, %v1675
      %v1679 = vmul.f32 %v1579, %v1675
      %v1680 = vmul.f32 %v1580, %v1675
      %v1681 = vmul.f32 %v1581, %v1675
      %v1682 = vmul.f32 %v1582, %v1675
      %v1683 = vmul.f32 %v1583, %v1675
      %v1684 = vmul.f32 %v1584, %v1675
      %v1685 = vmul.f32 %v1585, %v1675
      %v1686 = vmul.f32 %v1586, %v1675
      %v1687 = vmul.f32 %v1587, %v1675
      %v1688 = vmul.f32 %v1588, %v1675
      %v1689 = vmul.f32 %v1589, %v1675
      %v1690 = vmul.f32 %v1590, %v1675
      %v1691 = vmul.f32 %v1591, %v1675
      %v1692 = vadd.f32 %v1656, %v1676
      %v1693 = vadd.f32 %v1657, %v1677
      %v1694 = vadd.f32 %v1658, %v1678
      %v1695 = vadd.f32 %v1659, %v1679
      %v1696 = vadd.f32 %v1660, %v1680
      %v1697 = vadd.f32 %v1661, %v1681
      %v1698 = vadd.f32 %v1662, %v1682
      %v1699 = vadd.f32 %v1663, %v1683
      %v1700 = vadd.f32 %v1664, %v1684
      %v1701 = vadd.f32 %v1665, %v1685
      %v1702 = vadd.f32 %v1666, %v1686
      %v1703 = vadd.f32 %v1667, %v1687
      %v1704 = vadd.f32 %v1668, %v1688
      %v1705 = vadd.f32 %v1669, %v1689
      %v1706 = vadd.f32 %v1670, %v1690
      %v1707 = vadd.f32 %v1671, %v1691
      %v1708 = vlaneseq
      %v1709 = vshrl.u32 %v1708, 7
      %v1710 = vsub.s32 7, %v1709
      %v1711 = vrot.slane %v1007, %v1710
      %v1712 = vmul.f32 %v1578, %v1711
      %v1713 = vmul.f32 %v1579, %v1711
      %v1714 = vmul.f32 %v1580, %v1711
      %v1715 = vmul.f32 %v1581, %v1711
      %v1716 = vmul.f32 %v1582, %v1711
      %v1717 = vmul.f32 %v1583, %v1711
      %v1718 = vmul.f32 %v1584, %v1711
      %v1719 = vmul.f32 %v1585, %v1711
      %v1720 = vmul.f32 %v1586, %v1711
      %v1721 = vmul.f32 %v1587, %v1711
      %v1722 = vmul.f32 %v1588, %v1711
      %v1723 = vmul.f32 %v1589, %v1711
      %v1724 = vmul.f32 %v1590, %v1711
      %v1725 = vmul.f32 %v1591, %v1711
      %v1726 = vmul.f32 %v1592, %v1711
      %v1727 = vmul.f32 %v1593, %v1711
      %v1728 = vadd.f32 %v1692, %v1712
      %v1729 = vadd.f32 %v1693, %v1713
      %v1730 = vadd.f32 %v1694, %v1714
      %v1731 = vadd.f32 %v1695, %v1715
      %v1732 = vadd.f32 %v1696, %v1716
      %v1733 = vadd.f32 %v1697, %v1717
      %v1734 = vadd.f32 %v1698, %v1718
      %v1735 = vadd.f32 %v1699, %v1719
      %v1736 = vadd.f32 %v1700, %v1720
      %v1737 = vadd.f32 %v1701, %v1721
      %v1738 = vadd.f32 %v1702, %v1722
      %v1739 = vadd.f32 %v1703, %v1723
      %v1740 = vadd.f32 %v1704, %v1724
      %v1741 = vadd.f32 %v1705, %v1725
      %v1742 = vadd.f32 %v1706, %v1726
      %v1743 = vadd.f32 %v1707, %v1727
      %v1744 = vlaneseq
      %v1745 = vshrl.u32 %v1744, 7
      %v1746 = vsub.s32 6, %v1745
      %v1747 = vrot.slane %v1008, %v1746
      %v1748 = vmul.f32 %v1580, %v1747
      %v1749 = vmul.f32 %v1581, %v1747
      %v1750 = vmul.f32 %v1582, %v1747
      %v1751 = vmul.f32 %v1583, %v1747
      %v1752 = vmul.f32 %v1584, %v1747
      %v1753 = vmul.f32 %v1585, %v1747
      %v1754 = vmul.f32 %v1586, %v1747
      %v1755 = vmul.f32 %v1587, %v1747
      %v1756 = vmul.f32 %v1588, %v1747
      %v1757 = vmul.f32 %v1589, %v1747
      %v1758 = vmul.f32 %v1590, %v1747
      %v1759 = vmul.f32 %v1591, %v1747
      %v1760 = vmul.f32 %v1592, %v1747
      %v1761 = vmul.f32 %v1593, %v1747
      %v1762 = vmul.f32 %v1594, %v1747
      %v1763 = vmul.f32 %v1595, %v1747
      %v1764 = vadd.f32 %v1728, %v1748
      %v1765 = vadd.f32 %v1729, %v1749
      %v1766 = vadd.f32 %v1730, %v1750
      %v1767 = vadd.f32 %v1731, %v1751
      %v1768 = vadd.f32 %v1732, %v1752
      %v1769 = vadd.f32 %v1733, %v1753
      %v1770 = vadd.f32 %v1734, %v1754
      %v1771 = vadd.f32 %v1735, %v1755
      %v1772 = vadd.f32 %v1736, %v1756
      %v1773 = vadd.f32 %v1737, %v1757
      %v1774 = vadd.f32 %v1738, %v1758
      %v1775 = vadd.f32 %v1739, %v1759
      %v1776 = vadd.f32 %v1740, %v1760
      %v1777 = vadd.f32 %v1741, %v1761
      %v1778 = vadd.f32 %v1742, %v1762
      %v1779 = vadd.f32 %v1743, %v1763
      %v1780 = vlaneseq
      %v1781 = vshrl.u32 %v1780, 7
      %v1782 = vsub.s32 5, %v1781
      %v1783 = vrot.slane %v1009, %v1782
      %v1784 = vmul.f32 %v1582, %v1783
      %v1785 = vmul.f32 %v1583, %v1783
      %v1786 = vmul.f32 %v1584, %v1783
      %v1787 = vmul.f32 %v1585, %v1783
      %v1788 = vmul.f32 %v1586, %v1783
      %v1789 = vmul.f32 %v1587, %v1783
      %v1790 = vmul.f32 %v1588, %v1783
      %v1791 = vmul.f32 %v1589, %v1783
      %v1792 = vmul.f32 %v1590, %v1783
      %v1793 = vmul.f32 %v1591, %v1783
      %v1794 = vmul.f32 %v1592, %v1783
      %v1795 = vmul.f32 %v1593, %v1783
      %v1796 = vmul.f32 %v1594, %v1783
      %v1797 = vmul.f32 %v1595, %v1783
      %v1798 = vmul.f32 %v1596, %v1783
      %v1799 = vmul.f32 %v1597, %v1783
      %v1800 = vadd.f32 %v1764, %v1784
      %v1801 = vadd.f32 %v1765, %v1785
      %v1802 = vadd.f32 %v1766, %v1786
      %v1803 = vadd.f32 %v1767, %v1787
      %v1804 = vadd.f32 %v1768, %v1788
      %v1805 = vadd.f32 %v1769, %v1789
      %v1806 = vadd.f32 %v1770, %v1790
      %v1807 = vadd.f32 %v1771, %v1791
      %v1808 = vadd.f32 %v1772, %v1792
      %v1809 = vadd.f32 %v1773, %v1793
      %v1810 = vadd.f32 %v1774, %v1794
      %v1811 = vadd.f32 %v1775, %v1795
      %v1812 = vadd.f32 %v1776, %v1796
      %v1813 = vadd.f32 %v1777, %v1797
      %v1814 = vadd.f32 %v1778, %v1798
      %v1815 = vadd.f32 %v1779, %v1799
      %v1816 = vlaneseq
      %v1817 = vshrl.u32 %v1816, 7
      %v1818 = vsub.s32 4, %v1817
      %v1819 = vrot.slane %v1010, %v1818
      %v1820 = vmul.f32 %v1584, %v1819
      %v1821 = vmul.f32 %v1585, %v1819
      %v1822 = vmul.f32 %v1586, %v1819
      %v1823 = vmul.f32 %v1587, %v1819
      %v1824 = vmul.f32 %v1588, %v1819
      %v1825 = vmul.f32 %v1589, %v1819
      %v1826 = vmul.f32 %v1590, %v1819
      %v1827 = vmul.f32 %v1591, %v1819
      %v1828 = vmul.f32 %v1592, %v1819
      %v1829 = vmul.f32 %v1593, %v1819
      %v1830 = vmul.f32 %v1594, %v1819
      %v1831 = vmul.f32 %v1595, %v1819
      %v1832 = vmul.f32 %v1596, %v1819
      %v1833 = vmul.f32 %v1597, %v1819
      %v1834 = vmul.f32 %v1598, %v1819
      %v1835 = vmul.f32 %v1599, %v1819
      %v1836 = vadd.f32 %v1800, %v1820
      %v1837 = vadd.f32 %v1801, %v1821
      %v1838 = vadd.f32 %v1802, %v1822
      %v1839 = vadd.f32 %v1803, %v1823
      %v1840 = vadd.f32 %v1804, %v1824
      %v1841 = vadd.f32 %v1805, %v1825
      %v1842 = vadd.f32 %v1806, %v1826
      %v1843 = vadd.f32 %v1807, %v1827
      %v1844 = vadd.f32 %v1808, %v1828
      %v1845 = vadd.f32 %v1809, %v1829
      %v1846 = vadd.f32 %v1810, %v1830
      %v1847 = vadd.f32 %v1811, %v1831
      %v1848 = vadd.f32 %v1812, %v1832
      %v1849 = vadd.f32 %v1813, %v1833
      %v1850 = vadd.f32 %v1814, %v1834
      %v1851 = vadd.f32 %v1815, %v1835
      %v1852 = vld [vmem:[#allocation2 + $0x3] sm:$0xff]
      %v1853 = vld [vmem:[#allocation2 + $0xb] sm:$0xff]
      %v1854 = vld [vmem:[#allocation2 + $0x1b] sm:$0xff]
      %v1855 = vld [vmem:[#allocation2 + $0x23] sm:$0xff]
      %v1856 = vld [vmem:[#allocation2 + $0x33] sm:$0xff]
      %v1857 = vld [vmem:[#allocation2 + $0x3b] sm:$0xff]
      %v1858 = vld [vmem:[#allocation2 + $0x4b] sm:$0xff]
      %v1859 = vld [vmem:[#allocation2 + $0x53] sm:$0xff]
      %v1860 = vld [vmem:[#allocation2 + $0x63] sm:$0xff]
      %v1861 = vld [vmem:[#allocation2 + $0x6b] sm:$0xff]
      %v1862 = vld [vmem:[#allocation2 + $0x7b] sm:$0xff]
      %v1863 = vld [vmem:[#allocation2 + $0x83] sm:$0xff]
      %v1864 = vld [vmem:[#allocation2 + $0x93] sm:$0xff]
      %v1865 = vld [vmem:[#allocation2 + $0x9b] sm:$0xff]
      %v1866 = vld [vmem:[#allocation2 + $0xab] sm:$0xff]
      %v1867 = vld [vmem:[#allocation2 + $0xb3] sm:$0xff]
      %v1868 = vld [vmem:[#allocation2 + $0xc3] sm:$0xff]
      %v1869 = vld [vmem:[#allocation2 + $0xcb] sm:$0xff]
      %v1870 = vld [vmem:[#allocation2 + $0xdb] sm:$0xff]
      %v1871 = vld [vmem:[#allocation2 + $0xe3] sm:$0xff]
      %v1872 = vld [vmem:[#allocation2 + $0xf3] sm:$0xff]
      %v1873 = vld [vmem:[#allocation2 + $0xfb] sm:$0xff]
      %v1874 = vld [vmem:[#allocation2 + $0x10b] sm:$0xff]
      %v1875 = vld [vmem:[#allocation2 + $0x113] sm:$0xff]
      %v1876 = vld [vmem:[#allocation2 + $0x123] sm:$0xff]
      %v1877 = vld [vmem:[#allocation2 + $0x12b] sm:$0xff]
      %v1878 = vld [vmem:[#allocation2 + $0x13b] sm:$0xff]
      %v1879 = vld [vmem:[#allocation2 + $0x143] sm:$0xff]
      %v1880 = vlaneseq
      %v1881 = vshrl.u32 %v1880, 7
      %v1882 = vsub.s32 3, %v1881
      %v1883 = vrot.slane %v1005, %v1882
      %v1884 = vmul.f32 %v1852, %v1883
      %v1885 = vmul.f32 %v1853, %v1883
      %v1886 = vmul.f32 %v1854, %v1883
      %v1887 = vmul.f32 %v1855, %v1883
      %v1888 = vmul.f32 %v1856, %v1883
      %v1889 = vmul.f32 %v1857, %v1883
      %v1890 = vmul.f32 %v1858, %v1883
      %v1891 = vmul.f32 %v1859, %v1883
      %v1892 = vmul.f32 %v1860, %v1883
      %v1893 = vmul.f32 %v1861, %v1883
      %v1894 = vmul.f32 %v1862, %v1883
      %v1895 = vmul.f32 %v1863, %v1883
      %v1896 = vmul.f32 %v1864, %v1883
      %v1897 = vmul.f32 %v1865, %v1883
      %v1898 = vmul.f32 %v1866, %v1883
      %v1899 = vmul.f32 %v1867, %v1883
      %v1900 = vadd.f32 %v1836, %v1884
      %v1901 = vadd.f32 %v1837, %v1885
      %v1902 = vadd.f32 %v1838, %v1886
      %v1903 = vadd.f32 %v1839, %v1887
      %v1904 = vadd.f32 %v1840, %v1888
      %v1905 = vadd.f32 %v1841, %v1889
      %v1906 = vadd.f32 %v1842, %v1890
      %v1907 = vadd.f32 %v1843, %v1891
      %v1908 = vadd.f32 %v1844, %v1892
      %v1909 = vadd.f32 %v1845, %v1893
      %v1910 = vadd.f32 %v1846, %v1894
      %v1911 = vadd.f32 %v1847, %v1895
      %v1912 = vadd.f32 %v1848, %v1896
      %v1913 = vadd.f32 %v1849, %v1897
      %v1914 = vadd.f32 %v1850, %v1898
      %v1915 = vadd.f32 %v1851, %v1899
      %v1916 = vlaneseq
      %v1917 = vshrl.u32 %v1916, 7
      %v1918 = vsub.s32 2, %v1917
      %v1919 = vrot.slane %v1006, %v1918
      %v1920 = vmul.f32 %v1854, %v1919
      %v1921 = vmul.f32 %v1855, %v1919
      %v1922 = vmul.f32 %v1856, %v1919
      %v1923 = vmul.f32 %v1857, %v1919
      %v1924 = vmul.f32 %v1858, %v1919
      %v1925 = vmul.f32 %v1859, %v1919
      %v1926 = vmul.f32 %v1860, %v1919
      %v1927 = vmul.f32 %v1861, %v1919
      %v1928 = vmul.f32 %v1862, %v1919
      %v1929 = vmul.f32 %v1863, %v1919
      %v1930 = vmul.f32 %v1864, %v1919
      %v1931 = vmul.f32 %v1865, %v1919
      %v1932 = vmul.f32 %v1866, %v1919
      %v1933 = vmul.f32 %v1867, %v1919
      %v1934 = vmul.f32 %v1868, %v1919
      %v1935 = vmul.f32 %v1869, %v1919
      %v1936 = vadd.f32 %v1900, %v1920
      %v1937 = vadd.f32 %v1901, %v1921
      %v1938 = vadd.f32 %v1902, %v1922
      %v1939 = vadd.f32 %v1903, %v1923
      %v1940 = vadd.f32 %v1904, %v1924
      %v1941 = vadd.f32 %v1905, %v1925
      %v1942 = vadd.f32 %v1906, %v1926
      %v1943 = vadd.f32 %v1907, %v1927
      %v1944 = vadd.f32 %v1908, %v1928
      %v1945 = vadd.f32 %v1909, %v1929
      %v1946 = vadd.f32 %v1910, %v1930
      %v1947 = vadd.f32 %v1911, %v1931
      %v1948 = vadd.f32 %v1912, %v1932
      %v1949 = vadd.f32 %v1913, %v1933
      %v1950 = vadd.f32 %v1914, %v1934
      %v1951 = vadd.f32 %v1915, %v1935
      %v1952 = vlaneseq
      %v1953 = vshrl.u32 %v1952, 7
      %v1954 = vsub.s32 1, %v1953
      %v1955 = vrot.slane %v1007, %v1954
      %v1956 = vmul.f32 %v1856, %v1955
      %v1957 = vmul.f32 %v1857, %v1955
      %v1958 = vmul.f32 %v1858, %v1955
      %v1959 = vmul.f32 %v1859, %v1955
      %v1960 = vmul.f32 %v1860, %v1955
      %v1961 = vmul.f32 %v1861, %v1955
      %v1962 = vmul.f32 %v1862, %v1955
      %v1963 = vmul.f32 %v1863, %v1955
      %v1964 = vmul.f32 %v1864, %v1955
      %v1965 = vmul.f32 %v1865, %v1955
      %v1966 = vmul.f32 %v1866, %v1955
      %v1967 = vmul.f32 %v1867, %v1955
      %v1968 = vmul.f32 %v1868, %v1955
      %v1969 = vmul.f32 %v1869, %v1955
      %v1970 = vmul.f32 %v1870, %v1955
      %v1971 = vmul.f32 %v1871, %v1955
      %v1972 = vadd.f32 %v1936, %v1956
      %v1973 = vadd.f32 %v1937, %v1957
      %v1974 = vadd.f32 %v1938, %v1958
      %v1975 = vadd.f32 %v1939, %v1959
      %v1976 = vadd.f32 %v1940, %v1960
      %v1977 = vadd.f32 %v1941, %v1961
      %v1978 = vadd.f32 %v1942, %v1962
      %v1979 = vadd.f32 %v1943, %v1963
      %v1980 = vadd.f32 %v1944, %v1964
      %v1981 = vadd.f32 %v1945, %v1965
      %v1982 = vadd.f32 %v1946, %v1966
      %v1983 = vadd.f32 %v1947, %v1967
      %v1984 = vadd.f32 %v1948, %v1968
      %v1985 = vadd.f32 %v1949, %v1969
      %v1986 = vadd.f32 %v1950, %v1970
      %v1987 = vadd.f32 %v1951, %v1971
      %v1988 = vlaneseq
      %v1989 = vshrl.u32 %v1988, 7
      %v1990 = vsub.s32 0, %v1989
      %v1991 = vrot.slane %v1008, %v1990
      %v1992 = vmul.f32 %v1858, %v1991
      %v1993 = vmul.f32 %v1859, %v1991
      %v1994 = vmul.f32 %v1860, %v1991
      %v1995 = vmul.f32 %v1861, %v1991
      %v1996 = vmul.f32 %v1862, %v1991
      %v1997 = vmul.f32 %v1863, %v1991
      %v1998 = vmul.f32 %v1864, %v1991
      %v1999 = vmul.f32 %v1865, %v1991
      %v2000 = vmul.f32 %v1866, %v1991
      %v2001 = vmul.f32 %v1867, %v1991
      %v2002 = vmul.f32 %v1868, %v1991
      %v2003 = vmul.f32 %v1869, %v1991
      %v2004 = vmul.f32 %v1870, %v1991
      %v2005 = vmul.f32 %v1871, %v1991
      %v2006 = vmul.f32 %v1872, %v1991
      %v2007 = vmul.f32 %v1873, %v1991
      %v2008 = vadd.f32 %v1972, %v1992
      %v2009 = vadd.f32 %v1973, %v1993
      %v2010 = vadd.f32 %v1974, %v1994
      %v2011 = vadd.f32 %v1975, %v1995
      %v2012 = vadd.f32 %v1976, %v1996
      %v2013 = vadd.f32 %v1977, %v1997
      %v2014 = vadd.f32 %v1978, %v1998
      %v2015 = vadd.f32 %v1979, %v1999
      %v2016 = vadd.f32 %v1980, %v2000
      %v2017 = vadd.f32 %v1981, %v2001
      %v2018 = vadd.f32 %v1982, %v2002
      %v2019 = vadd.f32 %v1983, %v2003
      %v2020 = vadd.f32 %v1984, %v2004
      %v2021 = vadd.f32 %v1985, %v2005
      %v2022 = vadd.f32 %v1986, %v2006
      %v2023 = vadd.f32 %v1987, %v2007
      %v2024 = vlaneseq
      %v2025 = vshrl.u32 %v2024, 7
      %v2026 = vsub.s32 7, %v2025
      %v2027 = vrot.slane %v1008, %v2026
      %v2028 = vmul.f32 %v1860, %v2027
      %v2029 = vmul.f32 %v1861, %v2027
      %v2030 = vmul.f32 %v1862, %v2027
      %v2031 = vmul.f32 %v1863, %v2027
      %v2032 = vmul.f32 %v1864, %v2027
      %v2033 = vmul.f32 %v1865, %v2027
      %v2034 = vmul.f32 %v1866, %v2027
      %v2035 = vmul.f32 %v1867, %v2027
      %v2036 = vmul.f32 %v1868, %v2027
      %v2037 = vmul.f32 %v1869, %v2027
      %v2038 = vmul.f32 %v1870, %v2027
      %v2039 = vmul.f32 %v1871, %v2027
      %v2040 = vmul.f32 %v1872, %v2027
      %v2041 = vmul.f32 %v1873, %v2027
      %v2042 = vmul.f32 %v1874, %v2027
      %v2043 = vmul.f32 %v1875, %v2027
      %v2044 = vadd.f32 %v2008, %v2028
      %v2045 = vadd.f32 %v2009, %v2029
      %v2046 = vadd.f32 %v2010, %v2030
      %v2047 = vadd.f32 %v2011, %v2031
      %v2048 = vadd.f32 %v2012, %v2032
      %v2049 = vadd.f32 %v2013, %v2033
      %v2050 = vadd.f32 %v2014, %v2034
      %v2051 = vadd.f32 %v2015, %v2035
      %v2052 = vadd.f32 %v2016, %v2036
      %v2053 = vadd.f32 %v2017, %v2037
      %v2054 = vadd.f32 %v2018, %v2038
      %v2055 = vadd.f32 %v2019, %v2039
      %v2056 = vadd.f32 %v2020, %v2040
      %v2057 = vadd.f32 %v2021, %v2041
      %v2058 = vadd.f32 %v2022, %v2042
      %v2059 = vadd.f32 %v2023, %v2043
      %v2060 = vlaneseq
      %v2061 = vshrl.u32 %v2060, 7
      %v2062 = vsub.s32 6, %v2061
      %v2063 = vrot.slane %v1009, %v2062
      %v2064 = vmul.f32 %v1862, %v2063
      %v2065 = vmul.f32 %v1863, %v2063
      %v2066 = vmul.f32 %v1864, %v2063
      %v2067 = vmul.f32 %v1865, %v2063
      %v2068 = vmul.f32 %v1866, %v2063
      %v2069 = vmul.f32 %v1867, %v2063
      %v2070 = vmul.f32 %v1868, %v2063
      %v2071 = vmul.f32 %v1869, %v2063
      %v2072 = vmul.f32 %v1870, %v2063
      %v2073 = vmul.f32 %v1871, %v2063
      %v2074 = vmul.f32 %v1872, %v2063
      %v2075 = vmul.f32 %v1873, %v2063
      %v2076 = vmul.f32 %v1874, %v2063
      %v2077 = vmul.f32 %v1875, %v2063
      %v2078 = vmul.f32 %v1876, %v2063
      %v2079 = vmul.f32 %v1877, %v2063
      %v2080 = vadd.f32 %v2044, %v2064
      %v2081 = vadd.f32 %v2045, %v2065
      %v2082 = vadd.f32 %v2046, %v2066
      %v2083 = vadd.f32 %v2047, %v2067
      %v2084 = vadd.f32 %v2048, %v2068
      %v2085 = vadd.f32 %v2049, %v2069
      %v2086 = vadd.f32 %v2050, %v2070
      %v2087 = vadd.f32 %v2051, %v2071
      %v2088 = vadd.f32 %v2052, %v2072
      %v2089 = vadd.f32 %v2053, %v2073
      %v2090 = vadd.f32 %v2054, %v2074
      %v2091 = vadd.f32 %v2055, %v2075
      %v2092 = vadd.f32 %v2056, %v2076
      %v2093 = vadd.f32 %v2057, %v2077
      %v2094 = vadd.f32 %v2058, %v2078
      %v2095 = vadd.f32 %v2059, %v2079
      %v2096 = vlaneseq
      %v2097 = vshrl.u32 %v2096, 7
      %v2098 = vsub.s32 5, %v2097
      %v2099 = vrot.slane %v1010, %v2098
      %v2100 = vmul.f32 %v1864, %v2099
      %v2101 = vmul.f32 %v1865, %v2099
      %v2102 = vmul.f32 %v1866, %v2099
      %v2103 = vmul.f32 %v1867, %v2099
      %v2104 = vmul.f32 %v1868, %v2099
      %v2105 = vmul.f32 %v1869, %v2099
      %v2106 = vmul.f32 %v1870, %v2099
      %v2107 = vmul.f32 %v1871, %v2099
      %v2108 = vmul.f32 %v1872, %v2099
      %v2109 = vmul.f32 %v1873, %v2099
      %v2110 = vmul.f32 %v1874, %v2099
      %v2111 = vmul.f32 %v1875, %v2099
      %v2112 = vmul.f32 %v1876, %v2099
      %v2113 = vmul.f32 %v1877, %v2099
      %v2114 = vmul.f32 %v1878, %v2099
      %v2115 = vmul.f32 %v1879, %v2099
      %v2116 = vadd.f32 %v2080, %v2100
      %v2117 = vadd.f32 %v2081, %v2101
      %v2118 = vadd.f32 %v2082, %v2102
      %v2119 = vadd.f32 %v2083, %v2103
      %v2120 = vadd.f32 %v2084, %v2104
      %v2121 = vadd.f32 %v2085, %v2105
      %v2122 = vadd.f32 %v2086, %v2106
      %v2123 = vadd.f32 %v2087, %v2107
      %v2124 = vadd.f32 %v2088, %v2108
      %v2125 = vadd.f32 %v2089, %v2109
      %v2126 = vadd.f32 %v2090, %v2110
      %v2127 = vadd.f32 %v2091, %v2111
      %v2128 = vadd.f32 %v2092, %v2112
      %v2129 = vadd.f32 %v2093, %v2113
      %v2130 = vadd.f32 %v2094, %v2114
      %v2131 = vadd.f32 %v2095, %v2115
      %v2132 = vld [vmem:[#allocation2 + $0x4] sm:$0xff]
      %v2133 = vld [vmem:[#allocation2 + $0xc] sm:$0xff]
      %v2134 = vld [vmem:[#allocation2 + $0x1c] sm:$0xff]
      %v2135 = vld [vmem:[#allocation2 + $0x24] sm:$0xff]
      %v2136 = vld [vmem:[#allocation2 + $0x34] sm:$0xff]
      %v2137 = vld [vmem:[#allocation2 + $0x3c] sm:$0xff]
      %v2138 = vld [vmem:[#allocation2 + $0x4c] sm:$0xff]
      %v2139 = vld [vmem:[#allocation2 + $0x54] sm:$0xff]
      %v2140 = vld [vmem:[#allocation2 + $0x64] sm:$0xff]
      %v2141 = vld [vmem:[#allocation2 + $0x6c] sm:$0xff]
      %v2142 = vld [vmem:[#allocation2 + $0x7c] sm:$0xff]
      %v2143 = vld [vmem:[#allocation2 + $0x84] sm:$0xff]
      %v2144 = vld [vmem:[#allocation2 + $0x94] sm:$0xff]
      %v2145 = vld [vmem:[#allocation2 + $0x9c] sm:$0xff]
      %v2146 = vld [vmem:[#allocation2 + $0xac] sm:$0xff]
      %v2147 = vld [vmem:[#allocation2 + $0xb4] sm:$0xff]
      %v2148 = vld [vmem:[#allocation2 + $0xc4] sm:$0xff]
      %v2149 = vld [vmem:[#allocation2 + $0xcc] sm:$0xff]
      %v2150 = vld [vmem:[#allocation2 + $0xdc] sm:$0xff]
      %v2151 = vld [vmem:[#allocation2 + $0xe4] sm:$0xff]
      %v2152 = vld [vmem:[#allocation2 + $0xf4] sm:$0xff]
      %v2153 = vld [vmem:[#allocation2 + $0xfc] sm:$0xff]
      %v2154 = vld [vmem:[#allocation2 + $0x10c] sm:$0xff]
      %v2155 = vld [vmem:[#allocation2 + $0x114] sm:$0xff]
      %v2156 = vld [vmem:[#allocation2 + $0x124] sm:$0xff]
      %v2157 = vld [vmem:[#allocation2 + $0x12c] sm:$0xff]
      %v2158 = vld [vmem:[#allocation2 + $0x13c] sm:$0xff]
      %v2159 = vld [vmem:[#allocation2 + $0x144] sm:$0xff]
      %v2160 = vlaneseq
      %v2161 = vshrl.u32 %v2160, 7
      %v2162 = vsub.s32 4, %v2161
      %v2163 = vrot.slane %v1005, %v2162
      %v2164 = vmul.f32 %v2132, %v2163
      %v2165 = vmul.f32 %v2133, %v2163
      %v2166 = vmul.f32 %v2134, %v2163
      %v2167 = vmul.f32 %v2135, %v2163
      %v2168 = vmul.f32 %v2136, %v2163
      %v2169 = vmul.f32 %v2137, %v2163
      %v2170 = vmul.f32 %v2138, %v2163
      %v2171 = vmul.f32 %v2139, %v2163
      %v2172 = vmul.f32 %v2140, %v2163
      %v2173 = vmul.f32 %v2141, %v2163
      %v2174 = vmul.f32 %v2142, %v2163
      %v2175 = vmul.f32 %v2143, %v2163
      %v2176 = vmul.f32 %v2144, %v2163
      %v2177 = vmul.f32 %v2145, %v2163
      %v2178 = vmul.f32 %v2146, %v2163
      %v2179 = vmul.f32 %v2147, %v2163
      %v2180 = vadd.f32 %v2116, %v2164
      %v2181 = vadd.f32 %v2117, %v2165
      %v2182 = vadd.f32 %v2118, %v2166
      %v2183 = vadd.f32 %v2119, %v2167
      %v2184 = vadd.f32 %v2120, %v2168
      %v2185 = vadd.f32 %v2121, %v2169
      %v2186 = vadd.f32 %v2122, %v2170
      %v2187 = vadd.f32 %v2123, %v2171
      %v2188 = vadd.f32 %v2124, %v2172
      %v2189 = vadd.f32 %v2125, %v2173
      %v2190 = vadd.f32 %v2126, %v2174
      %v2191 = vadd.f32 %v2127, %v2175
      %v2192 = vadd.f32 %v2128, %v2176
      %v2193 = vadd.f32 %v2129, %v2177
      %v2194 = vadd.f32 %v2130, %v2178
      %v2195 = vadd.f32 %v2131, %v2179
      %v2196 = vlaneseq
      %v2197 = vshrl.u32 %v2196, 7
      %v2198 = vsub.s32 3, %v2197
      %v2199 = vrot.slane %v1006, %v2198
      %v2200 = vmul.f32 %v2134, %v2199
      %v2201 = vmul.f32 %v2135, %v2199
      %v2202 = vmul.f32 %v2136, %v2199
      %v2203 = vmul.f32 %v2137, %v2199
      %v2204 = vmul.f32 %v2138, %v2199
      %v2205 = vmul.f32 %v2139, %v2199
      %v2206 = vmul.f32 %v2140, %v2199
      %v2207 = vmul.f32 %v2141, %v2199
      %v2208 = vmul.f32 %v2142, %v2199
      %v2209 = vmul.f32 %v2143, %v2199
      %v2210 = vmul.f32 %v2144, %v2199
      %v2211 = vmul.f32 %v2145, %v2199
      %v2212 = vmul.f32 %v2146, %v2199
      %v2213 = vmul.f32 %v2147, %v2199
      %v2214 = vmul.f32 %v2148, %v2199
      %v2215 = vmul.f32 %v2149, %v2199
      %v2216 = vadd.f32 %v2180, %v2200
      %v2217 = vadd.f32 %v2181, %v2201
      %v2218 = vadd.f32 %v2182, %v2202
      %v2219 = vadd.f32 %v2183, %v2203
      %v2220 = vadd.f32 %v2184, %v2204
      %v2221 = vadd.f32 %v2185, %v2205
      %v2222 = vadd.f32 %v2186, %v2206
      %v2223 = vadd.f32 %v2187, %v2207
      %v2224 = vadd.f32 %v2188, %v2208
      %v2225 = vadd.f32 %v2189, %v2209
      %v2226 = vadd.f32 %v2190, %v2210
      %v2227 = vadd.f32 %v2191, %v2211
      %v2228 = vadd.f32 %v2192, %v2212
      %v2229 = vadd.f32 %v2193, %v2213
      %v2230 = vadd.f32 %v2194, %v2214
      %v2231 = vadd.f32 %v2195, %v2215
      %v2232 = vlaneseq
      %v2233 = vshrl.u32 %v2232, 7
      %v2234 = vsub.s32 2, %v2233
      %v2235 = vrot.slane %v1007, %v2234
      %v2236 = vmul.f32 %v2136, %v2235
      %v2237 = vmul.f32 %v2137, %v2235
      %v2238 = vmul.f32 %v2138, %v2235
      %v2239 = vmul.f32 %v2139, %v2235
      %v2240 = vmul.f32 %v2140, %v2235
      %v2241 = vmul.f32 %v2141, %v2235
      %v2242 = vmul.f32 %v2142, %v2235
      %v2243 = vmul.f32 %v2143, %v2235
      %v2244 = vmul.f32 %v2144, %v2235
      %v2245 = vmul.f32 %v2145, %v2235
      %v2246 = vmul.f32 %v2146, %v2235
      %v2247 = vmul.f32 %v2147, %v2235
      %v2248 = vmul.f32 %v2148, %v2235
      %v2249 = vmul.f32 %v2149, %v2235
      %v2250 = vmul.f32 %v2150, %v2235
      %v2251 = vmul.f32 %v2151, %v2235
      %v2252 = vadd.f32 %v2216, %v2236
      %v2253 = vadd.f32 %v2217, %v2237
      %v2254 = vadd.f32 %v2218, %v2238
      %v2255 = vadd.f32 %v2219, %v2239
      %v2256 = vadd.f32 %v2220, %v2240
      %v2257 = vadd.f32 %v2221, %v2241
      %v2258 = vadd.f32 %v2222, %v2242
      %v2259 = vadd.f32 %v2223, %v2243
      %v2260 = vadd.f32 %v2224, %v2244
      %v2261 = vadd.f32 %v2225, %v2245
      %v2262 = vadd.f32 %v2226, %v2246
      %v2263 = vadd.f32 %v2227, %v2247
      %v2264 = vadd.f32 %v2228, %v2248
      %v2265 = vadd.f32 %v2229, %v2249
      %v2266 = vadd.f32 %v2230, %v2250
      %v2267 = vadd.f32 %v2231, %v2251
      %v2268 = vlaneseq
      %v2269 = vshrl.u32 %v2268, 7
      %v2270 = vsub.s32 1, %v2269
      %v2271 = vrot.slane %v1008, %v2270
      %v2272 = vmul.f32 %v2138, %v2271
      %v2273 = vmul.f32 %v2139, %v2271
      %v2274 = vmul.f32 %v2140, %v2271
      %v2275 = vmul.f32 %v2141, %v2271
      %v2276 = vmul.f32 %v2142, %v2271
      %v2277 = vmul.f32 %v2143, %v2271
      %v2278 = vmul.f32 %v2144, %v2271
      %v2279 = vmul.f32 %v2145, %v2271
      %v2280 = vmul.f32 %v2146, %v2271
      %v2281 = vmul.f32 %v2147, %v2271
      %v2282 = vmul.f32 %v2148, %v2271
      %v2283 = vmul.f32 %v2149, %v2271
      %v2284 = vmul.f32 %v2150, %v2271
      %v2285 = vmul.f32 %v2151, %v2271
      %v2286 = vmul.f32 %v2152, %v2271
      %v2287 = vmul.f32 %v2153, %v2271
      %v2288 = vadd.f32 %v2252, %v2272
      %v2289 = vadd.f32 %v2253, %v2273
      %v2290 = vadd.f32 %v2254, %v2274
      %v2291 = vadd.f32 %v2255, %v2275
      %v2292 = vadd.f32 %v2256, %v2276
      %v2293 = vadd.f32 %v2257, %v2277
      %v2294 = vadd.f32 %v2258, %v2278
      %v2295 = vadd.f32 %v2259, %v2279
      %v2296 = vadd.f32 %v2260, %v2280
      %v2297 = vadd.f32 %v2261, %v2281
      %v2298 = vadd.f32 %v2262, %v2282
      %v2299 = vadd.f32 %v2263, %v2283
      %v2300 = vadd.f32 %v2264, %v2284
      %v2301 = vadd.f32 %v2265, %v2285
      %v2302 = vadd.f32 %v2266, %v2286
      %v2303 = vadd.f32 %v2267, %v2287
      %v2304 = vlaneseq
      %v2305 = vshrl.u32 %v2304, 7
      %v2306 = vsub.s32 0, %v2305
      %v2307 = vrot.slane %v1009, %v2306
      %v2308 = vmul.f32 %v2140, %v2307
      %v2309 = vmul.f32 %v2141, %v2307
      %v2310 = vmul.f32 %v2142, %v2307
      %v2311 = vmul.f32 %v2143, %v2307
      %v2312 = vmul.f32 %v2144, %v2307
      %v2313 = vmul.f32 %v2145, %v2307
      %v2314 = vmul.f32 %v2146, %v2307
      %v2315 = vmul.f32 %v2147, %v2307
      %v2316 = vmul.f32 %v2148, %v2307
      %v2317 = vmul.f32 %v2149, %v2307
      %v2318 = vmul.f32 %v2150, %v2307
      %v2319 = vmul.f32 %v2151, %v2307
      %v2320 = vmul.f32 %v2152, %v2307
      %v2321 = vmul.f32 %v2153, %v2307
      %v2322 = vmul.f32 %v2154, %v2307
      %v2323 = vmul.f32 %v2155, %v2307
      %v2324 = vadd.f32 %v2288, %v2308
      %v2325 = vadd.f32 %v2289, %v2309
      %v2326 = vadd.f32 %v2290, %v2310
      %v2327 = vadd.f32 %v2291, %v2311
      %v2328 = vadd.f32 %v2292, %v2312
      %v2329 = vadd.f32 %v2293, %v2313
      %v2330 = vadd.f32 %v2294, %v2314
      %v2331 = vadd.f32 %v2295, %v2315
      %v2332 = vadd.f32 %v2296, %v2316
      %v2333 = vadd.f32 %v2297, %v2317
      %v2334 = vadd.f32 %v2298, %v2318
      %v2335 = vadd.f32 %v2299, %v2319
      %v2336 = vadd.f32 %v2300, %v2320
      %v2337 = vadd.f32 %v2301, %v2321
      %v2338 = vadd.f32 %v2302, %v2322
      %v2339 = vadd.f32 %v2303, %v2323
      %v2340 = vlaneseq
      %v2341 = vshrl.u32 %v2340, 7
      %v2342 = vsub.s32 7, %v2341
      %v2343 = vrot.slane %v1009, %v2342
      %v2344 = vmul.f32 %v2142, %v2343
      %v2345 = vmul.f32 %v2143, %v2343
      %v2346 = vmul.f32 %v2144, %v2343
      %v2347 = vmul.f32 %v2145, %v2343
      %v2348 = vmul.f32 %v2146, %v2343
      %v2349 = vmul.f32 %v2147, %v2343
      %v2350 = vmul.f32 %v2148, %v2343
      %v2351 = vmul.f32 %v2149, %v2343
      %v2352 = vmul.f32 %v2150, %v2343
      %v2353 = vmul.f32 %v2151, %v2343
      %v2354 = vmul.f32 %v2152, %v2343
      %v2355 = vmul.f32 %v2153, %v2343
      %v2356 = vmul.f32 %v2154, %v2343
      %v2357 = vmul.f32 %v2155, %v2343
      %v2358 = vmul.f32 %v2156, %v2343
      %v2359 = vmul.f32 %v2157, %v2343
      %v2360 = vadd.f32 %v2324, %v2344
      %v2361 = vadd.f32 %v2325, %v2345
      %v2362 = vadd.f32 %v2326, %v2346
      %v2363 = vadd.f32 %v2327, %v2347
      %v2364 = vadd.f32 %v2328, %v2348
      %v2365 = vadd.f32 %v2329, %v2349
      %v2366 = vadd.f32 %v2330, %v2350
      %v2367 = vadd.f32 %v2331, %v2351
      %v2368 = vadd.f32 %v2332, %v2352
      %v2369 = vadd.f32 %v2333, %v2353
      %v2370 = vadd.f32 %v2334, %v2354
      %v2371 = vadd.f32 %v2335, %v2355
      %v2372 = vadd.f32 %v2336, %v2356
      %v2373 = vadd.f32 %v2337, %v2357
      %v2374 = vadd.f32 %v2338, %v2358
      %v2375 = vadd.f32 %v2339, %v2359
      %v2376 = vlaneseq
      %v2377 = vshrl.u32 %v2376, 7
      %v2378 = vsub.s32 6, %v2377
      %v2379 = vrot.slane %v1010, %v2378
      %v2380 = vmul.f32 %v2144, %v2379
      %v2381 = vmul.f32 %v2145, %v2379
      %v2382 = vmul.f32 %v2146, %v2379
      %v2383 = vmul.f32 %v2147, %v2379
      %v2384 = vmul.f32 %v2148, %v2379
      %v2385 = vmul.f32 %v2149, %v2379
      %v2386 = vmul.f32 %v2150, %v2379
      %v2387 = vmul.f32 %v2151, %v2379
      %v2388 = vmul.f32 %v2152, %v2379
      %v2389 = vmul.f32 %v2153, %v2379
      %v2390 = vmul.f32 %v2154, %v2379
      %v2391 = vmul.f32 %v2155, %v2379
      %v2392 = vmul.f32 %v2156, %v2379
      %v2393 = vmul.f32 %v2157, %v2379
      %v2394 = vmul.f32 %v2158, %v2379
      %v2395 = vmul.f32 %v2159, %v2379
      %v2396 = vadd.f32 %v2360, %v2380
      %v2397 = vadd.f32 %v2361, %v2381
      %v2398 = vadd.f32 %v2362, %v2382
      %v2399 = vadd.f32 %v2363, %v2383
      %v2400 = vadd.f32 %v2364, %v2384
      %v2401 = vadd.f32 %v2365, %v2385
      %v2402 = vadd.f32 %v2366, %v2386
      %v2403 = vadd.f32 %v2367, %v2387
      %v2404 = vadd.f32 %v2368, %v2388
      %v2405 = vadd.f32 %v2369, %v2389
      %v2406 = vadd.f32 %v2370, %v2390
      %v2407 = vadd.f32 %v2371, %v2391
      %v2408 = vadd.f32 %v2372, %v2392
      %v2409 = vadd.f32 %v2373, %v2393
      %v2410 = vadd.f32 %v2374, %v2394
      %v2411 = vadd.f32 %v2375, %v2395
      %v2412 = vld [vmem:[#allocation2 + $0x5] sm:$0xff]
      %v2413 = vld [vmem:[#allocation2 + $0xd] sm:$0xff]
      %v2414 = vld [vmem:[#allocation2 + $0x1d] sm:$0xff]
      %v2415 = vld [vmem:[#allocation2 + $0x25] sm:$0xff]
      %v2416 = vld [vmem:[#allocation2 + $0x35] sm:$0xff]
      %v2417 = vld [vmem:[#allocation2 + $0x3d] sm:$0xff]
      %v2418 = vld [vmem:[#allocation2 + $0x4d] sm:$0xff]
      %v2419 = vld [vmem:[#allocation2 + $0x55] sm:$0xff]
      %v2420 = vld [vmem:[#allocation2 + $0x65] sm:$0xff]
      %v2421 = vld [vmem:[#allocation2 + $0x6d] sm:$0xff]
      %v2422 = vld [vmem:[#allocation2 + $0x7d] sm:$0xff]
      %v2423 = vld [vmem:[#allocation2 + $0x85] sm:$0xff]
      %v2424 = vld [vmem:[#allocation2 + $0x95] sm:$0xff]
      %v2425 = vld [vmem:[#allocation2 + $0x9d] sm:$0xff]
      %v2426 = vld [vmem:[#allocation2 + $0xad] sm:$0xff]
      %v2427 = vld [vmem:[#allocation2 + $0xb5] sm:$0xff]
      %v2428 = vld [vmem:[#allocation2 + $0xc5] sm:$0xff]
      %v2429 = vld [vmem:[#allocation2 + $0xcd] sm:$0xff]
      %v2430 = vld [vmem:[#allocation2 + $0xdd] sm:$0xff]
      %v2431 = vld [vmem:[#allocation2 + $0xe5] sm:$0xff]
      %v2432 = vld [vmem:[#allocation2 + $0xf5] sm:$0xff]
      %v2433 = vld [vmem:[#allocation2 + $0xfd] sm:$0xff]
      %v2434 = vld [vmem:[#allocation2 + $0x10d] sm:$0xff]
      %v2435 = vld [vmem:[#allocation2 + $0x115] sm:$0xff]
      %v2436 = vld [vmem:[#allocation2 + $0x125] sm:$0xff]
      %v2437 = vld [vmem:[#allocation2 + $0x12d] sm:$0xff]
      %v2438 = vld [vmem:[#allocation2 + $0x13d] sm:$0xff]
      %v2439 = vld [vmem:[#allocation2 + $0x145] sm:$0xff]
      %v2440 = vlaneseq
      %v2441 = vshrl.u32 %v2440, 7
      %v2442 = vsub.s32 5, %v2441
      %v2443 = vrot.slane %v1005, %v2442
      %v2444 = vmul.f32 %v2412, %v2443
      %v2445 = vmul.f32 %v2413, %v2443
      %v2446 = vmul.f32 %v2414, %v2443
      %v2447 = vmul.f32 %v2415, %v2443
      %v2448 = vmul.f32 %v2416, %v2443
      %v2449 = vmul.f32 %v2417, %v2443
      %v2450 = vmul.f32 %v2418, %v2443
      %v2451 = vmul.f32 %v2419, %v2443
      %v2452 = vmul.f32 %v2420, %v2443
      %v2453 = vmul.f32 %v2421, %v2443
      %v2454 = vmul.f32 %v2422, %v2443
      %v2455 = vmul.f32 %v2423, %v2443
      %v2456 = vmul.f32 %v2424, %v2443
      %v2457 = vmul.f32 %v2425, %v2443
      %v2458 = vmul.f32 %v2426, %v2443
      %v2459 = vmul.f32 %v2427, %v2443
      %v2460 = vadd.f32 %v2396, %v2444
      %v2461 = vadd.f32 %v2397, %v2445
      %v2462 = vadd.f32 %v2398, %v2446
      %v2463 = vadd.f32 %v2399, %v2447
      %v2464 = vadd.f32 %v2400, %v2448
      %v2465 = vadd.f32 %v2401, %v2449
      %v2466 = vadd.f32 %v2402, %v2450
      %v2467 = vadd.f32 %v2403, %v2451
      %v2468 = vadd.f32 %v2404, %v2452
      %v2469 = vadd.f32 %v2405, %v2453
      %v2470 = vadd.f32 %v2406, %v2454
      %v2471 = vadd.f32 %v2407, %v2455
      %v2472 = vadd.f32 %v2408, %v2456
      %v2473 = vadd.f32 %v2409, %v2457
      %v2474 = vadd.f32 %v2410, %v2458
      %v2475 = vadd.f32 %v2411, %v2459
      %v2476 = vlaneseq
      %v2477 = vshrl.u32 %v2476, 7
      %v2478 = vsub.s32 4, %v2477
      %v2479 = vrot.slane %v1006, %v2478
      %v2480 = vmul.f32 %v2414, %v2479
      %v2481 = vmul.f32 %v2415, %v2479
      %v2482 = vmul.f32 %v2416, %v2479
      %v2483 = vmul.f32 %v2417, %v2479
      %v2484 = vmul.f32 %v2418, %v2479
      %v2485 = vmul.f32 %v2419, %v2479
      %v2486 = vmul.f32 %v2420, %v2479
      %v2487 = vmul.f32 %v2421, %v2479
      %v2488 = vmul.f32 %v2422, %v2479
      %v2489 = vmul.f32 %v2423, %v2479
      %v2490 = vmul.f32 %v2424, %v2479
      %v2491 = vmul.f32 %v2425, %v2479
      %v2492 = vmul.f32 %v2426, %v2479
      %v2493 = vmul.f32 %v2427, %v2479
      %v2494 = vmul.f32 %v2428, %v2479
      %v2495 = vmul.f32 %v2429, %v2479
      %v2496 = vadd.f32 %v2460, %v2480
      %v2497 = vadd.f32 %v2461, %v2481
      %v2498 = vadd.f32 %v2462, %v2482
      %v2499 = vadd.f32 %v2463, %v2483
      %v2500 = vadd.f32 %v2464, %v2484
      %v2501 = vadd.f32 %v2465, %v2485
      %v2502 = vadd.f32 %v2466, %v2486
      %v2503 = vadd.f32 %v2467, %v2487
      %v2504 = vadd.f32 %v2468, %v2488
      %v2505 = vadd.f32 %v2469, %v2489
      %v2506 = vadd.f32 %v2470, %v2490
      %v2507 = vadd.f32 %v2471, %v2491
      %v2508 = vadd.f32 %v2472, %v2492
      %v2509 = vadd.f32 %v2473, %v2493
      %v2510 = vadd.f32 %v2474, %v2494
      %v2511 = vadd.f32 %v2475, %v2495
      %v2512 = vlaneseq
      %v2513 = vshrl.u32 %v2512, 7
      %v2514 = vsub.s32 3, %v2513
      %v2515 = vrot.slane %v1007, %v2514
      %v2516 = vmul.f32 %v2416, %v2515
      %v2517 = vmul.f32 %v2417, %v2515
      %v2518 = vmul.f32 %v2418, %v2515
      %v2519 = vmul.f32 %v2419, %v2515
      %v2520 = vmul.f32 %v2420, %v2515
      %v2521 = vmul.f32 %v2421, %v2515
      %v2522 = vmul.f32 %v2422, %v2515
      %v2523 = vmul.f32 %v2423, %v2515
      %v2524 = vmul.f32 %v2424, %v2515
      %v2525 = vmul.f32 %v2425, %v2515
      %v2526 = vmul.f32 %v2426, %v2515
      %v2527 = vmul.f32 %v2427, %v2515
      %v2528 = vmul.f32 %v2428, %v2515
      %v2529 = vmul.f32 %v2429, %v2515
      %v2530 = vmul.f32 %v2430, %v2515
      %v2531 = vmul.f32 %v2431, %v2515
      %v2532 = vadd.f32 %v2496, %v2516
      %v2533 = vadd.f32 %v2497, %v2517
      %v2534 = vadd.f32 %v2498, %v2518
      %v2535 = vadd.f32 %v2499, %v2519
      %v2536 = vadd.f32 %v2500, %v2520
      %v2537 = vadd.f32 %v2501, %v2521
      %v2538 = vadd.f32 %v2502, %v2522
      %v2539 = vadd.f32 %v2503, %v2523
      %v2540 = vadd.f32 %v2504, %v2524
      %v2541 = vadd.f32 %v2505, %v2525
      %v2542 = vadd.f32 %v2506, %v2526
      %v2543 = vadd.f32 %v2507, %v2527
      %v2544 = vadd.f32 %v2508, %v2528
      %v2545 = vadd.f32 %v2509, %v2529
      %v2546 = vadd.f32 %v2510, %v2530
      %v2547 = vadd.f32 %v2511, %v2531
      %v2548 = vlaneseq
      %v2549 = vshrl.u32 %v2548, 7
      %v2550 = vsub.s32 2, %v2549
      %v2551 = vrot.slane %v1008, %v2550
      %v2552 = vmul.f32 %v2418, %v2551
      %v2553 = vmul.f32 %v2419, %v2551
      %v2554 = vmul.f32 %v2420, %v2551
      %v2555 = vmul.f32 %v2421, %v2551
      %v2556 = vmul.f32 %v2422, %v2551
      %v2557 = vmul.f32 %v2423, %v2551
      %v2558 = vmul.f32 %v2424, %v2551
      %v2559 = vmul.f32 %v2425, %v2551
      %v2560 = vmul.f32 %v2426, %v2551
      %v2561 = vmul.f32 %v2427, %v2551
      %v2562 = vmul.f32 %v2428, %v2551
      %v2563 = vmul.f32 %v2429, %v2551
      %v2564 = vmul.f32 %v2430, %v2551
      %v2565 = vmul.f32 %v2431, %v2551
      %v2566 = vmul.f32 %v2432, %v2551
      %v2567 = vmul.f32 %v2433, %v2551
      %v2568 = vadd.f32 %v2532, %v2552
      %v2569 = vadd.f32 %v2533, %v2553
      %v2570 = vadd.f32 %v2534, %v2554
      %v2571 = vadd.f32 %v2535, %v2555
      %v2572 = vadd.f32 %v2536, %v2556
      %v2573 = vadd.f32 %v2537, %v2557
      %v2574 = vadd.f32 %v2538, %v2558
      %v2575 = vadd.f32 %v2539, %v2559
      %v2576 = vadd.f32 %v2540, %v2560
      %v2577 = vadd.f32 %v2541, %v2561
      %v2578 = vadd.f32 %v2542, %v2562
      %v2579 = vadd.f32 %v2543, %v2563
      %v2580 = vadd.f32 %v2544, %v2564
      %v2581 = vadd.f32 %v2545, %v2565
      %v2582 = vadd.f32 %v2546, %v2566
      %v2583 = vadd.f32 %v2547, %v2567
      %v2584 = vlaneseq
      %v2585 = vshrl.u32 %v2584, 7
      %v2586 = vsub.s32 1, %v2585
      %v2587 = vrot.slane %v1009, %v2586
      %v2588 = vmul.f32 %v2420, %v2587
      %v2589 = vmul.f32 %v2421, %v2587
      %v2590 = vmul.f32 %v2422, %v2587
      %v2591 = vmul.f32 %v2423, %v2587
      %v2592 = vmul.f32 %v2424, %v2587
      %v2593 = vmul.f32 %v2425, %v2587
      %v2594 = vmul.f32 %v2426, %v2587
      %v2595 = vmul.f32 %v2427, %v2587
      %v2596 = vmul.f32 %v2428, %v2587
      %v2597 = vmul.f32 %v2429, %v2587
      %v2598 = vmul.f32 %v2430, %v2587
      %v2599 = vmul.f32 %v2431, %v2587
      %v2600 = vmul.f32 %v2432, %v2587
      %v2601 = vmul.f32 %v2433, %v2587
      %v2602 = vmul.f32 %v2434, %v2587
      %v2603 = vmul.f32 %v2435, %v2587
      %v2604 = vadd.f32 %v2568, %v2588
      %v2605 = vadd.f32 %v2569, %v2589
      %v2606 = vadd.f32 %v2570, %v2590
      %v2607 = vadd.f32 %v2571, %v2591
      %v2608 = vadd.f32 %v2572, %v2592
      %v2609 = vadd.f32 %v2573, %v2593
      %v2610 = vadd.f32 %v2574, %v2594
      %v2611 = vadd.f32 %v2575, %v2595
      %v2612 = vadd.f32 %v2576, %v2596
      %v2613 = vadd.f32 %v2577, %v2597
      %v2614 = vadd.f32 %v2578, %v2598
      %v2615 = vadd.f32 %v2579, %v2599
      %v2616 = vadd.f32 %v2580, %v2600
      %v2617 = vadd.f32 %v2581, %v2601
      %v2618 = vadd.f32 %v2582, %v2602
      %v2619 = vadd.f32 %v2583, %v2603
      %v2620 = vlaneseq
      %v2621 = vshrl.u32 %v2620, 7
      %v2622 = vsub.s32 0, %v2621
      %v2623 = vrot.slane %v1010, %v2622
      %v2624 = vmul.f32 %v2422, %v2623
      %v2625 = vmul.f32 %v2423, %v2623
      %v2626 = vmul.f32 %v2424, %v2623
      %v2627 = vmul.f32 %v2425, %v2623
      %v2628 = vmul.f32 %v2426, %v2623
      %v2629 = vmul.f32 %v2427, %v2623
      %v2630 = vmul.f32 %v2428, %v2623
      %v2631 = vmul.f32 %v2429, %v2623
      %v2632 = vmul.f32 %v2430, %v2623
      %v2633 = vmul.f32 %v2431, %v2623
      %v2634 = vmul.f32 %v2432, %v2623
      %v2635 = vmul.f32 %v2433, %v2623
      %v2636 = vmul.f32 %v2434, %v2623
      %v2637 = vmul.f32 %v2435, %v2623
      %v2638 = vmul.f32 %v2436, %v2623
      %v2639 = vmul.f32 %v2437, %v2623
      %v2640 = vadd.f32 %v2604, %v2624
      %v2641 = vadd.f32 %v2605, %v2625
      %v2642 = vadd.f32 %v2606, %v2626
      %v2643 = vadd.f32 %v2607, %v2627
      %v2644 = vadd.f32 %v2608, %v2628
      %v2645 = vadd.f32 %v2609, %v2629
      %v2646 = vadd.f32 %v2610, %v2630
      %v2647 = vadd.f32 %v2611, %v2631
      %v2648 = vadd.f32 %v2612, %v2632
      %v2649 = vadd.f32 %v2613, %v2633
      %v2650 = vadd.f32 %v2614, %v2634
      %v2651 = vadd.f32 %v2615, %v2635
      %v2652 = vadd.f32 %v2616, %v2636
      %v2653 = vadd.f32 %v2617, %v2637
      %v2654 = vadd.f32 %v2618, %v2638
      %v2655 = vadd.f32 %v2619, %v2639
      %v2656 = vlaneseq
      %v2657 = vshrl.u32 %v2656, 7
      %v2658 = vsub.s32 7, %v2657
      %v2659 = vrot.slane %v1010, %v2658
      %v2660 = vmul.f32 %v2424, %v2659
      %v2661 = vmul.f32 %v2425, %v2659
      %v2662 = vmul.f32 %v2426, %v2659
      %v2663 = vmul.f32 %v2427, %v2659
      %v2664 = vmul.f32 %v2428, %v2659
      %v2665 = vmul.f32 %v2429, %v2659
      %v2666 = vmul.f32 %v2430, %v2659
      %v2667 = vmul.f32 %v2431, %v2659
      %v2668 = vmul.f32 %v2432, %v2659
      %v2669 = vmul.f32 %v2433, %v2659
      %v2670 = vmul.f32 %v2434, %v2659
      %v2671 = vmul.f32 %v2435, %v2659
      %v2672 = vmul.f32 %v2436, %v2659
      %v2673 = vmul.f32 %v2437, %v2659
      %v2674 = vmul.f32 %v2438, %v2659
      %v2675 = vmul.f32 %v2439, %v2659
      %v2676 = vadd.f32 %v2640, %v2660
      %v2677 = vadd.f32 %v2641, %v2661
      %v2678 = vadd.f32 %v2642, %v2662
      %v2679 = vadd.f32 %v2643, %v2663
      %v2680 = vadd.f32 %v2644, %v2664
      %v2681 = vadd.f32 %v2645, %v2665
      %v2682 = vadd.f32 %v2646, %v2666
      %v2683 = vadd.f32 %v2647, %v2667
      %v2684 = vadd.f32 %v2648, %v2668
      %v2685 = vadd.f32 %v2649, %v2669
      %v2686 = vadd.f32 %v2650, %v2670
      %v2687 = vadd.f32 %v2651, %v2671
      %v2688 = vadd.f32 %v2652, %v2672
      %v2689 = vadd.f32 %v2653, %v2673
      %v2690 = vadd.f32 %v2654, %v2674
      %v2691 = vadd.f32 %v2655, %v2675
      %v2692 = vld [vmem:[#allocation2 + $0x6] sm:$0xff]
      %v2693 = vld [vmem:[#allocation2 + $0xe] sm:$0xff]
      %v2694 = vld [vmem:[#allocation2 + $0x1e] sm:$0xff]
      %v2695 = vld [vmem:[#allocation2 + $0x26] sm:$0xff]
      %v2696 = vld [vmem:[#allocation2 + $0x36] sm:$0xff]
      %v2697 = vld [vmem:[#allocation2 + $0x3e] sm:$0xff]
      %v2698 = vld [vmem:[#allocation2 + $0x4e] sm:$0xff]
      %v2699 = vld [vmem:[#allocation2 + $0x56] sm:$0xff]
      %v2700 = vld [vmem:[#allocation2 + $0x66] sm:$0xff]
      %v2701 = vld [vmem:[#allocation2 + $0x6e] sm:$0xff]
      %v2702 = vld [vmem:[#allocation2 + $0x7e] sm:$0xff]
      %v2703 = vld [vmem:[#allocation2 + $0x86] sm:$0xff]
      %v2704 = vld [vmem:[#allocation2 + $0x96] sm:$0xff]
      %v2705 = vld [vmem:[#allocation2 + $0x9e] sm:$0xff]
      %v2706 = vld [vmem:[#allocation2 + $0xae] sm:$0xff]
      %v2707 = vld [vmem:[#allocation2 + $0xb6] sm:$0xff]
      %v2708 = vld [vmem:[#allocation2 + $0xc6] sm:$0xff]
      %v2709 = vld [vmem:[#allocation2 + $0xce] sm:$0xff]
      %v2710 = vld [vmem:[#allocation2 + $0xde] sm:$0xff]
      %v2711 = vld [vmem:[#allocation2 + $0xe6] sm:$0xff]
      %v2712 = vld [vmem:[#allocation2 + $0xf6] sm:$0xff]
      %v2713 = vld [vmem:[#allocation2 + $0xfe] sm:$0xff]
      %v2714 = vld [vmem:[#allocation2 + $0x10e] sm:$0xff]
      %v2715 = vld [vmem:[#allocation2 + $0x116] sm:$0xff]
      %v2716 = vld [vmem:[#allocation2 + $0x126] sm:$0xff]
      %v2717 = vld [vmem:[#allocation2 + $0x12e] sm:$0xff]
      %v2718 = vld [vmem:[#allocation2 + $0x13e] sm:$0xff]
      %v2719 = vld [vmem:[#allocation2 + $0x146] sm:$0xff]
      %v2720 = vlaneseq
      %v2721 = vshrl.u32 %v2720, 7
      %v2722 = vsub.s32 6, %v2721
      %v2723 = vrot.slane %v1005, %v2722
      %v2724 = vmul.f32 %v2692, %v2723
      %v2725 = vmul.f32 %v2693, %v2723
      %v2726 = vmul.f32 %v2694, %v2723
      %v2727 = vmul.f32 %v2695, %v2723
      %v2728 = vmul.f32 %v2696, %v2723
      %v2729 = vmul.f32 %v2697, %v2723
      %v2730 = vmul.f32 %v2698, %v2723
      %v2731 = vmul.f32 %v2699, %v2723
      %v2732 = vmul.f32 %v2700, %v2723
      %v2733 = vmul.f32 %v2701, %v2723
      %v2734 = vmul.f32 %v2702, %v2723
      %v2735 = vmul.f32 %v2703, %v2723
      %v2736 = vmul.f32 %v2704, %v2723
      %v2737 = vmul.f32 %v2705, %v2723
      %v2738 = vmul.f32 %v2706, %v2723
      %v2739 = vmul.f32 %v2707, %v2723
      %v2740 = vadd.f32 %v2676, %v2724
      %v2741 = vadd.f32 %v2677, %v2725
      %v2742 = vadd.f32 %v2678, %v2726
      %v2743 = vadd.f32 %v2679, %v2727
      %v2744 = vadd.f32 %v2680, %v2728
      %v2745 = vadd.f32 %v2681, %v2729
      %v2746 = vadd.f32 %v2682, %v2730
      %v2747 = vadd.f32 %v2683, %v2731
      %v2748 = vadd.f32 %v2684, %v2732
      %v2749 = vadd.f32 %v2685, %v2733
      %v2750 = vadd.f32 %v2686, %v2734
      %v2751 = vadd.f32 %v2687, %v2735
      %v2752 = vadd.f32 %v2688, %v2736
      %v2753 = vadd.f32 %v2689, %v2737
      %v2754 = vadd.f32 %v2690, %v2738
      %v2755 = vadd.f32 %v2691, %v2739
      %v2756 = vlaneseq
      %v2757 = vshrl.u32 %v2756, 7
      %v2758 = vsub.s32 5, %v2757
      %v2759 = vrot.slane %v1006, %v2758
      %v2760 = vmul.f32 %v2694, %v2759
      %v2761 = vmul.f32 %v2695, %v2759
      %v2762 = vmul.f32 %v2696, %v2759
      %v2763 = vmul.f32 %v2697, %v2759
      %v2764 = vmul.f32 %v2698, %v2759
      %v2765 = vmul.f32 %v2699, %v2759
      %v2766 = vmul.f32 %v2700, %v2759
      %v2767 = vmul.f32 %v2701, %v2759
      %v2768 = vmul.f32 %v2702, %v2759
      %v2769 = vmul.f32 %v2703, %v2759
      %v2770 = vmul.f32 %v2704, %v2759
      %v2771 = vmul.f32 %v2705, %v2759
      %v2772 = vmul.f32 %v2706, %v2759
      %v2773 = vmul.f32 %v2707, %v2759
      %v2774 = vmul.f32 %v2708, %v2759
      %v2775 = vmul.f32 %v2709, %v2759
      %v2776 = vadd.f32 %v2740, %v2760
      %v2777 = vadd.f32 %v2741, %v2761
      %v2778 = vadd.f32 %v2742, %v2762
      %v2779 = vadd.f32 %v2743, %v2763
      %v2780 = vadd.f32 %v2744, %v2764
      %v2781 = vadd.f32 %v2745, %v2765
      %v2782 = vadd.f32 %v2746, %v2766
      %v2783 = vadd.f32 %v2747, %v2767
      %v2784 = vadd.f32 %v2748, %v2768
      %v2785 = vadd.f32 %v2749, %v2769
      %v2786 = vadd.f32 %v2750, %v2770
      %v2787 = vadd.f32 %v2751, %v2771
      %v2788 = vadd.f32 %v2752, %v2772
      %v2789 = vadd.f32 %v2753, %v2773
      %v2790 = vadd.f32 %v2754, %v2774
      %v2791 = vadd.f32 %v2755, %v2775
      %v2792 = vlaneseq
      %v2793 = vshrl.u32 %v2792, 7
      %v2794 = vsub.s32 4, %v2793
      %v2795 = vrot.slane %v1007, %v2794
      %v2796 = vmul.f32 %v2696, %v2795
      %v2797 = vmul.f32 %v2697, %v2795
      %v2798 = vmul.f32 %v2698, %v2795
      %v2799 = vmul.f32 %v2699, %v2795
      %v2800 = vmul.f32 %v2700, %v2795
      %v2801 = vmul.f32 %v2701, %v2795
      %v2802 = vmul.f32 %v2702, %v2795
      %v2803 = vmul.f32 %v2703, %v2795
      %v2804 = vmul.f32 %v2704, %v2795
      %v2805 = vmul.f32 %v2705, %v2795
      %v2806 = vmul.f32 %v2706, %v2795
      %v2807 = vmul.f32 %v2707, %v2795
      %v2808 = vmul.f32 %v2708, %v2795
      %v2809 = vmul.f32 %v2709, %v2795
      %v2810 = vmul.f32 %v2710, %v2795
      %v2811 = vmul.f32 %v2711, %v2795
      %v2812 = vadd.f32 %v2776, %v2796
      %v2813 = vadd.f32 %v2777, %v2797
      %v2814 = vadd.f32 %v2778, %v2798
      %v2815 = vadd.f32 %v2779, %v2799
      %v2816 = vadd.f32 %v2780, %v2800
      %v2817 = vadd.f32 %v2781, %v2801
      %v2818 = vadd.f32 %v2782, %v2802
      %v2819 = vadd.f32 %v2783, %v2803
      %v2820 = vadd.f32 %v2784, %v2804
      %v2821 = vadd.f32 %v2785, %v2805
      %v2822 = vadd.f32 %v2786, %v2806
      %v2823 = vadd.f32 %v2787, %v2807
      %v2824 = vadd.f32 %v2788, %v2808
      %v2825 = vadd.f32 %v2789, %v2809
      %v2826 = vadd.f32 %v2790, %v2810
      %v2827 = vadd.f32 %v2791, %v2811
      %v2828 = vlaneseq
      %v2829 = vshrl.u32 %v2828, 7
      %v2830 = vsub.s32 3, %v2829
      %v2831 = vrot.slane %v1008, %v2830
      %v2832 = vmul.f32 %v2698, %v2831
      %v2833 = vmul.f32 %v2699, %v2831
      %v2834 = vmul.f32 %v2700, %v2831
      %v2835 = vmul.f32 %v2701, %v2831
      %v2836 = vmul.f32 %v2702, %v2831
      %v2837 = vmul.f32 %v2703, %v2831
      %v2838 = vmul.f32 %v2704, %v2831
      %v2839 = vmul.f32 %v2705, %v2831
      %v2840 = vmul.f32 %v2706, %v2831
      %v2841 = vmul.f32 %v2707, %v2831
      %v2842 = vmul.f32 %v2708, %v2831
      %v2843 = vmul.f32 %v2709, %v2831
      %v2844 = vmul.f32 %v2710, %v2831
      %v2845 = vmul.f32 %v2711, %v2831
      %v2846 = vmul.f32 %v2712, %v2831
      %v2847 = vmul.f32 %v2713, %v2831
      %v2848 = vadd.f32 %v2812, %v2832
      %v2849 = vadd.f32 %v2813, %v2833
      %v2850 = vadd.f32 %v2814, %v2834
      %v2851 = vadd.f32 %v2815, %v2835
      %v2852 = vadd.f32 %v2816, %v2836
      %v2853 = vadd.f32 %v2817, %v2837
      %v2854 = vadd.f32 %v2818, %v2838
      %v2855 = vadd.f32 %v2819, %v2839
      %v2856 = vadd.f32 %v2820, %v2840
      %v2857 = vadd.f32 %v2821, %v2841
      %v2858 = vadd.f32 %v2822, %v2842
      %v2859 = vadd.f32 %v2823, %v2843
      %v2860 = vadd.f32 %v2824, %v2844
      %v2861 = vadd.f32 %v2825, %v2845
      %v2862 = vadd.f32 %v2826, %v2846
      %v2863 = vadd.f32 %v2827, %v2847
      %v2864 = vlaneseq
      %v2865 = vshrl.u32 %v2864, 7
      %v2866 = vsub.s32 2, %v2865
      %v2867 = vrot.slane %v1009, %v2866
      %v2868 = vmul.f32 %v2700, %v2867
      %v2869 = vmul.f32 %v2701, %v2867
      %v2870 = vmul.f32 %v2702, %v2867
      %v2871 = vmul.f32 %v2703, %v2867
      %v2872 = vmul.f32 %v2704, %v2867
      %v2873 = vmul.f32 %v2705, %v2867
      %v2874 = vmul.f32 %v2706, %v2867
      %v2875 = vmul.f32 %v2707, %v2867
      %v2876 = vmul.f32 %v2708, %v2867
      %v2877 = vmul.f32 %v2709, %v2867
      %v2878 = vmul.f32 %v2710, %v2867
      %v2879 = vmul.f32 %v2711, %v2867
      %v2880 = vmul.f32 %v2712, %v2867
      %v2881 = vmul.f32 %v2713, %v2867
      %v2882 = vmul.f32 %v2714, %v2867
      %v2883 = vmul.f32 %v2715, %v2867
      %v2884 = vadd.f32 %v2848, %v2868
      %v2885 = vadd.f32 %v2849, %v2869
      %v2886 = vadd.f32 %v2850, %v2870
      %v2887 = vadd.f32 %v2851, %v2871
      %v2888 = vadd.f32 %v2852, %v2872
      %v2889 = vadd.f32 %v2853, %v2873
      %v2890 = vadd.f32 %v2854, %v2874
      %v2891 = vadd.f32 %v2855, %v2875
      %v2892 = vadd.f32 %v2856, %v2876
      %v2893 = vadd.f32 %v2857, %v2877
      %v2894 = vadd.f32 %v2858, %v2878
      %v2895 = vadd.f32 %v2859, %v2879
      %v2896 = vadd.f32 %v2860, %v2880
      %v2897 = vadd.f32 %v2861, %v2881
      %v2898 = vadd.f32 %v2862, %v2882
      %v2899 = vadd.f32 %v2863, %v2883
      %v2900 = vlaneseq
      %v2901 = vshrl.u32 %v2900, 7
      %v2902 = vsub.s32 1, %v2901
      %v2903 = vrot.slane %v1010, %v2902
      %v2904 = vmul.f32 %v2702, %v2903
      %v2905 = vmul.f32 %v2703, %v2903
      %v2906 = vmul.f32 %v2704, %v2903
      %v2907 = vmul.f32 %v2705, %v2903
      %v2908 = vmul.f32 %v2706, %v2903
      %v2909 = vmul.f32 %v2707, %v2903
      %v2910 = vmul.f32 %v2708, %v2903
      %v2911 = vmul.f32 %v2709, %v2903
      %v2912 = vmul.f32 %v2710, %v2903
      %v2913 = vmul.f32 %v2711, %v2903
      %v2914 = vmul.f32 %v2712, %v2903
      %v2915 = vmul.f32 %v2713, %v2903
      %v2916 = vmul.f32 %v2714, %v2903
      %v2917 = vmul.f32 %v2715, %v2903
      %v2918 = vmul.f32 %v2716, %v2903
      %v2919 = vmul.f32 %v2717, %v2903
      %v2920 = vadd.f32 %v2884, %v2904
      %v2921 = vadd.f32 %v2885, %v2905
      %v2922 = vadd.f32 %v2886, %v2906
      %v2923 = vadd.f32 %v2887, %v2907
      %v2924 = vadd.f32 %v2888, %v2908
      %v2925 = vadd.f32 %v2889, %v2909
      %v2926 = vadd.f32 %v2890, %v2910
      %v2927 = vadd.f32 %v2891, %v2911
      %v2928 = vadd.f32 %v2892, %v2912
      %v2929 = vadd.f32 %v2893, %v2913
      %v2930 = vadd.f32 %v2894, %v2914
      %v2931 = vadd.f32 %v2895, %v2915
      %v2932 = vadd.f32 %v2896, %v2916
      %v2933 = vadd.f32 %v2897, %v2917
      %v2934 = vadd.f32 %v2898, %v2918
      %v2935 = vadd.f32 %v2899, %v2919
      %v2936 = vlaneseq
      %v2937 = vshrl.u32 %v2936, 7
      %v2938 = vsub.s32 0, %v2937
      %v2939 = vrot.slane %v1011, %v2938
      %v2940 = vmul.f32 %v2704, %v2939
      %v2941 = vmul.f32 %v2705, %v2939
      %v2942 = vmul.f32 %v2706, %v2939
      %v2943 = vmul.f32 %v2707, %v2939
      %v2944 = vmul.f32 %v2708, %v2939
      %v2945 = vmul.f32 %v2709, %v2939
      %v2946 = vmul.f32 %v2710, %v2939
      %v2947 = vmul.f32 %v2711, %v2939
      %v2948 = vmul.f32 %v2712, %v2939
      %v2949 = vmul.f32 %v2713, %v2939
      %v2950 = vmul.f32 %v2714, %v2939
      %v2951 = vmul.f32 %v2715, %v2939
      %v2952 = vmul.f32 %v2716, %v2939
      %v2953 = vmul.f32 %v2717, %v2939
      %v2954 = vmul.f32 %v2718, %v2939
      %v2955 = vmul.f32 %v2719, %v2939
      %v2956 = vadd.f32 %v2920, %v2940
      %v2957 = vadd.f32 %v2921, %v2941
      %v2958 = vadd.f32 %v2922, %v2942
      %v2959 = vadd.f32 %v2923, %v2943
      %v2960 = vadd.f32 %v2924, %v2944
      %v2961 = vadd.f32 %v2925, %v2945
      %v2962 = vadd.f32 %v2926, %v2946
      %v2963 = vadd.f32 %v2927, %v2947
      %v2964 = vadd.f32 %v2928, %v2948
      %v2965 = vadd.f32 %v2929, %v2949
      %v2966 = vadd.f32 %v2930, %v2950
      %v2967 = vadd.f32 %v2931, %v2951
      %v2968 = vadd.f32 %v2932, %v2952
      %v2969 = vadd.f32 %v2933, %v2953
      %v2970 = vadd.f32 %v2934, %v2954
      %v2971 = vadd.f32 %v2935, %v2955
      %v2972 = vld [vmem:[%s5] sm:$0xff]
      %v2974 = vsel %vm976, %v2956, 0
      %v2977 = vsel %vm976, %v2957, 0
      %v2980 = vsel %vm976, %v2958, 0
      %v2983 = vsel %vm976, %v2959, 0
      %v2986 = vsel %vm976, %v2960, 0
      %v2989 = vsel %vm976, %v2961, 0
      %v2992 = vsel %vm976, %v2962, 0
      %v2995 = vsel %vm976, %v2963, 0
      %v2998 = vsel %vm976, %v2964, 0
      %v3001 = vsel %vm976, %v2965, 0
      %v3004 = vsel %vm976, %v2966, 0
      %v3007 = vsel %vm976, %v2967, 0
      %v3010 = vsel %vm976, %v2968, 0
      %v3013 = vsel %vm976, %v2969, 0
      %v3016 = vsel %vm976, %v2970, 0
      %v3019 = vsel %vm976, %v2971, 0
      %3021 = vmatprep.subr.mxu0 0.0
      %3022 = vmatpush1.msra.mxu0 %v2972
      %3023 = vmatprep.subr.mxu0 0.0
      %3024 = vmatpush1.msra.mxu0 0.0
      %3025 = vmatprep.subr.mxu0 0.0
      %3026 = vmatpush1.msra.mxu0 0.0
      %3027 = vmatprep.subr.mxu0 0.0
      %3028 = vmatpush1.msra.mxu0 0.0
      %3029 = vmatprep.subr.mxu0 0.0
      %3030 = vmatpush1.msra.mxu0 0.0
      %3031 = vmatprep.subr.mxu0 0.0
      %3032 = vmatpush1.msra.mxu0 0.0
      %3033 = vmatprep.subr.mxu0 0.0
      %3034 = vmatpush1.msra.mxu0 0.0
      %3035 = vmatprep.subr.mxu0 0.0
      %3036 = vmatpush1.msra.mxu0 0.0
      %3037 = vmatprep.subr.mxu0 0.0
      %3038 = vmatpush1.msra.mxu0 0.0
      %3039 = vmatprep.subr.mxu0 0.0
      %3040 = vmatpush1.msra.mxu0 0.0
      %3041 = vmatprep.subr.mxu0 0.0
      %3042 = vmatpush1.msra.mxu0 0.0
      %3043 = vmatprep.subr.mxu0 0.0
      %3044 = vmatpush1.msra.mxu0 0.0
      %3045 = vmatprep.subr.mxu0 0.0
      %3046 = vmatpush1.msra.mxu0 0.0
      %3047 = vmatprep.subr.mxu0 0.0
      %3048 = vmatpush1.msra.mxu0 0.0
      %3049 = vmatprep.subr.mxu0 0.0
      %3050 = vmatpush1.msra.mxu0 0.0
      %3051 = vmatprep.subr.mxu0 0.0
      %3052 = vmatpush1.msra.mxu0 0.0
      %3053 = vmatprep.subr.mxu0 0.0
      %3054 = vmatpush1.msra.mxu0 0.0
      %3055 = vmatprep.subr.mxu0 0.0
      %3056 = vmatpush1.msra.mxu0 0.0
      %3057 = vmatprep.subr.mxu0 0.0
      %3058 = vmatpush1.msra.mxu0 0.0
      %3059 = vmatprep.subr.mxu0 0.0
      %3060 = vmatpush1.msra.mxu0 0.0
      %3061 = vmatprep.subr.mxu0 0.0
      %3062 = vmatpush1.msra.mxu0 0.0
      %3063 = vmatprep.subr.mxu0 0.0
      %3064 = vmatpush1.msra.mxu0 0.0
      %3065 = vmatprep.subr.mxu0 0.0
      %3066 = vmatpush1.msra.mxu0 0.0
      %3067 = vmatprep.subr.mxu0 0.0
      %3068 = vmatpush1.msra.mxu0 0.0
      %3069 = vmatprep.subr.mxu0 0.0
      %3070 = vmatpush1.msra.mxu0 0.0
      %3071 = vmatprep.subr.mxu0 0.0
      %3072 = vmatpush1.msra.mxu0 0.0
      %3073 = vmatprep.subr.mxu0 0.0
      %3074 = vmatpush1.msra.mxu0 0.0
      %3075 = vmatprep.subr.mxu0 0.0
      %3076 = vmatpush1.msra.mxu0 0.0
      %3077 = vmatprep.subr.mxu0 0.0
      %3078 = vmatpush1.msra.mxu0 0.0
      %3079 = vmatprep.subr.mxu0 0.0
      %3080 = vmatpush1.msra.mxu0 0.0
      %3081 = vmatprep.subr.mxu0 0.0
      %3082 = vmatpush1.msra.mxu0 0.0
      %3083 = vmatprep.subr.mxu0 0.0
      %3084 = vmatpush1.msra.mxu0 0.0
      %3085 = vmatprep.mubr.f32.mxu0 0.0
      %3086 = vmatmul.mubr.f32.gmra.mrb[0].mxu0 %v2974
      %v3087 = vpop.f32.mrb[0].mxu0
      %v3088 = vadd.f32 0.0, %v3087
      %v3089 = vpop.f32.mrb[0].mxu0
      %3090 = vmatprep.mubr.f32.mxu0 0.0
      %3091 = vmatmul.mubr.f32.gmra.mrb[0].mxu0 %v2977
      %v3092 = vpop.f32.mrb[0].mxu0
      %v3093 = vadd.f32 0.0, %v3092
      %v3094 = vpop.f32.mrb[0].mxu0
      %3095 = vmatprep.mubr.f32.mxu0 0.0
      %3096 = vmatmul.mubr.f32.gmra.mrb[0].mxu0 %v2980
      %v3097 = vpop.f32.mrb[0].mxu0
      %v3098 = vadd.f32 0.0, %v3097
      %v3099 = vpop.f32.mrb[0].mxu0
      %3100 = vmatprep.mubr.f32.mxu0 0.0
      %3101 = vmatmul.mubr.f32.gmra.mrb[0].mxu0 %v2983
      %v3102 = vpop.f32.mrb[0].mxu0
      %v3103 = vadd.f32 0.0, %v3102
      %v3104 = vpop.f32.mrb[0].mxu0
      %3105 = vmatprep.mubr.f32.mxu0 0.0
      %3106 = vmatmul.mubr.f32.gmra.mrb[0].mxu0 %v2986
      %v3107 = vpop.f32.mrb[0].mxu0
      %v3108 = vadd.f32 0.0, %v3107
      %v3109 = vpop.f32.mrb[0].mxu0
      %3110 = vmatprep.mubr.f32.mxu0 0.0
      %3111 = vmatmul.mubr.f32.gmra.mrb[0].mxu0 %v2989
      %v3112 = vpop.f32.mrb[0].mxu0
      %v3113 = vadd.f32 0.0, %v3112
      %v3114 = vpop.f32.mrb[0].mxu0
      %3115 = vmatprep.mubr.f32.mxu0 0.0
      %3116 = vmatmul.mubr.f32.gmra.mrb[0].mxu0 %v2992
      %v3117 = vpop.f32.mrb[0].mxu0
      %v3118 = vadd.f32 0.0, %v3117
      %v3119 = vpop.f32.mrb[0].mxu0
      %3120 = vmatprep.mubr.f32.mxu0 0.0
      %3121 = vmatmul.mubr.f32.gmra.mrb[0].mxu0 %v2995
      %v3122 = vpop.f32.mrb[0].mxu0
      %v3123 = vadd.f32 0.0, %v3122
      %v3124 = vpop.f32.mrb[0].mxu0
      %3125 = vmatprep.mubr.f32.mxu0 0.0
      %3126 = vmatmul.mubr.f32.gmra.mrb[0].mxu0 %v2998
      %v3127 = vpop.f32.mrb[0].mxu0
      %v3128 = vadd.f32 0.0, %v3127
      %v3129 = vpop.f32.mrb[0].mxu0
      %3130 = vmatprep.mubr.f32.mxu0 0.0
      %3131 = vmatmul.mubr.f32.gmra.mrb[0].mxu0 %v3001
      %v3132 = vpop.f32.mrb[0].mxu0
      %v3133 = vadd.f32 0.0, %v3132
      %v3134 = vpop.f32.mrb[0].mxu0
      %3135 = vmatprep.mubr.f32.mxu0 0.0
      %3136 = vmatmul.mubr.f32.gmra.mrb[0].mxu0 %v3004
      %v3137 = vpop.f32.mrb[0].mxu0
      %v3138 = vadd.f32 0.0, %v3137
      %v3139 = vpop.f32.mrb[0].mxu0
      %3140 = vmatprep.mubr.f32.mxu0 0.0
      %3141 = vmatmul.mubr.f32.gmra.mrb[0].mxu0 %v3007
      %v3142 = vpop.f32.mrb[0].mxu0
      %v3143 = vadd.f32 0.0, %v3142
      %v3144 = vpop.f32.mrb[0].mxu0
      %3145 = vmatprep.mubr.f32.mxu0 0.0
      %3146 = vmatmul.mubr.f32.gmra.mrb[0].mxu0 %v3010
      %v3147 = vpop.f32.mrb[0].mxu0
      %v3148 = vadd.f32 0.0, %v3147
      %v3149 = vpop.f32.mrb[0].mxu0
      %3150 = vmatprep.mubr.f32.mxu0 0.0
      %3151 = vmatmul.mubr.f32.gmra.mrb[0].mxu0 %v3013
      %v3152 = vpop.f32.mrb[0].mxu0
      %v3153 = vadd.f32 0.0, %v3152
      %v3154 = vpop.f32.mrb[0].mxu0
      %3155 = vmatprep.mubr.f32.mxu0 0.0
      %3156 = vmatmul.mubr.f32.gmra.mrb[0].mxu0 %v3016
      %v3157 = vpop.f32.mrb[0].mxu0
      %v3158 = vadd.f32 0.0, %v3157
      %v3159 = vpop.f32.mrb[0].mxu0
      %3160 = vmatprep.mubr.f32.mxu0 0.0
      %3161 = vmatmul.mubr.f32.gmra.mrb[0].mxu0 %v3019
      %v3162 = vpop.f32.mrb[0].mxu0
      %v3163 = vadd.f32 0.0, %v3162
      %v3164 = vpop.f32.mrb[0].mxu0
      %3165 = vdwg.mxu0
      %3166 = vst.msk [vmem:[%s277] sm:$0xff] %vm313, %v3088
      %3167 = vst.msk [vmem:[%s277 + $0x8] sm:$0xff] %vm313, %v3093
      %3168 = vst.msk [vmem:[%s277 + $0x10] sm:$0xff] %vm313, %v3098
      %3169 = vst.msk [vmem:[%s277 + $0x18] sm:$0xff] %vm313, %v3103
      %3170 = vst.msk [vmem:[%s277 + $0x20] sm:$0xff] %vm313, %v3108
      %3171 = vst.msk [vmem:[%s277 + $0x28] sm:$0xff] %vm313, %v3113
      %3172 = vst.msk [vmem:[%s277 + $0x30] sm:$0xff] %vm313, %v3118
      %3173 = vst.msk [vmem:[%s277 + $0x38] sm:$0xff] %vm313, %v3123
      %3174 = vst.msk [vmem:[%s277 + $0x40] sm:$0xff] %vm313, %v3128
      %3175 = vst.msk [vmem:[%s277 + $0x48] sm:$0xff] %vm313, %v3133
      %3176 = vst.msk [vmem:[%s277 + $0x50] sm:$0xff] %vm313, %v3138
      %3177 = vst.msk [vmem:[%s277 + $0x58] sm:$0xff] %vm313, %v3143
      %3178 = vst.msk [vmem:[%s277 + $0x60] sm:$0xff] %vm313, %v3148
      %3179 = vst.msk [vmem:[%s277 + $0x68] sm:$0xff] %vm313, %v3153
      %3180 = vst.msk [vmem:[%s277 + $0x70] sm:$0xff] %vm313, %v3158
      %3181 = vst.msk [vmem:[%s277 + $0x78] sm:$0xff] %vm313, %v3163
      %s3182 = smul.u32 8, %s24
      %p3183 = scmp.lt.s32.totalorder %s23, 1
      %s3184 = scalar_select %p3183, %s23, 1
      %p3185 = scmp.lt.s32.totalorder %s3182, 15
      %s3186 = scalar_select %p3185, %s3182, 15
      %s3187 = smul.addr %s3186, 2
      %s3188 = smul.addr %s3184, 32
      %s3189 = sadd.s32 %s3187, %s3188
      %s3190 = smul.addr %s3189, 8
      %s3191 = scalar_lea.vmem %s6, %s3190
      // Predicated region
      $region45: #{tpu_custom_call.1} parent=43 // pred_check
        %p3192 = pneg %p182
      $region46: #{tpu_custom_call.1} parent=43 // pred_check_branch
        %3194 = sbr.rel (%p3192) target = $region48
      $region47: #{tpu_custom_call.1} parent=43 // pred_region
        %s3195 = smul.u32 8, %s24
      $region48: #{tpu_custom_call.1} parent=43 // pred_fallthru
        _
    $region44: #{tpu_custom_call.1} parent=5 // pred_fallthru
      _
    %p3196 = scmp.le.s32.totalorder 2, %s14
    // Predicated region
    $region49: #{tpu_custom_call.1} parent=5 // pred_check
      %p3197 = pneg %p3196
    $region50: #{tpu_custom_call.1} parent=5 // pred_check_branch
      %3199 = sbr.rel (%p3197) target = $region52
    $region51: #{tpu_custom_call.1} parent=5 // pred_region
      %s3200 = ssub.s32 %s14, 2
      // Predicated region
      $region53: #{tpu_custom_call.1} parent=51 // pred_check
        %p3201 = pneg %p188
      $region54: #{tpu_custom_call.1} parent=51 // pred_check_branch
        %3203 = sbr.rel (%p3201) target = $region56
      $region55: #{tpu_custom_call.1} parent=51 // pred_region
        %s3204 = smul.u32 8, %s26
        %p3205 = scmp.lt.s32.totalorder %s25, 1
        %s3206 = scalar_select %p3205, %s25, 1
        %p3207 = scmp.lt.s32.totalorder %s3204, 15
        %s3208 = scalar_select %p3207, %s3204, 15
        %s3209 = smul.addr %s3208, 2
        %s3210 = smul.addr %s3206, 32
        %s3211 = sadd.s32 %s3209, %s3210
        %s3212 = smul.addr %s3211, 8
        %s3213 = scalar_lea.vmem %s6, %s3212
      $region56: #{tpu_custom_call.1} parent=51 // pred_fallthru
        _
    $region52: #{tpu_custom_call.1} parent=5 // pred_fallthru
      _
  $region6: #{tpu_custom_call.1} parent=0 // loop_footer
    %s18 = sadd.s32 1, %s14
  $region7: #{tpu_custom_call.1} parent=0 // loop_footer_branch
    %13 = sbr.rel target = $region3
  $region8: #{tpu_custom_call.1} parent=0 // loop_exit
    _

</llo_original>
